<compile_context>
chip_gen: v7x
topology: tpu7x:2x2x1
jax: 0.10.0
libtpu: 0.0.40
codegen_flags: <defaults>
</compile_context>

<pallas_src>
import jax
import jax.numpy as jnp
from jax import lax
from jax.experimental import pallas as pl
from jax.experimental.pallas import tpu as pltpu


def _round_up(a: int, m: int) -> int:
    return (a + m - 1) // m * m


def _vmem_limit_bytes() -> int:
    # ~48 MiB on v7x (64 MiB physical VMEM), ~96 MiB on v5e/v6e (128 MiB physical).
    try:
        cap = pltpu.get_tpu_info().vmem_capacity_bytes
    except Exception:
        cap = 128 * 1024 * 1024
    return int(min(96 * 1024 * 1024, cap * 3 // 4))


# ---------------------------------------------------------------------------
# Fused kernel (stride == (1, 1)): Heaviside + shifted-slab im2col + MXU matmul + bias.
# ---------------------------------------------------------------------------
def _make_fused_kernel(offsets, mf):
    n_taps = len(offsets)

    def kernel(x_ref, w_ref, b_ref, o_ref, acc_ref):
        # x_ref: (1, P2, Cin) raw membrane potential, flattened padded image.  Spatial
        #        pads hold -1 so the in-kernel Heaviside maps them to 0 (matching the
        #        reference, which zero-pads the spike map).
        # w_ref: (n_taps, Cin, Cp) bf16 weight taps.   b_ref: (1, Cp) f32.
        # o_ref: (1, Mf, Cp).                          acc_ref: (Mf, Cp) f32 scratch.
        acc_ref[...] = jnp.zeros_like(acc_ref)
        for t in range(n_taps):           # static unroll over the kh*kw taps
            off = offsets[t]
            spikes = (x_ref[0, off:off + mf, :] >= 0).astype(jnp.bfloat16)
            acc_ref[...] += jnp.dot(spikes, w_ref[t],
                                    preferred_element_type=jnp.float32)
        o_ref[0] = (acc_ref[...] + b_ref[...]).astype(o_ref.dtype)

    return kernel


def _fused_conv(x_nhwc, w_taps, b_row, ksize, pad, dims, Cp, Cout, out_dtype):
    kh, kw = ksize
    ph, pw = pad
    Hp, Wp, Ho, Wo = dims
    N, H, W, Cin = x_nhwc.shape
    T = kh * kw
    Mf = Ho * Wp                 # full-width output rows; columns >= Wo are discarded
    P2 = Hp * Wp + (kw - 1)      # flattened padded image + tail halo rows

    # Pad with -1 (any negative): heaviside(-1) == 0 == the reference's zero spike pad.
    x_p = jnp.pad(x_nhwc, ((0, 0), (ph, ph), (pw, pw), (0, 0)), constant_values=-1.0)
    x_flat = x_p.reshape(N, Hp * Wp, Cin)
    x_flat = jnp.pad(x_flat, ((0, 0), (0, kw - 1), (0, 0)), constant_values=-1.0)

    # Tap (di, dj) reads flat rows shifted by di*Wp + dj.
    offsets = tuple(di * Wp + dj for di in range(kh) for dj in range(kw))
    kernel = _make_fused_kernel(offsets, Mf)

    out_full = pl.pallas_call(
        kernel,
        out_shape=jax.ShapeDtypeStruct((N, Mf, Cp), out_dtype),
        grid_spec=pltpu.PrefetchScalarGridSpec(
            num_scalar_prefetch=0,
            grid=(N,),
            in_specs=[
                pl.BlockSpec((1, P2, Cin), lambda n: (n, 0, 0)),
                pl.BlockSpec((T, Cin, Cp), lambda n: (0, 0, 0)),   # grid-invariant
                pl.BlockSpec((1, Cp), lambda n: (0, 0)),           # grid-invariant
            ],
            out_specs=pl.BlockSpec((1, Mf, Cp), lambda n: (n, 0, 0)),
            scratch_shapes=[pltpu.VMEM((Mf, Cp), jnp.float32)],
        ),
        compiler_params=pltpu.CompilerParams(
            dimension_semantics=("parallel",),
            vmem_limit_bytes=_vmem_limit_bytes(),
        ),
    )(x_flat, w_taps, b_row)

    # Drop the garbage tail columns (>= Wo) and the Cout padding.
    return out_full.reshape(N, Ho, Wp, Cp)[:, :, :Wo, :Cout]


# ---------------------------------------------------------------------------
# General-stride fallback: wrapper-side im2col of bf16 spikes + Pallas matmul + bias.
# ---------------------------------------------------------------------------
def _mm_bias_kernel(p_ref, w_ref, b_ref, o_ref):
    acc = jnp.dot(p_ref[...], w_ref[...], preferred_element_type=jnp.float32)
    o_ref[...] = (acc + b_ref[...]).astype(o_ref.dtype)


def _im2col_conv(x_nhwc, w_taps, b_row, ksize, stride, pad, odims, Cp, Cout,
                 out_dtype, tile_m=256):
    kh, kw = ksize
    sh, sw = stride
    ph, pw = pad
    Ho, Wo = odims
    N, H, W, Cin = x_nhwc.shape
    T = kh * kw

    # Heaviside is fused by XLA into the patch extraction; spikes are exact in bf16,
    # so the materialized patch matrix is half the bytes of an f32 one.
    sp = (x_nhwc >= 0).astype(jnp.bfloat16)
    sp = jnp.pad(sp, ((0, 0), (ph, ph), (pw, pw), (0, 0)))      # zero spike pads
    cols = [sp[:, di:di + sh * (Ho - 1) + 1:sh, dj:dj + sw * (Wo - 1) + 1:sw, :]
            for di in range(kh) for dj in range(kw)]
    patches = jnp.stack(cols, axis=3)                           # (N, Ho, Wo, T, Cin)
    M, K = N * Ho * Wo, T * Cin
    patches = patches.reshape(M, K)                             # K unpadded
    w_mat = w_taps.reshape(K, Cp)                               # tap-major, matches K

    tm = tile_m if M > tile_m else M
    out_mat = pl.pallas_call(
        _mm_bias_kernel,
        out_shape=jax.ShapeDtypeStruct((M, Cp), out_dtype),
        grid_spec=pltpu.PrefetchScalarGridSpec(
            num_scalar_prefetch=0,
            grid=(pl.cdiv(M, tm),),
            in_specs=[
                pl.BlockSpec((tm, K), lambda i: (i, 0)),        # full-extent K block
                pl.BlockSpec((K, Cp), lambda i: (0, 0)),
                pl.BlockSpec((1, Cp), lambda i: (0, 0)),
            ],
            out_specs=pl.BlockSpec((tm, Cp), lambda i: (i, 0)),
        ),
        compiler_params=pltpu.CompilerParams(
            dimension_semantics=("parallel",),
            vmem_limit_bytes=_vmem_limit_bytes(),
        ),
    )(patches, w_mat, b_row)

    return out_mat[:, :Cout].reshape(N, Ho, Wo, Cout)


# ---------------------------------------------------------------------------
# FireConv forward
# ---------------------------------------------------------------------------
def fire_conv_forward_nhwc(x_nhwc, weight, bias, stride=(1, 1), padding=(1, 1)):
    """NHWC core: x_nhwc (N,H,W,Cin), weight (Cout,Cin,kh,kw) [torch OIHW], bias (Cout).
    Returns (N, Ho, Wo, Cout) NHWC — stack layers through this to avoid per-layer
    transposes."""
    N, H, W, Cin = x_nhwc.shape
    Cout, Cin_w, kh, kw = weight.shape
    assert Cin_w == Cin
    sh, sw = stride
    ph, pw = padding
    Hp, Wp = H + 2 * ph, W + 2 * pw
    Ho = (Hp - kh) // sh + 1
    Wo = (Wp - kw) // sw + 1
    Cp = _round_up(Cout, 128)          # lane-dense, unmasked output stores
    out_dtype = x_nhwc.dtype

    # Weight taps: [t, ci, co] = weight[co, ci, di, dj], t = di*kw + dj; bf16 for the
    # native MXU path (spikes are {0,1} so bf16 LHS is exact).
    w_taps = jnp.transpose(weight, (2, 3, 1, 0)).reshape(kh * kw, Cin, Cout)
    w_taps = jnp.pad(w_taps, ((0, 0), (0, 0), (0, Cp - Cout))).astype(jnp.bfloat16)
    b_row = jnp.pad(bias.reshape(1, Cout).astype(jnp.float32),
                    ((0, 0), (0, Cp - Cout)))

    if (sh, sw) == (1, 1):
        return _fused_conv(x_nhwc, w_taps, b_row, (kh, kw), (ph, pw),
                           (Hp, Wp, Ho, Wo), Cp, Cout, out_dtype)
    # TODO(synk): strided convs fall back to a wrapper-side (XLA) im2col feeding a
    # Pallas matmul; the fused no-im2col path covers the module default stride (1, 1).
    return _im2col_conv(x_nhwc, w_taps, b_row, (kh, kw), (sh, sw), (ph, pw),
                        (Ho, Wo), Cp, Cout, out_dtype)


def fire_conv_forward(x, weight_conv, bias_conv, stride=(1, 1), padding=(1, 1),
                      if_bias_conv=True):
    """Module-parity entry point: NCHW in, NCHW out (transposes only at the boundary)."""
    Cout = weight_conv.shape[0]
    b = bias_conv if if_bias_conv else jnp.zeros((Cout,), x.dtype)
    x_nhwc = jnp.transpose(x, (0, 2, 3, 1))
    out = fire_conv_forward_nhwc(x_nhwc, weight_conv, b, stride, padding)
    return jnp.transpose(out, (0, 3, 1, 2))


# ---------------------------------------------------------------------------
# Pure-JAX reference
# ---------------------------------------------------------------------------
def fire_conv_reference(x, w, b, stride, padding, if_bias_conv=True):
    spikes = (x >= 0).astype(x.dtype)
    out = lax.conv_general_dilated(
        spikes, w, window_strides=stride,
        padding=[(padding[0], padding[0]), (padding[1], padding[1])],
        dimension_numbers=("NCHW", "OIHW", "NCHW"))
    if if_bias_conv:
        out = out + b.reshape(1, -1, 1, 1)
    return out


if __name__ == "__main__":
    key = jax.random.PRNGKey(0)
    k1, k2, k3 = jax.random.split(key, 3)

    # Small NCHW shapes consistent with the module: batch=2, cin=4, 16x16, cout=8.
    N, Cin, H, W = 2, 4, 16, 16
    Cout, kh, kw = 8, 3, 3
    x = jax.random.normal(k1, (N, Cin, H, W), dtype=jnp.float32)
    weight = 0.1 * jax.random.normal(k2, (Cout, Cin, kh, kw), dtype=jnp.float32)
    bias = 0.1 * jax.random.normal(k3, (Cout,), dtype=jnp.float32)

    fwd = jax.jit(fire_conv_forward,
                  static_argnames=("stride", "padding", "if_bias_conv"))

    # Default stride-(1,1) path: fused Heaviside + in-kernel im2col.
    y = jax.block_until_ready(fwd(x, weight, bias, stride=(1, 1), padding=(1, 1)))
    y_ref = fire_conv_reference(x, weight, bias, (1, 1), (1, 1))
    assert y.shape == y_ref.shape and y.dtype == x.dtype
    # bf16 weights inside the kernel -> relaxed tolerance (spikes are exact in bf16).
    assert bool(jnp.allclose(y, y_ref, rtol=3e-2, atol=3e-2))

    # Strided fallback path (wrapper im2col + Pallas matmul).
    y2 = jax.block_until_ready(fwd(x, weight, bias, stride=(2, 2), padding=(1, 1)))
    y2_ref = fire_conv_reference(x, weight, bias, (2, 2), (1, 1))
    assert y2.shape == y2_ref.shape
    assert bool(jnp.allclose(y2, y2_ref, rtol=3e-2, atol=3e-2))

    print("KERNEL_OK")
</pallas_src>

<mosaic_0001>
module attributes {stable_mosaic.version = 11 : i64} {
  func.func @kernel(%arg0: i32, %arg1: memref<1x326x4xf32, #tpu.memory_space<vmem>>, %arg2: memref<9x4x128xbf16, #tpu.memory_space<vmem>>, %arg3: memref<1x128xf32, #tpu.memory_space<vmem>>, %arg4: memref<1x288x128xf32, #tpu.memory_space<vmem>>, %arg5: memref<288x128xf32, #tpu.memory_space<vmem>>) attributes {dimension_semantics = [#tpu.dimension_semantics<parallel>], iteration_bounds = array<i64: 2>, scalar_prefetch = 0 : i64, scratch_operands = 1 : i64, tpu.core_type = #tpu.core_type<tc>, window_params = [{transform_indices = @transform_0, window_bounds = array<i64: 1, 326, 4>}, {pipeline_mode = #tpu.pipeline_mode<synchronous>, transform_indices = @transform_1, window_bounds = array<i64: 9, 4, 128>}, {pipeline_mode = #tpu.pipeline_mode<synchronous>, transform_indices = @transform_2, window_bounds = array<i64: 1, 128>}, {transform_indices = @transform_3, window_bounds = array<i64: 1, 288, 128>}]} {
    %cst = arith.constant 0.000000e+00 : f32
    %0 = vector.broadcast %cst : f32 to vector<288x128xf32>
    %c0 = arith.constant 0 : index
    %c0_0 = arith.constant 0 : index
    %1 = vector.load %arg5[%c0, %c0_0] : memref<288x128xf32, #tpu.memory_space<vmem>>, vector<288x128xf32>
    tpu.vector_store %arg5[%c0, %c0_0], %0 {strides = array<i32>} : memref<288x128xf32, #tpu.memory_space<vmem>>, vector<288x128xf32>,
    %c0_1 = arith.constant 0 : index
    %c0_2 = arith.constant 0 : index
    %c0_3 = arith.constant 0 : index
    %2 = vector.load %arg1[%c0_1, %c0_2, %c0_3] : memref<1x326x4xf32, #tpu.memory_space<vmem>>, vector<1x288x4xf32>
    %3 = vector.shape_cast %2 : vector<1x288x4xf32> to vector<288x4xf32>
    %cst_4 = arith.constant 0.000000e+00 : f32
    %4 = vector.broadcast %cst_4 : f32 to vector<288x4xf32>
    %5 = arith.cmpf oge, %3, %4 : vector<288x4xf32>
    %6 = arith.extui %5 : vector<288x4xi1> to vector<288x4xi32>
    %7 = arith.sitofp %6 : vector<288x4xi32> to vector<288x4xf32>
    %8 = arith.truncf %7 : vector<288x4xf32> to vector<288x4xbf16>
    %c0_5 = arith.constant 0 : index
    %c0_6 = arith.constant 0 : index
    %9 = vector.load %arg5[%c0_5, %c0_6] : memref<288x128xf32, #tpu.memory_space<vmem>>, vector<288x128xf32>
    %c0_7 = arith.constant 0 : index
    %c0_8 = arith.constant 0 : index
    %c0_9 = arith.constant 0 : index
    %10 = vector.load %arg2[%c0_7, %c0_8, %c0_9] : memref<9x4x128xbf16, #tpu.memory_space<vmem>>, vector<1x4x128xbf16>
    %11 = vector.shape_cast %10 : vector<1x4x128xbf16> to vector<4x128xbf16>
    %cst_10 = arith.constant dense<0.000000e+00> : vector<288x128xf32>
    %12 = tpu.matmul %8, %11, %cst_10 {dimension_numbers = #tpu.dot_dimension_numbers<[1], [0], [0], [1], [0, 0, 1, 1], [], []>} : vector<288x4xbf16>, vector<4x128xbf16>, vector<288x128xf32> -> vector<288x128xf32>
    %13 = arith.addf %9, %12 : vector<288x128xf32>
    %c0_11 = arith.constant 0 : index
    %c0_12 = arith.constant 0 : index
    %14 = vector.load %arg5[%c0_11, %c0_12] : memref<288x128xf32, #tpu.memory_space<vmem>>, vector<288x128xf32>
    tpu.vector_store %arg5[%c0_11, %c0_12], %13 {strides = array<i32>} : memref<288x128xf32, #tpu.memory_space<vmem>>, vector<288x128xf32>,
    %c0_13 = arith.constant 0 : index
    %c1 = arith.constant 1 : index
    %c0_14 = arith.constant 0 : index
    %15 = vector.load %arg1[%c0_13, %c1, %c0_14] : memref<1x326x4xf32, #tpu.memory_space<vmem>>, vector<1x288x4xf32>
    %16 = vector.shape_cast %15 : vector<1x288x4xf32> to vector<288x4xf32>
    %cst_15 = arith.constant 0.000000e+00 : f32
    %17 = vector.broadcast %cst_15 : f32 to vector<288x4xf32>
    %18 = arith.cmpf oge, %16, %17 : vector<288x4xf32>
    %19 = arith.extui %18 : vector<288x4xi1> to vector<288x4xi32>
    %20 = arith.sitofp %19 : vector<288x4xi32> to vector<288x4xf32>
    %21 = arith.truncf %20 : vector<288x4xf32> to vector<288x4xbf16>
    %c0_16 = arith.constant 0 : index
    %c0_17 = arith.constant 0 : index
    %22 = vector.load %arg5[%c0_16, %c0_17] : memref<288x128xf32, #tpu.memory_space<vmem>>, vector<288x128xf32>
    %c1_18 = arith.constant 1 : index
    %c0_19 = arith.constant 0 : index
    %c0_20 = arith.constant 0 : index
    %23 = vector.load %arg2[%c1_18, %c0_19, %c0_20] : memref<9x4x128xbf16, #tpu.memory_space<vmem>>, vector<1x4x128xbf16>
    %24 = vector.shape_cast %23 : vector<1x4x128xbf16> to vector<4x128xbf16>
    %cst_21 = arith.constant dense<0.000000e+00> : vector<288x128xf32>
    %25 = tpu.matmul %21, %24, %cst_21 {dimension_numbers = #tpu.dot_dimension_numbers<[1], [0], [0], [1], [0, 0, 1, 1], [], []>} : vector<288x4xbf16>, vector<4x128xbf16>, vector<288x128xf32> -> vector<288x128xf32>
    %26 = arith.addf %22, %25 : vector<288x128xf32>
    %c0_22 = arith.constant 0 : index
    %c0_23 = arith.constant 0 : index
    %27 = vector.load %arg5[%c0_22, %c0_23] : memref<288x128xf32, #tpu.memory_space<vmem>>, vector<288x128xf32>
    tpu.vector_store %arg5[%c0_22, %c0_23], %26 {strides = array<i32>} : memref<288x128xf32, #tpu.memory_space<vmem>>, vector<288x128xf32>,
    %c0_24 = arith.constant 0 : index
    %c2 = arith.constant 2 : index
    %c0_25 = arith.constant 0 : index
    %28 = vector.load %arg1[%c0_24, %c2, %c0_25] : memref<1x326x4xf32, #tpu.memory_space<vmem>>, vector<1x288x4xf32>
    %29 = vector.shape_cast %28 : vector<1x288x4xf32> to vector<288x4xf32>
    %cst_26 = arith.constant 0.000000e+00 : f32
    %30 = vector.broadcast %cst_26 : f32 to vector<288x4xf32>
    %31 = arith.cmpf oge, %29, %30 : vector<288x4xf32>
    %32 = arith.extui %31 : vector<288x4xi1> to vector<288x4xi32>
    %33 = arith.sitofp %32 : vector<288x4xi32> to vector<288x4xf32>
    %34 = arith.truncf %33 : vector<288x4xf32> to vector<288x4xbf16>
    %c0_27 = arith.constant 0 : index
    %c0_28 = arith.constant 0 : index
    %35 = vector.load %arg5[%c0_27, %c0_28] : memref<288x128xf32, #tpu.memory_space<vmem>>, vector<288x128xf32>
    %c2_29 = arith.constant 2 : index
    %c0_30 = arith.constant 0 : index
    %c0_31 = arith.constant 0 : index
    %36 = vector.load %arg2[%c2_29, %c0_30, %c0_31] : memref<9x4x128xbf16, #tpu.memory_space<vmem>>, vector<1x4x128xbf16>
    %37 = vector.shape_cast %36 : vector<1x4x128xbf16> to vector<4x128xbf16>
    %cst_32 = arith.constant dense<0.000000e+00> : vector<288x128xf32>
    %38 = tpu.matmul %34, %37, %cst_32 {dimension_numbers = #tpu.dot_dimension_numbers<[1], [0], [0], [1], [0, 0, 1, 1], [], []>} : vector<288x4xbf16>, vector<4x128xbf16>, vector<288x128xf32> -> vector<288x128xf32>
    %39 = arith.addf %35, %38 : vector<288x128xf32>
    %c0_33 = arith.constant 0 : index
    %c0_34 = arith.constant 0 : index
    %40 = vector.load %arg5[%c0_33, %c0_34] : memref<288x128xf32, #tpu.memory_space<vmem>>, vector<288x128xf32>
    tpu.vector_store %arg5[%c0_33, %c0_34], %39 {strides = array<i32>} : memref<288x128xf32, #tpu.memory_space<vmem>>, vector<288x128xf32>,
    %c0_35 = arith.constant 0 : index
    %c18 = arith.constant 18 : index
    %c0_36 = arith.constant 0 : index
    %41 = vector.load %arg1[%c0_35, %c18, %c0_36] : memref<1x326x4xf32, #tpu.memory_space<vmem>>, vector<1x288x4xf32>
    %42 = vector.shape_cast %41 : vector<1x288x4xf32> to vector<288x4xf32>
    %cst_37 = arith.constant 0.000000e+00 : f32
    %43 = vector.broadcast %cst_37 : f32 to vector<288x4xf32>
    %44 = arith.cmpf oge, %42, %43 : vector<288x4xf32>
    %45 = arith.extui %44 : vector<288x4xi1> to vector<288x4xi32>
    %46 = arith.sitofp %45 : vector<288x4xi32> to vector<288x4xf32>
    %47 = arith.truncf %46 : vector<288x4xf32> to vector<288x4xbf16>
    %c0_38 = arith.constant 0 : index
    %c0_39 = arith.constant 0 : index
    %48 = vector.load %arg5[%c0_38, %c0_39] : memref<288x128xf32, #tpu.memory_space<vmem>>, vector<288x128xf32>
    %c3 = arith.constant 3 : index
    %c0_40 = arith.constant 0 : index
    %c0_41 = arith.constant 0 : index
    %49 = vector.load %arg2[%c3, %c0_40, %c0_41] : memref<9x4x128xbf16, #tpu.memory_space<vmem>>, vector<1x4x128xbf16>
    %50 = vector.shape_cast %49 : vector<1x4x128xbf16> to vector<4x128xbf16>
    %cst_42 = arith.constant dense<0.000000e+00> : vector<288x128xf32>
    %51 = tpu.matmul %47, %50, %cst_42 {dimension_numbers = #tpu.dot_dimension_numbers<[1], [0], [0], [1], [0, 0, 1, 1], [], []>} : vector<288x4xbf16>, vector<4x128xbf16>, vector<288x128xf32> -> vector<288x128xf32>
    %52 = arith.addf %48, %51 : vector<288x128xf32>
    %c0_43 = arith.constant 0 : index
    %c0_44 = arith.constant 0 : index
    %53 = vector.load %arg5[%c0_43, %c0_44] : memref<288x128xf32, #tpu.memory_space<vmem>>, vector<288x128xf32>
    tpu.vector_store %arg5[%c0_43, %c0_44], %52 {strides = array<i32>} : memref<288x128xf32, #tpu.memory_space<vmem>>, vector<288x128xf32>,
    %c0_45 = arith.constant 0 : index
    %c19 = arith.constant 19 : index
    %c0_46 = arith.constant 0 : index
    %54 = vector.load %arg1[%c0_45, %c19, %c0_46] : memref<1x326x4xf32, #tpu.memory_space<vmem>>, vector<1x288x4xf32>
    %55 = vector.shape_cast %54 : vector<1x288x4xf32> to vector<288x4xf32>
    %cst_47 = arith.constant 0.000000e+00 : f32
    %56 = vector.broadcast %cst_47 : f32 to vector<288x4xf32>
    %57 = arith.cmpf oge, %55, %56 : vector<288x4xf32>
    %58 = arith.extui %57 : vector<288x4xi1> to vector<288x4xi32>
    %59 = arith.sitofp %58 : vector<288x4xi32> to vector<288x4xf32>
    %60 = arith.truncf %59 : vector<288x4xf32> to vector<288x4xbf16>
    %c0_48 = arith.constant 0 : index
    %c0_49 = arith.constant 0 : index
    %61 = vector.load %arg5[%c0_48, %c0_49] : memref<288x128xf32, #tpu.memory_space<vmem>>, vector<288x128xf32>
    %c4 = arith.constant 4 : index
    %c0_50 = arith.constant 0 : index
    %c0_51 = arith.constant 0 : index
    %62 = vector.load %arg2[%c4, %c0_50, %c0_51] : memref<9x4x128xbf16, #tpu.memory_space<vmem>>, vector<1x4x128xbf16>
    %63 = vector.shape_cast %62 : vector<1x4x128xbf16> to vector<4x128xbf16>
    %cst_52 = arith.constant dense<0.000000e+00> : vector<288x128xf32>
    %64 = tpu.matmul %60, %63, %cst_52 {dimension_numbers = #tpu.dot_dimension_numbers<[1], [0], [0], [1], [0, 0, 1, 1], [], []>} : vector<288x4xbf16>, vector<4x128xbf16>, vector<288x128xf32> -> vector<288x128xf32>
    %65 = arith.addf %61, %64 : vector<288x128xf32>
    %c0_53 = arith.constant 0 : index
    %c0_54 = arith.constant 0 : index
    %66 = vector.load %arg5[%c0_53, %c0_54] : memref<288x128xf32, #tpu.memory_space<vmem>>, vector<288x128xf32>
    tpu.vector_store %arg5[%c0_53, %c0_54], %65 {strides = array<i32>} : memref<288x128xf32, #tpu.memory_space<vmem>>, vector<288x128xf32>,
    %c0_55 = arith.constant 0 : index
    %c20 = arith.constant 20 : index
    %c0_56 = arith.constant 0 : index
    %67 = vector.load %arg1[%c0_55, %c20, %c0_56] : memref<1x326x4xf32, #tpu.memory_space<vmem>>, vector<1x288x4xf32>
    %68 = vector.shape_cast %67 : vector<1x288x4xf32> to vector<288x4xf32>
    %cst_57 = arith.constant 0.000000e+00 : f32
    %69 = vector.broadcast %cst_57 : f32 to vector<288x4xf32>
    %70 = arith.cmpf oge, %68, %69 : vector<288x4xf32>
    %71 = arith.extui %70 : vector<288x4xi1> to vector<288x4xi32>
    %72 = arith.sitofp %71 : vector<288x4xi32> to vector<288x4xf32>
    %73 = arith.truncf %72 : vector<288x4xf32> to vector<288x4xbf16>
    %c0_58 = arith.constant 0 : index
    %c0_59 = arith.constant 0 : index
    %74 = vector.load %arg5[%c0_58, %c0_59] : memref<288x128xf32, #tpu.memory_space<vmem>>, vector<288x128xf32>
    %c5 = arith.constant 5 : index
    %c0_60 = arith.constant 0 : index
    %c0_61 = arith.constant 0 : index
    %75 = vector.load %arg2[%c5, %c0_60, %c0_61] : memref<9x4x128xbf16, #tpu.memory_space<vmem>>, vector<1x4x128xbf16>
    %76 = vector.shape_cast %75 : vector<1x4x128xbf16> to vector<4x128xbf16>
    %cst_62 = arith.constant dense<0.000000e+00> : vector<288x128xf32>
    %77 = tpu.matmul %73, %76, %cst_62 {dimension_numbers = #tpu.dot_dimension_numbers<[1], [0], [0], [1], [0, 0, 1, 1], [], []>} : vector<288x4xbf16>, vector<4x128xbf16>, vector<288x128xf32> -> vector<288x128xf32>
    %78 = arith.addf %74, %77 : vector<288x128xf32>
    %c0_63 = arith.constant 0 : index
    %c0_64 = arith.constant 0 : index
    %79 = vector.load %arg5[%c0_63, %c0_64] : memref<288x128xf32, #tpu.memory_space<vmem>>, vector<288x128xf32>
    tpu.vector_store %arg5[%c0_63, %c0_64], %78 {strides = array<i32>} : memref<288x128xf32, #tpu.memory_space<vmem>>, vector<288x128xf32>,
    %c0_65 = arith.constant 0 : index
    %c36 = arith.constant 36 : index
    %c0_66 = arith.constant 0 : index
    %80 = vector.load %arg1[%c0_65, %c36, %c0_66] : memref<1x326x4xf32, #tpu.memory_space<vmem>>, vector<1x288x4xf32>
    %81 = vector.shape_cast %80 : vector<1x288x4xf32> to vector<288x4xf32>
    %cst_67 = arith.constant 0.000000e+00 : f32
    %82 = vector.broadcast %cst_67 : f32 to vector<288x4xf32>
    %83 = arith.cmpf oge, %81, %82 : vector<288x4xf32>
    %84 = arith.extui %83 : vector<288x4xi1> to vector<288x4xi32>
    %85 = arith.sitofp %84 : vector<288x4xi32> to vector<288x4xf32>
    %86 = arith.truncf %85 : vector<288x4xf32> to vector<288x4xbf16>
    %c0_68 = arith.constant 0 : index
    %c0_69 = arith.constant 0 : index
    %87 = vector.load %arg5[%c0_68, %c0_69] : memref<288x128xf32, #tpu.memory_space<vmem>>, vector<288x128xf32>
    %c6 = arith.constant 6 : index
    %c0_70 = arith.constant 0 : index
    %c0_71 = arith.constant 0 : index
    %88 = vector.load %arg2[%c6, %c0_70, %c0_71] : memref<9x4x128xbf16, #tpu.memory_space<vmem>>, vector<1x4x128xbf16>
    %89 = vector.shape_cast %88 : vector<1x4x128xbf16> to vector<4x128xbf16>
    %cst_72 = arith.constant dense<0.000000e+00> : vector<288x128xf32>
    %90 = tpu.matmul %86, %89, %cst_72 {dimension_numbers = #tpu.dot_dimension_numbers<[1], [0], [0], [1], [0, 0, 1, 1], [], []>} : vector<288x4xbf16>, vector<4x128xbf16>, vector<288x128xf32> -> vector<288x128xf32>
    %91 = arith.addf %87, %90 : vector<288x128xf32>
    %c0_73 = arith.constant 0 : index
    %c0_74 = arith.constant 0 : index
    %92 = vector.load %arg5[%c0_73, %c0_74] : memref<288x128xf32, #tpu.memory_space<vmem>>, vector<288x128xf32>
    tpu.vector_store %arg5[%c0_73, %c0_74], %91 {strides = array<i32>} : memref<288x128xf32, #tpu.memory_space<vmem>>, vector<288x128xf32>,
    %c0_75 = arith.constant 0 : index
    %c37 = arith.constant 37 : index
    %c0_76 = arith.constant 0 : index
    %93 = vector.load %arg1[%c0_75, %c37, %c0_76] : memref<1x326x4xf32, #tpu.memory_space<vmem>>, vector<1x288x4xf32>
    %94 = vector.shape_cast %93 : vector<1x288x4xf32> to vector<288x4xf32>
    %cst_77 = arith.constant 0.000000e+00 : f32
    %95 = vector.broadcast %cst_77 : f32 to vector<288x4xf32>
    %96 = arith.cmpf oge, %94, %95 : vector<288x4xf32>
    %97 = arith.extui %96 : vector<288x4xi1> to vector<288x4xi32>
    %98 = arith.sitofp %97 : vector<288x4xi32> to vector<288x4xf32>
    %99 = arith.truncf %98 : vector<288x4xf32> to vector<288x4xbf16>
    %c0_78 = arith.constant 0 : index
    %c0_79 = arith.constant 0 : index
    %100 = vector.load %arg5[%c0_78, %c0_79] : memref<288x128xf32, #tpu.memory_space<vmem>>, vector<288x128xf32>
    %c7 = arith.constant 7 : index
    %c0_80 = arith.constant 0 : index
    %c0_81 = arith.constant 0 : index
    %101 = vector.load %arg2[%c7, %c0_80, %c0_81] : memref<9x4x128xbf16, #tpu.memory_space<vmem>>, vector<1x4x128xbf16>
    %102 = vector.shape_cast %101 : vector<1x4x128xbf16> to vector<4x128xbf16>
    %cst_82 = arith.constant dense<0.000000e+00> : vector<288x128xf32>
    %103 = tpu.matmul %99, %102, %cst_82 {dimension_numbers = #tpu.dot_dimension_numbers<[1], [0], [0], [1], [0, 0, 1, 1], [], []>} : vector<288x4xbf16>, vector<4x128xbf16>, vector<288x128xf32> -> vector<288x128xf32>
    %104 = arith.addf %100, %103 : vector<288x128xf32>
    %c0_83 = arith.constant 0 : index
    %c0_84 = arith.constant 0 : index
    %105 = vector.load %arg5[%c0_83, %c0_84] : memref<288x128xf32, #tpu.memory_space<vmem>>, vector<288x128xf32>
    tpu.vector_store %arg5[%c0_83, %c0_84], %104 {strides = array<i32>} : memref<288x128xf32, #tpu.memory_space<vmem>>, vector<288x128xf32>,
    %c0_85 = arith.constant 0 : index
    %c38 = arith.constant 38 : index
    %c0_86 = arith.constant 0 : index
    %106 = vector.load %arg1[%c0_85, %c38, %c0_86] : memref<1x326x4xf32, #tpu.memory_space<vmem>>, vector<1x288x4xf32>
    %107 = vector.shape_cast %106 : vector<1x288x4xf32> to vector<288x4xf32>
    %cst_87 = arith.constant 0.000000e+00 : f32
    %108 = vector.broadcast %cst_87 : f32 to vector<288x4xf32>
    %109 = arith.cmpf oge, %107, %108 : vector<288x4xf32>
    %110 = arith.extui %109 : vector<288x4xi1> to vector<288x4xi32>
    %111 = arith.sitofp %110 : vector<288x4xi32> to vector<288x4xf32>
    %112 = arith.truncf %111 : vector<288x4xf32> to vector<288x4xbf16>
    %c0_88 = arith.constant 0 : index
    %c0_89 = arith.constant 0 : index
    %113 = vector.load %arg5[%c0_88, %c0_89] : memref<288x128xf32, #tpu.memory_space<vmem>>, vector<288x128xf32>
    %c8 = arith.constant 8 : index
    %c0_90 = arith.constant 0 : index
    %c0_91 = arith.constant 0 : index
    %114 = vector.load %arg2[%c8, %c0_90, %c0_91] : memref<9x4x128xbf16, #tpu.memory_space<vmem>>, vector<1x4x128xbf16>
    %115 = vector.shape_cast %114 : vector<1x4x128xbf16> to vector<4x128xbf16>
    %cst_92 = arith.constant dense<0.000000e+00> : vector<288x128xf32>
    %116 = tpu.matmul %112, %115, %cst_92 {dimension_numbers = #tpu.dot_dimension_numbers<[1], [0], [0], [1], [0, 0, 1, 1], [], []>} : vector<288x4xbf16>, vector<4x128xbf16>, vector<288x128xf32> -> vector<288x128xf32>
    %117 = arith.addf %113, %116 : vector<288x128xf32>
    %c0_93 = arith.constant 0 : index
    %c0_94 = arith.constant 0 : index
    %118 = vector.load %arg5[%c0_93, %c0_94] : memref<288x128xf32, #tpu.memory_space<vmem>>, vector<288x128xf32>
    tpu.vector_store %arg5[%c0_93, %c0_94], %117 {strides = array<i32>} : memref<288x128xf32, #tpu.memory_space<vmem>>, vector<288x128xf32>,
    %c0_95 = arith.constant 0 : index
    %c0_96 = arith.constant 0 : index
    %119 = vector.load %arg5[%c0_95, %c0_96] : memref<288x128xf32, #tpu.memory_space<vmem>>, vector<288x128xf32>
    %c0_97 = arith.constant 0 : index
    %c0_98 = arith.constant 0 : index
    %120 = vector.load %arg3[%c0_97, %c0_98] : memref<1x128xf32, #tpu.memory_space<vmem>>, vector<1x128xf32>
    %121 = vector.broadcast %120 : vector<1x128xf32> to vector<288x128xf32>
    %122 = arith.addf %119, %121 : vector<288x128xf32>
    %c0_99 = arith.constant 0 : index
    %c0_100 = arith.constant 0 : index
    %c0_101 = arith.constant 0 : index
    %123 = vector.load %arg4[%c0_99, %c0_100, %c0_101] : memref<1x288x128xf32, #tpu.memory_space<vmem>>, vector<1x288x128xf32>
    %124 = vector.shape_cast %123 : vector<1x288x128xf32> to vector<288x128xf32>
    %125 = vector.shape_cast %122 : vector<288x128xf32> to vector<1x288x128xf32>
    tpu.vector_store %arg4[%c0_99, %c0_100, %c0_101], %125 {strides = array<i32>} : memref<1x288x128xf32, #tpu.memory_space<vmem>>, vector<1x288x128xf32>,
    return
  }
  func.func @transform_0(%arg0: i32) -> (i32, i32, i32) {
    %c0_i32 = arith.constant 0 : i32
    %c0_i32_0 = arith.constant 0 : i32
    %c0_i32_1 = arith.constant 0 : i32
    return %arg0, %c0_i32, %c0_i32_0 : i32, i32, i32
  }
  func.func @transform_1(%arg0: i32) -> (i32, i32, i32) {
    %c0_i32 = arith.constant 0 : i32
    %c0_i32_0 = arith.constant 0 : i32
    %c0_i32_1 = arith.constant 0 : i32
    %c0_i32_2 = arith.constant 0 : i32
    return %c0_i32, %c0_i32_0, %c0_i32_1 : i32, i32, i32
  }
  func.func @transform_2(%arg0: i32) -> (i32, i32) {
    %c0_i32 = arith.constant 0 : i32
    %c0_i32_0 = arith.constant 0 : i32
    %c0_i32_1 = arith.constant 0 : i32
    return %c0_i32, %c0_i32_0 : i32, i32
  }
  func.func @transform_3(%arg0: i32) -> (i32, i32, i32) {
    %c0_i32 = arith.constant 0 : i32
    %c0_i32_0 = arith.constant 0 : i32
    %c0_i32_1 = arith.constant 0 : i32
    return %arg0, %c0_i32, %c0_i32_0 : i32, i32, i32
  }
}

</mosaic_0001>

<llo_original>
// kernel: fire_conv_forward.1
$region0: #{fire_conv_forward.1}
  #allocation0 [shape = 'u32[]', space=smem, size = 0x4, offset = 0x4, fixed_abs, tag = 'smem constant byte address 0x4 - core index']
  #allocation1 [shape = 'u32[144,128]{1,0:T(1,128)}', space=vmem, size = 0x12000, scoped, tag = 'internal scratch']
  #allocation2 [shape = 'f32[288,128]{1,0:T(8,128)}', space=vmem, size = 0x24000, scoped, tag = 'scratch operand']
  %s0 = inlined_call_operand.hbm [shape: f32[2,326,4], index: 0, kind: input, shape index: {}]
  %s1 = inlined_call_operand.hbm [shape: bf16[9,4,128], index: 1, kind: input, shape index: {}]
  %s2 = inlined_call_operand.hbm [shape: f32[1,128], index: 2, kind: input, shape index: {}]
  %s3 = inlined_call_operand.hbm [shape: f32[2,288,128], index: 3, kind: output, shape index: {}]
  %s4 = sld [smem:[#allocation0]]
  $region57: #{fire_conv_forward.1} parent=0
    _
  %s6 = ssub.s32 1, %s4
  %s7 = scalar_select 0, %s6, %s4
  $region1: #{fire_conv_forward.1} parent=0
    #allocation3 [shape = 'u8[335872]{0}', space=vmem, size = 0x52000, scoped, tag = 'input window, operand 0']
    #allocation4 [shape = 's32[2]{0}', space=sflag, size = 0x8, scoped, tag = 'scoped memory for fire_conv_forward.1']
    #allocation5 [shape = 's32[2]{0}', space=sflag, size = 0x8, scoped, tag = 'scoped memory for fire_conv_forward.1']
    #allocation6 [shape = 'u8[9216]{0}', space=vmem, size = 0x2400, scoped, tag = 'input window, operand 1, single buffered']
    #allocation7 [shape = 's32[1]{0}', space=sflag, size = 0x4, scoped, tag = 'scoped memory for fire_conv_forward.1']
    #allocation8 [shape = 'u8[512]{0}', space=vmem, size = 0x400, scoped, tag = 'input window, operand 2, single buffered']
    #allocation9 [shape = 'u8[294912]{0}', space=vmem, size = 0x48000, scoped, tag = 'output window, operand 0']
    %8 = vsyncpa [#allocation4], 0
    %s9 = scalar_lea.sflag [#allocation4], 1
    %10 = vsyncpa %s9, 0
    %11 = vsyncpa [#allocation7], 0
    %12 = vsyncpa [#allocation5], 0
    %s13 = scalar_lea.sflag [#allocation5], 1
    %14 = vsyncpa %s13, 0
    loop: start=0, step=1, limit=4
    $region2: #{fire_conv_forward.1} parent=1 // loop_pre_header
      _
    $region3: #{fire_conv_forward.1} parent=1 // loop_header
      %s16 = sphi 0, %s20
      %p17 = scmp.ge.s32.totalorder %s16, 4
      %s26 = sphi 0, %s28
      %s29 = sphi 0, %s26
      %s30 = sphi 0, %s29
      %s46 = sphi 0, %s30
      %s50 = sphi 0, %s50
      %s52 = sphi 0, %s50
      %s53 = sphi 0, %s52
      %s67 = sphi 0, %s53
      %s71 = sphi 0, %s71
      %s73 = sphi 0, %s71
      %s74 = sphi 0, %s73
      %s88 = sphi 0, %s74
      %s94 = sphi 0, %s96
      %s97 = sphi 0, %s94
      %s98 = sphi 0, %s97
      %s114 = sphi 0, %s98
    $region4: #{fire_conv_forward.1} parent=1 // loop_header_branch
      %19 = sbr.rel (%p17) target = $region8
    $region5: #{fire_conv_forward.1} parent=1 // loop_body
      %s21 = ssub.s32 %s16, 1
      %s22 = ssub.s32 %s16, 2
      %s23 = sadd.s32 %s16, 1
      %s24 = ssub.s32 %s16, %s23
      %p25 = scmp.eq.s32.totalorder %s24, 0
      %s27 = sadd.s32 %s26, 1
      %s28 = scalar_select %p25, %s26, %s27
      %p31 = pneg %p25
      %p32 = scmp.eq.s32.totalorder %s16, 1
      %p33 = por %p31, %p32
      %p34 = scmp.ne.s32.totalorder %s26, %s29
      %p35 = scmp.eq.s32.totalorder %s16, 0
      %p36 = por %p34, %p35
      %p37 = scmp.ne.s32.totalorder %s26, %s29
      %p38 = scmp.eq.s32.totalorder %s21, 1
      %p39 = por %p37, %p38
      %p40 = scmp.ne.s32.totalorder %s29, %s30
      %p41 = scmp.eq.s32.totalorder %s21, 0
      %p42 = por %p40, %p41
      %p43 = scmp.ne.s32.totalorder %s29, %s30
      %p44 = scmp.eq.s32.totalorder %s22, 1
      %p45 = por %p43, %p44
      %p47 = scmp.ne.s32.totalorder %s30, %s46
      %p48 = scmp.eq.s32.totalorder %s22, 0
      %p49 = por %p47, %p48
      %s51 = sadd.s32 %s50, 1
      %p54 = scmp.eq.s32.totalorder %s16, 1
      %p55 = scmp.ne.s32.totalorder %s50, %s52
      %p56 = scmp.eq.s32.totalorder %s16, 0
      %p57 = por %p55, %p56
      %p58 = scmp.ne.s32.totalorder %s50, %s52
      %p59 = scmp.eq.s32.totalorder %s21, 1
      %p60 = por %p58, %p59
      %p61 = scmp.ne.s32.totalorder %s52, %s53
      %p62 = scmp.eq.s32.totalorder %s21, 0
      %p63 = por %p61, %p62
      %p64 = scmp.ne.s32.totalorder %s52, %s53
      %p65 = scmp.eq.s32.totalorder %s22, 1
      %p66 = por %p64, %p65
      %p68 = scmp.ne.s32.totalorder %s53, %s67
      %p69 = scmp.eq.s32.totalorder %s22, 0
      %p70 = por %p68, %p69
      %s72 = sadd.s32 %s71, 1
      %p75 = scmp.eq.s32.totalorder %s16, 1
      %p76 = scmp.ne.s32.totalorder %s71, %s73
      %p77 = scmp.eq.s32.totalorder %s16, 0
      %p78 = por %p76, %p77
      %p79 = scmp.ne.s32.totalorder %s71, %s73
      %p80 = scmp.eq.s32.totalorder %s21, 1
      %p81 = por %p79, %p80
      %p82 = scmp.ne.s32.totalorder %s73, %s74
      %p83 = scmp.eq.s32.totalorder %s21, 0
      %p84 = por %p82, %p83
      %p85 = scmp.ne.s32.totalorder %s73, %s74
      %p86 = scmp.eq.s32.totalorder %s22, 1
      %p87 = por %p85, %p86
      %p89 = scmp.ne.s32.totalorder %s74, %s88
      %p90 = scmp.eq.s32.totalorder %s22, 0
      %p91 = por %p89, %p90
      %s92 = ssub.s32 %s16, %s23
      %p93 = scmp.eq.s32.totalorder %s92, 0
      %s95 = sadd.s32 %s94, 1
      %s96 = scalar_select %p93, %s94, %s95
      %p99 = pneg %p93
      %p100 = scmp.eq.s32.totalorder %s16, 1
      %p101 = por %p99, %p100
      %p102 = scmp.ne.s32.totalorder %s94, %s97
      %p103 = scmp.eq.s32.totalorder %s16, 0
      %p104 = por %p102, %p103
      %p105 = scmp.ne.s32.totalorder %s94, %s97
      %p106 = scmp.eq.s32.totalorder %s21, 1
      %p107 = por %p105, %p106
      %p108 = scmp.ne.s32.totalorder %s97, %s98
      %p109 = scmp.eq.s32.totalorder %s21, 0
      %p110 = por %p108, %p109
      %p111 = scmp.ne.s32.totalorder %s97, %s98
      %p112 = scmp.eq.s32.totalorder %s22, 1
      %p113 = por %p111, %p112
      %p115 = scmp.ne.s32.totalorder %s98, %s114
      %p116 = scmp.eq.s32.totalorder %s22, 0
      %p117 = por %p115, %p116
      %p118 = scmp.le.s32.totalorder 1, %s16
      %p119 = scmp.lt.s32.totalorder %s16, 3
      %p120 = pnand %p118, %p119
      %p121 = pneg %p120
      // Predicated region
      $region9: #{fire_conv_forward.1} parent=5 // pred_check
        _
      $region10: #{fire_conv_forward.1} parent=5 // pred_check_branch
        %123 = sbr.rel (%p120) target = $region12
      $region11: #{fire_conv_forward.1} parent=5 // pred_region
        %s124 = ssub.s32 %s16, 1
        // Predicated region
        $region13: #{fire_conv_forward.1} parent=11 // pred_check
          %p125 = pneg %p63
        $region14: #{fire_conv_forward.1} parent=11 // pred_check_branch
          %127 = sbr.rel (%p125) target = $region16
        $region15: #{fire_conv_forward.1} parent=11 // pred_region
          %s129 = ssub.s32 288, 288
          %130 = vsyncadd [#allocation7], %s129
          %s131 = sshll.u32 [#allocation6], 4
          %s132 = int_to_ptr.vmem [resolvable:$true] %s131
          %137 = dma.hbm_to_vmem [thread:$0]  %s1, 288, %s132, [#allocation7], 32, 32, 2
        $region16: #{fire_conv_forward.1} parent=11 // pred_fallthru
          _
        // Predicated region
        $region17: #{fire_conv_forward.1} parent=11 // pred_check
          %p138 = pneg %p84
        $region18: #{fire_conv_forward.1} parent=11 // pred_check_branch
          %140 = sbr.rel (%p138) target = $region20
        $region19: #{fire_conv_forward.1} parent=11 // pred_region
          %s142 = ssub.s32 16, 16
          %143 = vsyncadd [#allocation7], %s142
          %s145 = sshll.u32 [#allocation8], 4
          %s146 = int_to_ptr.vmem [resolvable:$true] %s145
          %148 = dma.hbm_to_vmem [thread:$0]  %s2, 16, %s146, [#allocation7]
        $region20: #{fire_conv_forward.1} parent=11 // pred_fallthru
          _
      $region12: #{fire_conv_forward.1} parent=5 // pred_fallthru
        _
      %p149 = scmp.lt.s32.totalorder %s16, 2
      // Predicated region
      $region21: #{fire_conv_forward.1} parent=5 // pred_check
        %p150 = pneg %p149
      $region22: #{fire_conv_forward.1} parent=5 // pred_check_branch
        %152 = sbr.rel (%p150) target = $region24
      $region23: #{fire_conv_forward.1} parent=5 // pred_region
        // Predicated region
        $region25: #{fire_conv_forward.1} parent=23 // pred_check
          %p153 = pneg %p36
        $region26: #{fire_conv_forward.1} parent=23 // pred_check_branch
          %155 = sbr.rel (%p153) target = $region28
        $region27: #{fire_conv_forward.1} parent=23 // pred_region
          %s156 = sand.u32 %s26, 1
          %s157 = scalar_lea.sflag [#allocation4], %s156
          %s158 = sand.u32 %s26, 1
          %s159 = smul.addr %s158, 328
          %s160 = scalar_lea.vmem [#allocation3], %s159
          %s162 = ssub.s32 5248, 5248
          %163 = vsyncadd %s157, %s162
          %s164 = smul.addr %s16, 41
          %s165 = smul.addr %s164, 128
          %s166 = scalar_lea.hbm %s0, %s165
          %s167 = sshll.u32 %s160, 4
          %s168 = int_to_ptr.vmem [resolvable:$true] %s167
          %173 = dma.hbm_to_vmem [thread:$0]  %s166, 5248, %s168, %s157, 128, 128, 8
        $region28: #{fire_conv_forward.1} parent=23 // pred_fallthru
          _
      $region24: #{fire_conv_forward.1} parent=5 // pred_fallthru
        _
      %p174 = scmp.le.s32.totalorder 1, %s16
      %p175 = scmp.lt.s32.totalorder %s16, 3
      %p176 = pnand %p174, %p175
      %p177 = pneg %p176
      // Predicated region
      $region29: #{fire_conv_forward.1} parent=5 // pred_check
        _
      $region30: #{fire_conv_forward.1} parent=5 // pred_check_branch
        %179 = sbr.rel (%p176) target = $region32
      $region31: #{fire_conv_forward.1} parent=5 // pred_region
        %s180 = ssub.s32 %s16, 1
        %s181 = sand.u32 %s29, 1
        %s182 = scalar_lea.sflag [#allocation4], %s181
        %s183 = sand.u32 %s29, 1
        %s184 = smul.addr %s183, 328
        %s185 = scalar_lea.vmem [#allocation3], %s184
        // Predicated region
        $region33: #{fire_conv_forward.1} parent=31 // pred_check
          %p186 = pneg %p42
        $region34: #{fire_conv_forward.1} parent=31 // pred_check_branch
          %188 = sbr.rel (%p186) target = $region36
        $region35: #{fire_conv_forward.1} parent=31 // pred_region
          %189 = dma.done %s182, 5248
        $region36: #{fire_conv_forward.1} parent=31 // pred_fallthru
          _
        // Predicated region
        $region37: #{fire_conv_forward.1} parent=31 // pred_check
          %p190 = pneg %p63
        $region38: #{fire_conv_forward.1} parent=31 // pred_check_branch
          %192 = sbr.rel (%p190) target = $region40
        $region39: #{fire_conv_forward.1} parent=31 // pred_region
          %193 = dma.done [#allocation7], 288
        $region40: #{fire_conv_forward.1} parent=31 // pred_fallthru
          _
        // Predicated region
        $region41: #{fire_conv_forward.1} parent=31 // pred_check
          %p194 = pneg %p84
        $region42: #{fire_conv_forward.1} parent=31 // pred_check_branch
          %196 = sbr.rel (%p194) target = $region44
        $region43: #{fire_conv_forward.1} parent=31 // pred_region
          %197 = dma.done [#allocation7], 16
        $region44: #{fire_conv_forward.1} parent=31 // pred_fallthru
          _
        %s198 = sand.u32 %s29, 1
        %s199 = scalar_lea.sflag [#allocation4], %s198
        %s200 = sand.u32 %s29, 1
        %s201 = smul.addr %s200, 328
        %s202 = scalar_lea.vmem [#allocation3], %s201
        %p203 = pneg %p42
        %p204 = pneg %p39
        %p205 = pneg %p63
        %p206 = pneg %p60
        %p207 = pneg %p84
        %p208 = pneg %p81
        %p209 = pneg %p110
        %p210 = pneg %p107
        %s211 = sand.u32 %s97, 1
        %s212 = scalar_lea.sflag [#allocation5], %s211
        %s213 = sand.u32 %s97, 1
        %s214 = smul.addr %s213, 288
        %s215 = scalar_lea.vmem [#allocation9], %s214
        %217 = vst [vmem:[#allocation2] sm:$0xff] 0.0
        %218 = vst [vmem:[#allocation2 + $0x8] sm:$0xff] 0.0
        %219 = vst [vmem:[#allocation2 + $0x10] sm:$0xff] 0.0
        %220 = vst [vmem:[#allocation2 + $0x18] sm:$0xff] 0.0
        %221 = vst [vmem:[#allocation2 + $0x20] sm:$0xff] 0.0
        %222 = vst [vmem:[#allocation2 + $0x28] sm:$0xff] 0.0
        %223 = vst [vmem:[#allocation2 + $0x30] sm:$0xff] 0.0
        %224 = vst [vmem:[#allocation2 + $0x38] sm:$0xff] 0.0
        %225 = vst [vmem:[#allocation2 + $0x40] sm:$0xff] 0.0
        %226 = vst [vmem:[#allocation2 + $0x48] sm:$0xff] 0.0
        %227 = vst [vmem:[#allocation2 + $0x50] sm:$0xff] 0.0
        %228 = vst [vmem:[#allocation2 + $0x58] sm:$0xff] 0.0
        %229 = vst [vmem:[#allocation2 + $0x60] sm:$0xff] 0.0
        %230 = vst [vmem:[#allocation2 + $0x68] sm:$0xff] 0.0
        %231 = vst [vmem:[#allocation2 + $0x70] sm:$0xff] 0.0
        %232 = vst [vmem:[#allocation2 + $0x78] sm:$0xff] 0.0
        %233 = vst [vmem:[#allocation2 + $0x80] sm:$0xff] 0.0
        %234 = vst [vmem:[#allocation2 + $0x88] sm:$0xff] 0.0
        %235 = vst [vmem:[#allocation2 + $0x90] sm:$0xff] 0.0
        %236 = vst [vmem:[#allocation2 + $0x98] sm:$0xff] 0.0
        %237 = vst [vmem:[#allocation2 + $0xa0] sm:$0xff] 0.0
        %238 = vst [vmem:[#allocation2 + $0xa8] sm:$0xff] 0.0
        %239 = vst [vmem:[#allocation2 + $0xb0] sm:$0xff] 0.0
        %240 = vst [vmem:[#allocation2 + $0xb8] sm:$0xff] 0.0
        %241 = vst [vmem:[#allocation2 + $0xc0] sm:$0xff] 0.0
        %242 = vst [vmem:[#allocation2 + $0xc8] sm:$0xff] 0.0
        %243 = vst [vmem:[#allocation2 + $0xd0] sm:$0xff] 0.0
        %244 = vst [vmem:[#allocation2 + $0xd8] sm:$0xff] 0.0
        %245 = vst [vmem:[#allocation2 + $0xe0] sm:$0xff] 0.0
        %246 = vst [vmem:[#allocation2 + $0xe8] sm:$0xff] 0.0
        %247 = vst [vmem:[#allocation2 + $0xf0] sm:$0xff] 0.0
        %248 = vst [vmem:[#allocation2 + $0xf8] sm:$0xff] 0.0
        %249 = vst [vmem:[#allocation2 + $0x100] sm:$0xff] 0.0
        %250 = vst [vmem:[#allocation2 + $0x108] sm:$0xff] 0.0
        %251 = vst [vmem:[#allocation2 + $0x110] sm:$0xff] 0.0
        %252 = vst [vmem:[#allocation2 + $0x118] sm:$0xff] 0.0
        %v253 = vld [vmem:[%s185] sm:$0xff]
        %v254 = vld [vmem:[%s185 + $0x8] sm:$0xff]
        %v255 = vld [vmem:[%s185 + $0x10] sm:$0xff]
        %v256 = vld [vmem:[%s185 + $0x18] sm:$0xff]
        %v257 = vld [vmem:[%s185 + $0x20] sm:$0xff]
        %v258 = vld [vmem:[%s185 + $0x28] sm:$0xff]
        %v259 = vld [vmem:[%s185 + $0x30] sm:$0xff]
        %v260 = vld [vmem:[%s185 + $0x38] sm:$0xff]
        %v261 = vld [vmem:[%s185 + $0x40] sm:$0xff]
        %v262 = vld [vmem:[%s185 + $0x48] sm:$0xff]
        %v263 = vld [vmem:[%s185 + $0x50] sm:$0xff]
        %v264 = vld [vmem:[%s185 + $0x58] sm:$0xff]
        %v265 = vld [vmem:[%s185 + $0x60] sm:$0xff]
        %v266 = vld [vmem:[%s185 + $0x68] sm:$0xff]
        %v267 = vld [vmem:[%s185 + $0x70] sm:$0xff]
        %v268 = vld [vmem:[%s185 + $0x78] sm:$0xff]
        %v269 = vld [vmem:[%s185 + $0x80] sm:$0xff]
        %v270 = vld [vmem:[%s185 + $0x88] sm:$0xff]
        %v271 = vld [vmem:[%s185 + $0x90] sm:$0xff]
        %v272 = vld [vmem:[%s185 + $0x98] sm:$0xff]
        %v273 = vld [vmem:[%s185 + $0xa0] sm:$0xff]
        %v274 = vld [vmem:[%s185 + $0xa8] sm:$0xff]
        %v275 = vld [vmem:[%s185 + $0xb0] sm:$0xff]
        %v276 = vld [vmem:[%s185 + $0xb8] sm:$0xff]
        %v277 = vld [vmem:[%s185 + $0xc0] sm:$0xff]
        %v278 = vld [vmem:[%s185 + $0xc8] sm:$0xff]
        %v279 = vld [vmem:[%s185 + $0xd0] sm:$0xff]
        %v280 = vld [vmem:[%s185 + $0xd8] sm:$0xff]
        %v281 = vld [vmem:[%s185 + $0xe0] sm:$0xff]
        %v282 = vld [vmem:[%s185 + $0xe8] sm:$0xff]
        %v283 = vld [vmem:[%s185 + $0xf0] sm:$0xff]
        %v284 = vld [vmem:[%s185 + $0xf8] sm:$0xff]
        %v285 = vld [vmem:[%s185 + $0x100] sm:$0xff]
        %v286 = vld [vmem:[%s185 + $0x108] sm:$0xff]
        %v287 = vld [vmem:[%s185 + $0x110] sm:$0xff]
        %v288 = vld [vmem:[%s185 + $0x118] sm:$0xff]
        %vm289 = vcmp.ge.f32.partialorder %v253, 0.0
        %vm290 = vcmp.ge.f32.partialorder %v254, 0.0
        %vm291 = vcmp.ge.f32.partialorder %v255, 0.0
        %vm292 = vcmp.ge.f32.partialorder %v256, 0.0
        %vm293 = vcmp.ge.f32.partialorder %v257, 0.0
        %vm294 = vcmp.ge.f32.partialorder %v258, 0.0
        %vm295 = vcmp.ge.f32.partialorder %v259, 0.0
        %vm296 = vcmp.ge.f32.partialorder %v260, 0.0
        %vm297 = vcmp.ge.f32.partialorder %v261, 0.0
        %vm298 = vcmp.ge.f32.partialorder %v262, 0.0
        %vm299 = vcmp.ge.f32.partialorder %v263, 0.0
        %vm300 = vcmp.ge.f32.partialorder %v264, 0.0
        %vm301 = vcmp.ge.f32.partialorder %v265, 0.0
        %vm302 = vcmp.ge.f32.partialorder %v266, 0.0
        %vm303 = vcmp.ge.f32.partialorder %v267, 0.0
        %vm304 = vcmp.ge.f32.partialorder %v268, 0.0
        %vm305 = vcmp.ge.f32.partialorder %v269, 0.0
        %vm306 = vcmp.ge.f32.partialorder %v270, 0.0
        %vm307 = vcmp.ge.f32.partialorder %v271, 0.0
        %vm308 = vcmp.ge.f32.partialorder %v272, 0.0
        %vm309 = vcmp.ge.f32.partialorder %v273, 0.0
        %vm310 = vcmp.ge.f32.partialorder %v274, 0.0
        %vm311 = vcmp.ge.f32.partialorder %v275, 0.0
        %vm312 = vcmp.ge.f32.partialorder %v276, 0.0
        %vm313 = vcmp.ge.f32.partialorder %v277, 0.0
        %vm314 = vcmp.ge.f32.partialorder %v278, 0.0
        %vm315 = vcmp.ge.f32.partialorder %v279, 0.0
        %vm316 = vcmp.ge.f32.partialorder %v280, 0.0
        %vm317 = vcmp.ge.f32.partialorder %v281, 0.0
        %vm318 = vcmp.ge.f32.partialorder %v282, 0.0
        %vm319 = vcmp.ge.f32.partialorder %v283, 0.0
        %vm320 = vcmp.ge.f32.partialorder %v284, 0.0
        %vm321 = vcmp.ge.f32.partialorder %v285, 0.0
        %vm322 = vcmp.ge.f32.partialorder %v286, 0.0
        %vm323 = vcmp.ge.f32.partialorder %v287, 0.0
        %vm324 = vcmp.ge.f32.partialorder %v288, 0.0
        %v325 = vsel %vm289, 1, 0
        %v326 = vsel %vm290, 1, 0
        %v327 = vsel %vm291, 1, 0
        %v328 = vsel %vm292, 1, 0
        %v329 = vsel %vm293, 1, 0
        %v330 = vsel %vm294, 1, 0
        %v331 = vsel %vm295, 1, 0
        %v332 = vsel %vm296, 1, 0
        %v333 = vsel %vm297, 1, 0
        %v334 = vsel %vm298, 1, 0
        %v335 = vsel %vm299, 1, 0
        %v336 = vsel %vm300, 1, 0
        %v337 = vsel %vm301, 1, 0
        %v338 = vsel %vm302, 1, 0
        %v339 = vsel %vm303, 1, 0
        %v340 = vsel %vm304, 1, 0
        %v341 = vsel %vm305, 1, 0
        %v342 = vsel %vm306, 1, 0
        %v343 = vsel %vm307, 1, 0
        %v344 = vsel %vm308, 1, 0
        %v345 = vsel %vm309, 1, 0
        %v346 = vsel %vm310, 1, 0
        %v347 = vsel %vm311, 1, 0
        %v348 = vsel %vm312, 1, 0
        %v349 = vsel %vm313, 1, 0
        %v350 = vsel %vm314, 1, 0
        %v351 = vsel %vm315, 1, 0
        %v352 = vsel %vm316, 1, 0
        %v353 = vsel %vm317, 1, 0
        %v354 = vsel %vm318, 1, 0
        %v355 = vsel %vm319, 1, 0
        %v356 = vsel %vm320, 1, 0
        %v357 = vsel %vm321, 1, 0
        %v358 = vsel %vm322, 1, 0
        %v359 = vsel %vm323, 1, 0
        %v360 = vsel %vm324, 1, 0
        %v361 = vcvt.s32.f32 %v325
        %v362 = vcvt.s32.f32 %v326
        %v363 = vcvt.s32.f32 %v327
        %v364 = vcvt.s32.f32 %v328
        %v365 = vcvt.s32.f32 %v329
        %v366 = vcvt.s32.f32 %v330
        %v367 = vcvt.s32.f32 %v331
        %v368 = vcvt.s32.f32 %v332
        %v369 = vcvt.s32.f32 %v333
        %v370 = vcvt.s32.f32 %v334
        %v371 = vcvt.s32.f32 %v335
        %v372 = vcvt.s32.f32 %v336
        %v373 = vcvt.s32.f32 %v337
        %v374 = vcvt.s32.f32 %v338
        %v375 = vcvt.s32.f32 %v339
        %v376 = vcvt.s32.f32 %v340
        %v377 = vcvt.s32.f32 %v341
        %v378 = vcvt.s32.f32 %v342
        %v379 = vcvt.s32.f32 %v343
        %v380 = vcvt.s32.f32 %v344
        %v381 = vcvt.s32.f32 %v345
        %v382 = vcvt.s32.f32 %v346
        %v383 = vcvt.s32.f32 %v347
        %v384 = vcvt.s32.f32 %v348
        %v385 = vcvt.s32.f32 %v349
        %v386 = vcvt.s32.f32 %v350
        %v387 = vcvt.s32.f32 %v351
        %v388 = vcvt.s32.f32 %v352
        %v389 = vcvt.s32.f32 %v353
        %v390 = vcvt.s32.f32 %v354
        %v391 = vcvt.s32.f32 %v355
        %v392 = vcvt.s32.f32 %v356
        %v393 = vcvt.s32.f32 %v357
        %v394 = vcvt.s32.f32 %v358
        %v395 = vcvt.s32.f32 %v359
        %v396 = vcvt.s32.f32 %v360
        %v397 = vpack.c.bf16 %v362, %v361
        %v398 = vpack.c.bf16 %v364, %v363
        %v399 = vpack.c.bf16 %v366, %v365
        %v400 = vpack.c.bf16 %v368, %v367
        %v401 = vpack.c.bf16 %v370, %v369
        %v402 = vpack.c.bf16 %v372, %v371
        %v403 = vpack.c.bf16 %v374, %v373
        %v404 = vpack.c.bf16 %v376, %v375
        %v405 = vpack.c.bf16 %v378, %v377
        %v406 = vpack.c.bf16 %v380, %v379
        %v407 = vpack.c.bf16 %v382, %v381
        %v408 = vpack.c.bf16 %v384, %v383
        %v409 = vpack.c.bf16 %v386, %v385
        %v410 = vpack.c.bf16 %v388, %v387
        %v411 = vpack.c.bf16 %v390, %v389
        %v412 = vpack.c.bf16 %v392, %v391
        %v413 = vpack.c.bf16 %v394, %v393
        %v414 = vpack.c.bf16 %v396, %v395
        %v415 = vld [vmem:[#allocation2] sm:$0xff]
        %v416 = vld [vmem:[#allocation2 + $0x8] sm:$0xff]
        %v417 = vld [vmem:[#allocation2 + $0x10] sm:$0xff]
        %v418 = vld [vmem:[#allocation2 + $0x18] sm:$0xff]
        %v419 = vld [vmem:[#allocation2 + $0x20] sm:$0xff]
        %v420 = vld [vmem:[#allocation2 + $0x28] sm:$0xff]
        %v421 = vld [vmem:[#allocation2 + $0x30] sm:$0xff]
        %v422 = vld [vmem:[#allocation2 + $0x38] sm:$0xff]
        %v423 = vld [vmem:[#allocation2 + $0x40] sm:$0xff]
        %v424 = vld [vmem:[#allocation2 + $0x48] sm:$0xff]
        %v425 = vld [vmem:[#allocation2 + $0x50] sm:$0xff]
        %v426 = vld [vmem:[#allocation2 + $0x58] sm:$0xff]
        %v427 = vld [vmem:[#allocation2 + $0x60] sm:$0xff]
        %v428 = vld [vmem:[#allocation2 + $0x68] sm:$0xff]
        %v429 = vld [vmem:[#allocation2 + $0x70] sm:$0xff]
        %v430 = vld [vmem:[#allocation2 + $0x78] sm:$0xff]
        %v431 = vld [vmem:[#allocation2 + $0x80] sm:$0xff]
        %v432 = vld [vmem:[#allocation2 + $0x88] sm:$0xff]
        %v433 = vld [vmem:[#allocation2 + $0x90] sm:$0xff]
        %v434 = vld [vmem:[#allocation2 + $0x98] sm:$0xff]
        %v435 = vld [vmem:[#allocation2 + $0xa0] sm:$0xff]
        %v436 = vld [vmem:[#allocation2 + $0xa8] sm:$0xff]
        %v437 = vld [vmem:[#allocation2 + $0xb0] sm:$0xff]
        %v438 = vld [vmem:[#allocation2 + $0xb8] sm:$0xff]
        %v439 = vld [vmem:[#allocation2 + $0xc0] sm:$0xff]
        %v440 = vld [vmem:[#allocation2 + $0xc8] sm:$0xff]
        %v441 = vld [vmem:[#allocation2 + $0xd0] sm:$0xff]
        %v442 = vld [vmem:[#allocation2 + $0xd8] sm:$0xff]
        %v443 = vld [vmem:[#allocation2 + $0xe0] sm:$0xff]
        %v444 = vld [vmem:[#allocation2 + $0xe8] sm:$0xff]
        %v445 = vld [vmem:[#allocation2 + $0xf0] sm:$0xff]
        %v446 = vld [vmem:[#allocation2 + $0xf8] sm:$0xff]
        %v447 = vld [vmem:[#allocation2 + $0x100] sm:$0xff]
        %v448 = vld [vmem:[#allocation2 + $0x108] sm:$0xff]
        %v449 = vld [vmem:[#allocation2 + $0x110] sm:$0xff]
        %v450 = vld [vmem:[#allocation2 + $0x118] sm:$0xff]
        %v451 = vld [vmem:[#allocation6] sm:$0x3]
        %vm452 = vcmask 31744
        %v454 = vsel %vm452, %v397, 0
        %v457 = vsel %vm452, %v398, 0
        %v460 = vsel %vm452, %v399, 0
        %v463 = vsel %vm452, %v400, 0
        %v466 = vsel %vm452, %v401, 0
        %v469 = vsel %vm452, %v402, 0
        %v472 = vsel %vm452, %v403, 0
        %v475 = vsel %vm452, %v404, 0
        %v478 = vsel %vm452, %v405, 0
        %v481 = vsel %vm452, %v406, 0
        %v484 = vsel %vm452, %v407, 0
        %v487 = vsel %vm452, %v408, 0
        %v490 = vsel %vm452, %v409, 0
        %v493 = vsel %vm452, %v410, 0
        %v496 = vsel %vm452, %v411, 0
        %v499 = vsel %vm452, %v412, 0
        %v502 = vsel %vm452, %v413, 0
        %v505 = vsel %vm452, %v414, 0
        %vm507 = vcmask 1041408
        %v509 = vsel %vm507, %v451, 0
        %511 = vmatprep.subr.bf16.mxu0 0
        %512 = vmatpush1.bf16.msra.mxu0 %v509
        %513 = vmatprep.subr.bf16.mxu0 0
        %514 = vmatpush1.bf16.msra.mxu0 0
        %515 = vmatprep.subr.bf16.mxu0 0
        %516 = vmatpush1.bf16.msra.mxu0 0
        %517 = vmatprep.subr.bf16.mxu0 0
        %518 = vmatpush1.bf16.msra.mxu0 0
        %519 = vmatprep.subr.bf16.mxu0 0
        %520 = vmatpush1.bf16.msra.mxu0 0
        %521 = vmatprep.subr.bf16.mxu0 0
        %522 = vmatpush1.bf16.msra.mxu0 0
        %523 = vmatprep.subr.bf16.mxu0 0
        %524 = vmatpush1.bf16.msra.mxu0 0
        %525 = vmatprep.subr.bf16.mxu0 0
        %526 = vmatpush1.bf16.msra.mxu0 0
        %527 = vmatprep.subr.bf16.mxu0 0
        %528 = vmatpush1.bf16.msra.mxu0 0
        %529 = vmatprep.subr.bf16.mxu0 0
        %530 = vmatpush1.bf16.msra.mxu0 0
        %531 = vmatprep.subr.bf16.mxu0 0
        %532 = vmatpush1.bf16.msra.mxu0 0
        %533 = vmatprep.subr.bf16.mxu0 0
        %534 = vmatpush1.bf16.msra.mxu0 0
        %535 = vmatprep.subr.bf16.mxu0 0
        %536 = vmatpush1.bf16.msra.mxu0 0
        %537 = vmatprep.subr.bf16.mxu0 0
        %538 = vmatpush1.bf16.msra.mxu0 0
        %539 = vmatprep.subr.bf16.mxu0 0
        %540 = vmatpush1.bf16.msra.mxu0 0
        %541 = vmatprep.subr.bf16.mxu0 0
        %542 = vmatpush1.bf16.msra.mxu0 0
        %543 = vmatprep.mubr.bf16.mxu0 0
        %544 = vmatmul.mubr.bf16.gmra.mrb[0].mxu0 %v454
        %v545 = vpop.f32.mrb[0].mxu0
        %v546 = vadd.f32 0.0, %v545
        %v547 = vpop.f32.mrb[0].mxu0
        %v548 = vpop.f32.mrb[0].mxu0
        %v549 = vadd.f32 0.0, %v548
        %v550 = vpop.f32.mrb[0].mxu0
        %551 = vmatprep.mubr.bf16.mxu0 0
        %552 = vmatmul.mubr.bf16.gmra.mrb[0].mxu0 %v457
        %v553 = vpop.f32.mrb[0].mxu0
        %v554 = vadd.f32 0.0, %v553
        %v555 = vpop.f32.mrb[0].mxu0
        %v556 = vpop.f32.mrb[0].mxu0
        %v557 = vadd.f32 0.0, %v556
        %v558 = vpop.f32.mrb[0].mxu0
        %559 = vmatprep.mubr.bf16.mxu0 0
        %560 = vmatmul.mubr.bf16.gmra.mrb[0].mxu0 %v460
        %v561 = vpop.f32.mrb[0].mxu0
        %v562 = vadd.f32 0.0, %v561
        %v563 = vpop.f32.mrb[0].mxu0
        %v564 = vpop.f32.mrb[0].mxu0
        %v565 = vadd.f32 0.0, %v564
        %v566 = vpop.f32.mrb[0].mxu0
        %567 = vmatprep.mubr.bf16.mxu0 0
        %568 = vmatmul.mubr.bf16.gmra.mrb[0].mxu0 %v463
        %v569 = vpop.f32.mrb[0].mxu0
        %v570 = vadd.f32 0.0, %v569
        %v571 = vpop.f32.mrb[0].mxu0
        %v572 = vpop.f32.mrb[0].mxu0
        %v573 = vadd.f32 0.0, %v572
        %v574 = vpop.f32.mrb[0].mxu0
        %575 = vmatprep.mubr.bf16.mxu0 0
        %576 = vmatmul.mubr.bf16.gmra.mrb[0].mxu0 %v466
        %v577 = vpop.f32.mrb[0].mxu0
        %v578 = vadd.f32 0.0, %v577
        %v579 = vpop.f32.mrb[0].mxu0
        %v580 = vpop.f32.mrb[0].mxu0
        %v581 = vadd.f32 0.0, %v580
        %v582 = vpop.f32.mrb[0].mxu0
        %583 = vmatprep.mubr.bf16.mxu0 0
        %584 = vmatmul.mubr.bf16.gmra.mrb[0].mxu0 %v469
        %v585 = vpop.f32.mrb[0].mxu0
        %v586 = vadd.f32 0.0, %v585
        %v587 = vpop.f32.mrb[0].mxu0
        %v588 = vpop.f32.mrb[0].mxu0
        %v589 = vadd.f32 0.0, %v588
        %v590 = vpop.f32.mrb[0].mxu0
        %591 = vmatprep.mubr.bf16.mxu0 0
        %592 = vmatmul.mubr.bf16.gmra.mrb[0].mxu0 %v472
        %v593 = vpop.f32.mrb[0].mxu0
        %v594 = vadd.f32 0.0, %v593
        %v595 = vpop.f32.mrb[0].mxu0
        %v596 = vpop.f32.mrb[0].mxu0
        %v597 = vadd.f32 0.0, %v596
        %v598 = vpop.f32.mrb[0].mxu0
        %599 = vmatprep.mubr.bf16.mxu0 0
        %600 = vmatmul.mubr.bf16.gmra.mrb[0].mxu0 %v475
        %v601 = vpop.f32.mrb[0].mxu0
        %v602 = vadd.f32 0.0, %v601
        %v603 = vpop.f32.mrb[0].mxu0
        %v604 = vpop.f32.mrb[0].mxu0
        %v605 = vadd.f32 0.0, %v604
        %v606 = vpop.f32.mrb[0].mxu0
        %607 = vmatprep.mubr.bf16.mxu0 0
        %608 = vmatmul.mubr.bf16.gmra.mrb[0].mxu0 %v478
        %v609 = vpop.f32.mrb[0].mxu0
        %v610 = vadd.f32 0.0, %v609
        %v611 = vpop.f32.mrb[0].mxu0
        %v612 = vpop.f32.mrb[0].mxu0
        %v613 = vadd.f32 0.0, %v612
        %v614 = vpop.f32.mrb[0].mxu0
        %615 = vmatprep.mubr.bf16.mxu0 0
        %616 = vmatmul.mubr.bf16.gmra.mrb[0].mxu0 %v481
        %v617 = vpop.f32.mrb[0].mxu0
        %v618 = vadd.f32 0.0, %v617
        %v619 = vpop.f32.mrb[0].mxu0
        %v620 = vpop.f32.mrb[0].mxu0
        %v621 = vadd.f32 0.0, %v620
        %v622 = vpop.f32.mrb[0].mxu0
        %623 = vmatprep.mubr.bf16.mxu0 0
        %624 = vmatmul.mubr.bf16.gmra.mrb[0].mxu0 %v484
        %v625 = vpop.f32.mrb[0].mxu0
        %v626 = vadd.f32 0.0, %v625
        %v627 = vpop.f32.mrb[0].mxu0
        %v628 = vpop.f32.mrb[0].mxu0
        %v629 = vadd.f32 0.0, %v628
        %v630 = vpop.f32.mrb[0].mxu0
        %631 = vmatprep.mubr.bf16.mxu0 0
        %632 = vmatmul.mubr.bf16.gmra.mrb[0].mxu0 %v487
        %v633 = vpop.f32.mrb[0].mxu0
        %v634 = vadd.f32 0.0, %v633
        %v635 = vpop.f32.mrb[0].mxu0
        %v636 = vpop.f32.mrb[0].mxu0
        %v637 = vadd.f32 0.0, %v636
        %v638 = vpop.f32.mrb[0].mxu0
        %639 = vmatprep.mubr.bf16.mxu0 0
        %640 = vmatmul.mubr.bf16.gmra.mrb[0].mxu0 %v490
        %v641 = vpop.f32.mrb[0].mxu0
        %v642 = vadd.f32 0.0, %v641
        %v643 = vpop.f32.mrb[0].mxu0
        %v644 = vpop.f32.mrb[0].mxu0
        %v645 = vadd.f32 0.0, %v644
        %v646 = vpop.f32.mrb[0].mxu0
        %647 = vmatprep.mubr.bf16.mxu0 0
        %648 = vmatmul.mubr.bf16.gmra.mrb[0].mxu0 %v493
        %v649 = vpop.f32.mrb[0].mxu0
        %v650 = vadd.f32 0.0, %v649
        %v651 = vpop.f32.mrb[0].mxu0
        %v652 = vpop.f32.mrb[0].mxu0
        %v653 = vadd.f32 0.0, %v652
        %v654 = vpop.f32.mrb[0].mxu0
        %655 = vmatprep.mubr.bf16.mxu0 0
        %656 = vmatmul.mubr.bf16.gmra.mrb[0].mxu0 %v496
        %v657 = vpop.f32.mrb[0].mxu0
        %v658 = vadd.f32 0.0, %v657
        %v659 = vpop.f32.mrb[0].mxu0
        %v660 = vpop.f32.mrb[0].mxu0
        %v661 = vadd.f32 0.0, %v660
        %v662 = vpop.f32.mrb[0].mxu0
        %663 = vmatprep.mubr.bf16.mxu0 0
        %664 = vmatmul.mubr.bf16.gmra.mrb[0].mxu0 %v499
        %v665 = vpop.f32.mrb[0].mxu0
        %v666 = vadd.f32 0.0, %v665
        %v667 = vpop.f32.mrb[0].mxu0
        %v668 = vpop.f32.mrb[0].mxu0
        %v669 = vadd.f32 0.0, %v668
        %v670 = vpop.f32.mrb[0].mxu0
        %671 = vmatprep.mubr.bf16.mxu0 0
        %672 = vmatmul.mubr.bf16.gmra.mrb[0].mxu0 %v502
        %v673 = vpop.f32.mrb[0].mxu0
        %v674 = vadd.f32 0.0, %v673
        %v675 = vpop.f32.mrb[0].mxu0
        %v676 = vpop.f32.mrb[0].mxu0
        %v677 = vadd.f32 0.0, %v676
        %v678 = vpop.f32.mrb[0].mxu0
        %679 = vmatprep.mubr.bf16.mxu0 0
        %680 = vmatmul.mubr.bf16.gmra.mrb[0].mxu0 %v505
        %v681 = vpop.f32.mrb[0].mxu0
        %v682 = vadd.f32 0.0, %v681
        %v683 = vpop.f32.mrb[0].mxu0
        %v684 = vpop.f32.mrb[0].mxu0
        %v685 = vadd.f32 0.0, %v684
        %v686 = vpop.f32.mrb[0].mxu0
        %687 = vdwg.mxu0
        %v688 = vadd.f32 %v415, %v546
        %v689 = vadd.f32 %v416, %v549
        %v690 = vadd.f32 %v417, %v554
        %v691 = vadd.f32 %v418, %v557
        %v692 = vadd.f32 %v419, %v562
        %v693 = vadd.f32 %v420, %v565
        %v694 = vadd.f32 %v421, %v570
        %v695 = vadd.f32 %v422, %v573
        %v696 = vadd.f32 %v423, %v578
        %v697 = vadd.f32 %v424, %v581
        %v698 = vadd.f32 %v425, %v586
        %v699 = vadd.f32 %v426, %v589
        %v700 = vadd.f32 %v427, %v594
        %v701 = vadd.f32 %v428, %v597
        %v702 = vadd.f32 %v429, %v602
        %v703 = vadd.f32 %v430, %v605
        %v704 = vadd.f32 %v431, %v610
        %v705 = vadd.f32 %v432, %v613
        %v706 = vadd.f32 %v433, %v618
        %v707 = vadd.f32 %v434, %v621
        %v708 = vadd.f32 %v435, %v626
        %v709 = vadd.f32 %v436, %v629
        %v710 = vadd.f32 %v437, %v634
        %v711 = vadd.f32 %v438, %v637
        %v712 = vadd.f32 %v439, %v642
        %v713 = vadd.f32 %v440, %v645
        %v714 = vadd.f32 %v441, %v650
        %v715 = vadd.f32 %v442, %v653
        %v716 = vadd.f32 %v443, %v658
        %v717 = vadd.f32 %v444, %v661
        %v718 = vadd.f32 %v445, %v666
        %v719 = vadd.f32 %v446, %v669
        %v720 = vadd.f32 %v447, %v674
        %v721 = vadd.f32 %v448, %v677
        %v722 = vadd.f32 %v449, %v682
        %v723 = vadd.f32 %v450, %v685
        %724 = vst [vmem:[#allocation2] sm:$0xff] %v688
        %725 = vst [vmem:[#allocation2 + $0x8] sm:$0xff] %v689
        %726 = vst [vmem:[#allocation2 + $0x10] sm:$0xff] %v690
        %727 = vst [vmem:[#allocation2 + $0x18] sm:$0xff] %v691
        %728 = vst [vmem:[#allocation2 + $0x20] sm:$0xff] %v692
        %729 = vst [vmem:[#allocation2 + $0x28] sm:$0xff] %v693
        %730 = vst [vmem:[#allocation2 + $0x30] sm:$0xff] %v694
        %731 = vst [vmem:[#allocation2 + $0x38] sm:$0xff] %v695
        %732 = vst [vmem:[#allocation2 + $0x40] sm:$0xff] %v696
        %733 = vst [vmem:[#allocation2 + $0x48] sm:$0xff] %v697
        %734 = vst [vmem:[#allocation2 + $0x50] sm:$0xff] %v698
        %735 = vst [vmem:[#allocation2 + $0x58] sm:$0xff] %v699
        %736 = vst [vmem:[#allocation2 + $0x60] sm:$0xff] %v700
        %737 = vst [vmem:[#allocation2 + $0x68] sm:$0xff] %v701
        %738 = vst [vmem:[#allocation2 + $0x70] sm:$0xff] %v702
        %739 = vst [vmem:[#allocation2 + $0x78] sm:$0xff] %v703
        %740 = vst [vmem:[#allocation2 + $0x80] sm:$0xff] %v704
        %741 = vst [vmem:[#allocation2 + $0x88] sm:$0xff] %v705
        %742 = vst [vmem:[#allocation2 + $0x90] sm:$0xff] %v706
        %743 = vst [vmem:[#allocation2 + $0x98] sm:$0xff] %v707
        %744 = vst [vmem:[#allocation2 + $0xa0] sm:$0xff] %v708
        %745 = vst [vmem:[#allocation2 + $0xa8] sm:$0xff] %v709
        %746 = vst [vmem:[#allocation2 + $0xb0] sm:$0xff] %v710
        %747 = vst [vmem:[#allocation2 + $0xb8] sm:$0xff] %v711
        %748 = vst [vmem:[#allocation2 + $0xc0] sm:$0xff] %v712
        %749 = vst [vmem:[#allocation2 + $0xc8] sm:$0xff] %v713
        %750 = vst [vmem:[#allocation2 + $0xd0] sm:$0xff] %v714
        %751 = vst [vmem:[#allocation2 + $0xd8] sm:$0xff] %v715
        %752 = vst [vmem:[#allocation2 + $0xe0] sm:$0xff] %v716
        %753 = vst [vmem:[#allocation2 + $0xe8] sm:$0xff] %v717
        %754 = vst [vmem:[#allocation2 + $0xf0] sm:$0xff] %v718
        %755 = vst [vmem:[#allocation2 + $0xf8] sm:$0xff] %v719
        %756 = vst [vmem:[#allocation2 + $0x100] sm:$0xff] %v720
        %757 = vst [vmem:[#allocation2 + $0x108] sm:$0xff] %v721
        %758 = vst [vmem:[#allocation2 + $0x110] sm:$0xff] %v722
        %759 = vst [vmem:[#allocation2 + $0x118] sm:$0xff] %v723
        %v760 = vld [vmem:[%s185 + $0x1] sm:$0xff]
        %v761 = vld [vmem:[%s185 + $0x9] sm:$0xff]
        %v762 = vld [vmem:[%s185 + $0x11] sm:$0xff]
        %v763 = vld [vmem:[%s185 + $0x19] sm:$0xff]
        %v764 = vld [vmem:[%s185 + $0x21] sm:$0xff]
        %v765 = vld [vmem:[%s185 + $0x29] sm:$0xff]
        %v766 = vld [vmem:[%s185 + $0x31] sm:$0xff]
        %v767 = vld [vmem:[%s185 + $0x39] sm:$0xff]
        %v768 = vld [vmem:[%s185 + $0x41] sm:$0xff]
        %v769 = vld [vmem:[%s185 + $0x49] sm:$0xff]
        %v770 = vld [vmem:[%s185 + $0x51] sm:$0xff]
        %v771 = vld [vmem:[%s185 + $0x59] sm:$0xff]
        %v772 = vld [vmem:[%s185 + $0x61] sm:$0xff]
        %v773 = vld [vmem:[%s185 + $0x69] sm:$0xff]
        %v774 = vld [vmem:[%s185 + $0x71] sm:$0xff]
        %v775 = vld [vmem:[%s185 + $0x79] sm:$0xff]
        %v776 = vld [vmem:[%s185 + $0x81] sm:$0xff]
        %v777 = vld [vmem:[%s185 + $0x89] sm:$0xff]
        %v778 = vld [vmem:[%s185 + $0x91] sm:$0xff]
        %v779 = vld [vmem:[%s185 + $0x99] sm:$0xff]
        %v780 = vld [vmem:[%s185 + $0xa1] sm:$0xff]
        %v781 = vld [vmem:[%s185 + $0xa9] sm:$0xff]
        %v782 = vld [vmem:[%s185 + $0xb1] sm:$0xff]
        %v783 = vld [vmem:[%s185 + $0xb9] sm:$0xff]
        %v784 = vld [vmem:[%s185 + $0xc1] sm:$0xff]
        %v785 = vld [vmem:[%s185 + $0xc9] sm:$0xff]
        %v786 = vld [vmem:[%s185 + $0xd1] sm:$0xff]
        %v787 = vld [vmem:[%s185 + $0xd9] sm:$0xff]
        %v788 = vld [vmem:[%s185 + $0xe1] sm:$0xff]
        %v789 = vld [vmem:[%s185 + $0xe9] sm:$0xff]
        %v790 = vld [vmem:[%s185 + $0xf1] sm:$0xff]
        %v791 = vld [vmem:[%s185 + $0xf9] sm:$0xff]
        %v792 = vld [vmem:[%s185 + $0x101] sm:$0xff]
        %v793 = vld [vmem:[%s185 + $0x109] sm:$0xff]
        %v794 = vld [vmem:[%s185 + $0x111] sm:$0xff]
        %v795 = vld [vmem:[%s185 + $0x119] sm:$0xff]
        %vm796 = vcmp.ge.f32.partialorder %v760, 0.0
        %vm797 = vcmp.ge.f32.partialorder %v761, 0.0
        %vm798 = vcmp.ge.f32.partialorder %v762, 0.0
        %vm799 = vcmp.ge.f32.partialorder %v763, 0.0
        %vm800 = vcmp.ge.f32.partialorder %v764, 0.0
        %vm801 = vcmp.ge.f32.partialorder %v765, 0.0
        %vm802 = vcmp.ge.f32.partialorder %v766, 0.0
        %vm803 = vcmp.ge.f32.partialorder %v767, 0.0
        %vm804 = vcmp.ge.f32.partialorder %v768, 0.0
        %vm805 = vcmp.ge.f32.partialorder %v769, 0.0
        %vm806 = vcmp.ge.f32.partialorder %v770, 0.0
        %vm807 = vcmp.ge.f32.partialorder %v771, 0.0
        %vm808 = vcmp.ge.f32.partialorder %v772, 0.0
        %vm809 = vcmp.ge.f32.partialorder %v773, 0.0
        %vm810 = vcmp.ge.f32.partialorder %v774, 0.0
        %vm811 = vcmp.ge.f32.partialorder %v775, 0.0
        %vm812 = vcmp.ge.f32.partialorder %v776, 0.0
        %vm813 = vcmp.ge.f32.partialorder %v777, 0.0
        %vm814 = vcmp.ge.f32.partialorder %v778, 0.0
        %vm815 = vcmp.ge.f32.partialorder %v779, 0.0
        %vm816 = vcmp.ge.f32.partialorder %v780, 0.0
        %vm817 = vcmp.ge.f32.partialorder %v781, 0.0
        %vm818 = vcmp.ge.f32.partialorder %v782, 0.0
        %vm819 = vcmp.ge.f32.partialorder %v783, 0.0
        %vm820 = vcmp.ge.f32.partialorder %v784, 0.0
        %vm821 = vcmp.ge.f32.partialorder %v785, 0.0
        %vm822 = vcmp.ge.f32.partialorder %v786, 0.0
        %vm823 = vcmp.ge.f32.partialorder %v787, 0.0
        %vm824 = vcmp.ge.f32.partialorder %v788, 0.0
        %vm825 = vcmp.ge.f32.partialorder %v789, 0.0
        %vm826 = vcmp.ge.f32.partialorder %v790, 0.0
        %vm827 = vcmp.ge.f32.partialorder %v791, 0.0
        %vm828 = vcmp.ge.f32.partialorder %v792, 0.0
        %vm829 = vcmp.ge.f32.partialorder %v793, 0.0
        %vm830 = vcmp.ge.f32.partialorder %v794, 0.0
        %vm831 = vcmp.ge.f32.partialorder %v795, 0.0
        %v832 = vsel %vm796, 1, 0
        %v833 = vsel %vm797, 1, 0
        %v834 = vsel %vm798, 1, 0
        %v835 = vsel %vm799, 1, 0
        %v836 = vsel %vm800, 1, 0
        %v837 = vsel %vm801, 1, 0
        %v838 = vsel %vm802, 1, 0
        %v839 = vsel %vm803, 1, 0
        %v840 = vsel %vm804, 1, 0
        %v841 = vsel %vm805, 1, 0
        %v842 = vsel %vm806, 1, 0
        %v843 = vsel %vm807, 1, 0
        %v844 = vsel %vm808, 1, 0
        %v845 = vsel %vm809, 1, 0
        %v846 = vsel %vm810, 1, 0
        %v847 = vsel %vm811, 1, 0
        %v848 = vsel %vm812, 1, 0
        %v849 = vsel %vm813, 1, 0
        %v850 = vsel %vm814, 1, 0
        %v851 = vsel %vm815, 1, 0
        %v852 = vsel %vm816, 1, 0
        %v853 = vsel %vm817, 1, 0
        %v854 = vsel %vm818, 1, 0
        %v855 = vsel %vm819, 1, 0
        %v856 = vsel %vm820, 1, 0
        %v857 = vsel %vm821, 1, 0
        %v858 = vsel %vm822, 1, 0
        %v859 = vsel %vm823, 1, 0
        %v860 = vsel %vm824, 1, 0
        %v861 = vsel %vm825, 1, 0
        %v862 = vsel %vm826, 1, 0
        %v863 = vsel %vm827, 1, 0
        %v864 = vsel %vm828, 1, 0
        %v865 = vsel %vm829, 1, 0
        %v866 = vsel %vm830, 1, 0
        %v867 = vsel %vm831, 1, 0
        %v868 = vcvt.s32.f32 %v832
        %v869 = vcvt.s32.f32 %v833
        %v870 = vcvt.s32.f32 %v834
        %v871 = vcvt.s32.f32 %v835
        %v872 = vcvt.s32.f32 %v836
        %v873 = vcvt.s32.f32 %v837
        %v874 = vcvt.s32.f32 %v838
        %v875 = vcvt.s32.f32 %v839
        %v876 = vcvt.s32.f32 %v840
        %v877 = vcvt.s32.f32 %v841
        %v878 = vcvt.s32.f32 %v842
        %v879 = vcvt.s32.f32 %v843
        %v880 = vcvt.s32.f32 %v844
        %v881 = vcvt.s32.f32 %v845
        %v882 = vcvt.s32.f32 %v846
        %v883 = vcvt.s32.f32 %v847
        %v884 = vcvt.s32.f32 %v848
        %v885 = vcvt.s32.f32 %v849
        %v886 = vcvt.s32.f32 %v850
        %v887 = vcvt.s32.f32 %v851
        %v888 = vcvt.s32.f32 %v852
        %v889 = vcvt.s32.f32 %v853
        %v890 = vcvt.s32.f32 %v854
        %v891 = vcvt.s32.f32 %v855
        %v892 = vcvt.s32.f32 %v856
        %v893 = vcvt.s32.f32 %v857
        %v894 = vcvt.s32.f32 %v858
        %v895 = vcvt.s32.f32 %v859
        %v896 = vcvt.s32.f32 %v860
        %v897 = vcvt.s32.f32 %v861
        %v898 = vcvt.s32.f32 %v862
        %v899 = vcvt.s32.f32 %v863
        %v900 = vcvt.s32.f32 %v864
        %v901 = vcvt.s32.f32 %v865
        %v902 = vcvt.s32.f32 %v866
        %v903 = vcvt.s32.f32 %v867
        %v904 = vpack.c.bf16 %v869, %v868
        %v905 = vpack.c.bf16 %v871, %v870
        %v906 = vpack.c.bf16 %v873, %v872
        %v907 = vpack.c.bf16 %v875, %v874
        %v908 = vpack.c.bf16 %v877, %v876
        %v909 = vpack.c.bf16 %v879, %v878
        %v910 = vpack.c.bf16 %v881, %v880
        %v911 = vpack.c.bf16 %v883, %v882
        %v912 = vpack.c.bf16 %v885, %v884
        %v913 = vpack.c.bf16 %v887, %v886
        %v914 = vpack.c.bf16 %v889, %v888
        %v915 = vpack.c.bf16 %v891, %v890
        %v916 = vpack.c.bf16 %v893, %v892
        %v917 = vpack.c.bf16 %v895, %v894
        %v918 = vpack.c.bf16 %v897, %v896
        %v919 = vpack.c.bf16 %v899, %v898
        %v920 = vpack.c.bf16 %v901, %v900
        %v921 = vpack.c.bf16 %v903, %v902
        %v922 = vld [vmem:[#allocation2] sm:$0xff]
        %v923 = vld [vmem:[#allocation2 + $0x8] sm:$0xff]
        %v924 = vld [vmem:[#allocation2 + $0x10] sm:$0xff]
        %v925 = vld [vmem:[#allocation2 + $0x18] sm:$0xff]
        %v926 = vld [vmem:[#allocation2 + $0x20] sm:$0xff]
        %v927 = vld [vmem:[#allocation2 + $0x28] sm:$0xff]
        %v928 = vld [vmem:[#allocation2 + $0x30] sm:$0xff]
        %v929 = vld [vmem:[#allocation2 + $0x38] sm:$0xff]
        %v930 = vld [vmem:[#allocation2 + $0x40] sm:$0xff]
        %v931 = vld [vmem:[#allocation2 + $0x48] sm:$0xff]
        %v932 = vld [vmem:[#allocation2 + $0x50] sm:$0xff]
        %v933 = vld [vmem:[#allocation2 + $0x58] sm:$0xff]
        %v934 = vld [vmem:[#allocation2 + $0x60] sm:$0xff]
        %v935 = vld [vmem:[#allocation2 + $0x68] sm:$0xff]
        %v936 = vld [vmem:[#allocation2 + $0x70] sm:$0xff]
        %v937 = vld [vmem:[#allocation2 + $0x78] sm:$0xff]
        %v938 = vld [vmem:[#allocation2 + $0x80] sm:$0xff]
        %v939 = vld [vmem:[#allocation2 + $0x88] sm:$0xff]
        %v940 = vld [vmem:[#allocation2 + $0x90] sm:$0xff]
        %v941 = vld [vmem:[#allocation2 + $0x98] sm:$0xff]
        %v942 = vld [vmem:[#allocation2 + $0xa0] sm:$0xff]
        %v943 = vld [vmem:[#allocation2 + $0xa8] sm:$0xff]
        %v944 = vld [vmem:[#allocation2 + $0xb0] sm:$0xff]
        %v945 = vld [vmem:[#allocation2 + $0xb8] sm:$0xff]
        %v946 = vld [vmem:[#allocation2 + $0xc0] sm:$0xff]
        %v947 = vld [vmem:[#allocation2 + $0xc8] sm:$0xff]
        %v948 = vld [vmem:[#allocation2 + $0xd0] sm:$0xff]
        %v949 = vld [vmem:[#allocation2 + $0xd8] sm:$0xff]
        %v950 = vld [vmem:[#allocation2 + $0xe0] sm:$0xff]
        %v951 = vld [vmem:[#allocation2 + $0xe8] sm:$0xff]
        %v952 = vld [vmem:[#allocation2 + $0xf0] sm:$0xff]
        %v953 = vld [vmem:[#allocation2 + $0xf8] sm:$0xff]
        %v954 = vld [vmem:[#allocation2 + $0x100] sm:$0xff]
        %v955 = vld [vmem:[#allocation2 + $0x108] sm:$0xff]
        %v956 = vld [vmem:[#allocation2 + $0x110] sm:$0xff]
        %v957 = vld [vmem:[#allocation2 + $0x118] sm:$0xff]
        %s958 = scalar_lea.vmem [#allocation6], 2
        %v959 = vld [vmem:[%s958] sm:$0x3]
        %v961 = vsel %vm452, %v904, 0
        %v964 = vsel %vm452, %v905, 0
        %v967 = vsel %vm452, %v906, 0
        %v970 = vsel %vm452, %v907, 0
        %v973 = vsel %vm452, %v908, 0
        %v976 = vsel %vm452, %v909, 0
        %v979 = vsel %vm452, %v910, 0
        %v982 = vsel %vm452, %v911, 0
        %v985 = vsel %vm452, %v912, 0
        %v988 = vsel %vm452, %v913, 0
        %v991 = vsel %vm452, %v914, 0
        %v994 = vsel %vm452, %v915, 0
        %v997 = vsel %vm452, %v916, 0
        %v1000 = vsel %vm452, %v917, 0
        %v1003 = vsel %vm452, %v918, 0
        %v1006 = vsel %vm452, %v919, 0
        %v1009 = vsel %vm452, %v920, 0
        %v1012 = vsel %vm452, %v921, 0
        %v1015 = vsel %vm507, %v959, 0
        %1017 = vmatprep.subr.bf16.mxu0 0
        %1018 = vmatpush1.bf16.msra.mxu0 %v1015
        %1019 = vmatprep.subr.bf16.mxu0 0
        %1020 = vmatpush1.bf16.msra.mxu0 0
        %1021 = vmatprep.subr.bf16.mxu0 0
        %1022 = vmatpush1.bf16.msra.mxu0 0
        %1023 = vmatprep.subr.bf16.mxu0 0
        %1024 = vmatpush1.bf16.msra.mxu0 0
        %1025 = vmatprep.subr.bf16.mxu0 0
        %1026 = vmatpush1.bf16.msra.mxu0 0
        %1027 = vmatprep.subr.bf16.mxu0 0
        %1028 = vmatpush1.bf16.msra.mxu0 0
        %1029 = vmatprep.subr.bf16.mxu0 0
        %1030 = vmatpush1.bf16.msra.mxu0 0
        %1031 = vmatprep.subr.bf16.mxu0 0
        %1032 = vmatpush1.bf16.msra.mxu0 0
        %1033 = vmatprep.subr.bf16.mxu0 0
        %1034 = vmatpush1.bf16.msra.mxu0 0
        %1035 = vmatprep.subr.bf16.mxu0 0
        %1036 = vmatpush1.bf16.msra.mxu0 0
        %1037 = vmatprep.subr.bf16.mxu0 0
        %1038 = vmatpush1.bf16.msra.mxu0 0
        %1039 = vmatprep.subr.bf16.mxu0 0
        %1040 = vmatpush1.bf16.msra.mxu0 0
        %1041 = vmatprep.subr.bf16.mxu0 0
        %1042 = vmatpush1.bf16.msra.mxu0 0
        %1043 = vmatprep.subr.bf16.mxu0 0
        %1044 = vmatpush1.bf16.msra.mxu0 0
        %1045 = vmatprep.subr.bf16.mxu0 0
        %1046 = vmatpush1.bf16.msra.mxu0 0
        %1047 = vmatprep.subr.bf16.mxu0 0
        %1048 = vmatpush1.bf16.msra.mxu0 0
        %1049 = vmatprep.mubr.bf16.mxu0 0
        %1050 = vmatmul.mubr.bf16.gmra.mrb[0].mxu0 %v961
        %v1051 = vpop.f32.mrb[0].mxu0
        %v1052 = vadd.f32 0.0, %v1051
        %v1053 = vpop.f32.mrb[0].mxu0
        %v1054 = vpop.f32.mrb[0].mxu0
        %v1055 = vadd.f32 0.0, %v1054
        %v1056 = vpop.f32.mrb[0].mxu0
        %1057 = vmatprep.mubr.bf16.mxu0 0
        %1058 = vmatmul.mubr.bf16.gmra.mrb[0].mxu0 %v964
        %v1059 = vpop.f32.mrb[0].mxu0
        %v1060 = vadd.f32 0.0, %v1059
        %v1061 = vpop.f32.mrb[0].mxu0
        %v1062 = vpop.f32.mrb[0].mxu0
        %v1063 = vadd.f32 0.0, %v1062
        %v1064 = vpop.f32.mrb[0].mxu0
        %1065 = vmatprep.mubr.bf16.mxu0 0
        %1066 = vmatmul.mubr.bf16.gmra.mrb[0].mxu0 %v967
        %v1067 = vpop.f32.mrb[0].mxu0
        %v1068 = vadd.f32 0.0, %v1067
        %v1069 = vpop.f32.mrb[0].mxu0
        %v1070 = vpop.f32.mrb[0].mxu0
        %v1071 = vadd.f32 0.0, %v1070
        %v1072 = vpop.f32.mrb[0].mxu0
        %1073 = vmatprep.mubr.bf16.mxu0 0
        %1074 = vmatmul.mubr.bf16.gmra.mrb[0].mxu0 %v970
        %v1075 = vpop.f32.mrb[0].mxu0
        %v1076 = vadd.f32 0.0, %v1075
        %v1077 = vpop.f32.mrb[0].mxu0
        %v1078 = vpop.f32.mrb[0].mxu0
        %v1079 = vadd.f32 0.0, %v1078
        %v1080 = vpop.f32.mrb[0].mxu0
        %1081 = vmatprep.mubr.bf16.mxu0 0
        %1082 = vmatmul.mubr.bf16.gmra.mrb[0].mxu0 %v973
        %v1083 = vpop.f32.mrb[0].mxu0
        %v1084 = vadd.f32 0.0, %v1083
        %v1085 = vpop.f32.mrb[0].mxu0
        %v1086 = vpop.f32.mrb[0].mxu0
        %v1087 = vadd.f32 0.0, %v1086
        %v1088 = vpop.f32.mrb[0].mxu0
        %1089 = vmatprep.mubr.bf16.mxu0 0
        %1090 = vmatmul.mubr.bf16.gmra.mrb[0].mxu0 %v976
        %v1091 = vpop.f32.mrb[0].mxu0
        %v1092 = vadd.f32 0.0, %v1091
        %v1093 = vpop.f32.mrb[0].mxu0
        %v1094 = vpop.f32.mrb[0].mxu0
        %v1095 = vadd.f32 0.0, %v1094
        %v1096 = vpop.f32.mrb[0].mxu0
        %1097 = vmatprep.mubr.bf16.mxu0 0
        %1098 = vmatmul.mubr.bf16.gmra.mrb[0].mxu0 %v979
        %v1099 = vpop.f32.mrb[0].mxu0
        %v1100 = vadd.f32 0.0, %v1099
        %v1101 = vpop.f32.mrb[0].mxu0
        %v1102 = vpop.f32.mrb[0].mxu0
        %v1103 = vadd.f32 0.0, %v1102
        %v1104 = vpop.f32.mrb[0].mxu0
        %1105 = vmatprep.mubr.bf16.mxu0 0
        %1106 = vmatmul.mubr.bf16.gmra.mrb[0].mxu0 %v982
        %v1107 = vpop.f32.mrb[0].mxu0
        %v1108 = vadd.f32 0.0, %v1107
        %v1109 = vpop.f32.mrb[0].mxu0
        %v1110 = vpop.f32.mrb[0].mxu0
        %v1111 = vadd.f32 0.0, %v1110
        %v1112 = vpop.f32.mrb[0].mxu0
        %1113 = vmatprep.mubr.bf16.mxu0 0
        %1114 = vmatmul.mubr.bf16.gmra.mrb[0].mxu0 %v985
        %v1115 = vpop.f32.mrb[0].mxu0
        %v1116 = vadd.f32 0.0, %v1115
        %v1117 = vpop.f32.mrb[0].mxu0
        %v1118 = vpop.f32.mrb[0].mxu0
        %v1119 = vadd.f32 0.0, %v1118
        %v1120 = vpop.f32.mrb[0].mxu0
        %1121 = vmatprep.mubr.bf16.mxu0 0
        %1122 = vmatmul.mubr.bf16.gmra.mrb[0].mxu0 %v988
        %v1123 = vpop.f32.mrb[0].mxu0
        %v1124 = vadd.f32 0.0, %v1123
        %v1125 = vpop.f32.mrb[0].mxu0
        %v1126 = vpop.f32.mrb[0].mxu0
        %v1127 = vadd.f32 0.0, %v1126
        %v1128 = vpop.f32.mrb[0].mxu0
        %1129 = vmatprep.mubr.bf16.mxu0 0
        %1130 = vmatmul.mubr.bf16.gmra.mrb[0].mxu0 %v991
        %v1131 = vpop.f32.mrb[0].mxu0
        %v1132 = vadd.f32 0.0, %v1131
        %v1133 = vpop.f32.mrb[0].mxu0
        %v1134 = vpop.f32.mrb[0].mxu0
        %v1135 = vadd.f32 0.0, %v1134
        %v1136 = vpop.f32.mrb[0].mxu0
        %1137 = vmatprep.mubr.bf16.mxu0 0
        %1138 = vmatmul.mubr.bf16.gmra.mrb[0].mxu0 %v994
        %v1139 = vpop.f32.mrb[0].mxu0
        %v1140 = vadd.f32 0.0, %v1139
        %v1141 = vpop.f32.mrb[0].mxu0
        %v1142 = vpop.f32.mrb[0].mxu0
        %v1143 = vadd.f32 0.0, %v1142
        %v1144 = vpop.f32.mrb[0].mxu0
        %1145 = vmatprep.mubr.bf16.mxu0 0
        %1146 = vmatmul.mubr.bf16.gmra.mrb[0].mxu0 %v997
        %v1147 = vpop.f32.mrb[0].mxu0
        %v1148 = vadd.f32 0.0, %v1147
        %v1149 = vpop.f32.mrb[0].mxu0
        %v1150 = vpop.f32.mrb[0].mxu0
        %v1151 = vadd.f32 0.0, %v1150
        %v1152 = vpop.f32.mrb[0].mxu0
        %1153 = vmatprep.mubr.bf16.mxu0 0
        %1154 = vmatmul.mubr.bf16.gmra.mrb[0].mxu0 %v1000
        %v1155 = vpop.f32.mrb[0].mxu0
        %v1156 = vadd.f32 0.0, %v1155
        %v1157 = vpop.f32.mrb[0].mxu0
        %v1158 = vpop.f32.mrb[0].mxu0
        %v1159 = vadd.f32 0.0, %v1158
        %v1160 = vpop.f32.mrb[0].mxu0
        %1161 = vmatprep.mubr.bf16.mxu0 0
        %1162 = vmatmul.mubr.bf16.gmra.mrb[0].mxu0 %v1003
        %v1163 = vpop.f32.mrb[0].mxu0
        %v1164 = vadd.f32 0.0, %v1163
        %v1165 = vpop.f32.mrb[0].mxu0
        %v1166 = vpop.f32.mrb[0].mxu0
        %v1167 = vadd.f32 0.0, %v1166
        %v1168 = vpop.f32.mrb[0].mxu0
        %1169 = vmatprep.mubr.bf16.mxu0 0
        %1170 = vmatmul.mubr.bf16.gmra.mrb[0].mxu0 %v1006
        %v1171 = vpop.f32.mrb[0].mxu0
        %v1172 = vadd.f32 0.0, %v1171
        %v1173 = vpop.f32.mrb[0].mxu0
        %v1174 = vpop.f32.mrb[0].mxu0
        %v1175 = vadd.f32 0.0, %v1174
        %v1176 = vpop.f32.mrb[0].mxu0
        %1177 = vmatprep.mubr.bf16.mxu0 0
        %1178 = vmatmul.mubr.bf16.gmra.mrb[0].mxu0 %v1009
        %v1179 = vpop.f32.mrb[0].mxu0
        %v1180 = vadd.f32 0.0, %v1179
        %v1181 = vpop.f32.mrb[0].mxu0
        %v1182 = vpop.f32.mrb[0].mxu0
        %v1183 = vadd.f32 0.0, %v1182
        %v1184 = vpop.f32.mrb[0].mxu0
        %1185 = vmatprep.mubr.bf16.mxu0 0
        %1186 = vmatmul.mubr.bf16.gmra.mrb[0].mxu0 %v1012
        %v1187 = vpop.f32.mrb[0].mxu0
        %v1188 = vadd.f32 0.0, %v1187
        %v1189 = vpop.f32.mrb[0].mxu0
        %v1190 = vpop.f32.mrb[0].mxu0
        %v1191 = vadd.f32 0.0, %v1190
        %v1192 = vpop.f32.mrb[0].mxu0
        %1193 = vdwg.mxu0
        %v1194 = vadd.f32 %v922, %v1052
        %v1195 = vadd.f32 %v923, %v1055
        %v1196 = vadd.f32 %v924, %v1060
        %v1197 = vadd.f32 %v925, %v1063
        %v1198 = vadd.f32 %v926, %v1068
        %v1199 = vadd.f32 %v927, %v1071
        %v1200 = vadd.f32 %v928, %v1076
        %v1201 = vadd.f32 %v929, %v1079
        %v1202 = vadd.f32 %v930, %v1084
        %v1203 = vadd.f32 %v931, %v1087
        %v1204 = vadd.f32 %v932, %v1092
        %v1205 = vadd.f32 %v933, %v1095
        %v1206 = vadd.f32 %v934, %v1100
        %v1207 = vadd.f32 %v935, %v1103
        %v1208 = vadd.f32 %v936, %v1108
        %v1209 = vadd.f32 %v937, %v1111
        %v1210 = vadd.f32 %v938, %v1116
        %v1211 = vadd.f32 %v939, %v1119
        %v1212 = vadd.f32 %v940, %v1124
        %v1213 = vadd.f32 %v941, %v1127
        %v1214 = vadd.f32 %v942, %v1132
        %v1215 = vadd.f32 %v943, %v1135
        %v1216 = vadd.f32 %v944, %v1140
        %v1217 = vadd.f32 %v945, %v1143
        %v1218 = vadd.f32 %v946, %v1148
        %v1219 = vadd.f32 %v947, %v1151
        %v1220 = vadd.f32 %v948, %v1156
        %v1221 = vadd.f32 %v949, %v1159
        %v1222 = vadd.f32 %v950, %v1164
        %v1223 = vadd.f32 %v951, %v1167
        %v1224 = vadd.f32 %v952, %v1172
        %v1225 = vadd.f32 %v953, %v1175
        %v1226 = vadd.f32 %v954, %v1180
        %v1227 = vadd.f32 %v955, %v1183
        %v1228 = vadd.f32 %v956, %v1188
        %v1229 = vadd.f32 %v957, %v1191
        %1230 = vst [vmem:[#allocation2] sm:$0xff] %v1194
        %1231 = vst [vmem:[#allocation2 + $0x8] sm:$0xff] %v1195
        %1232 = vst [vmem:[#allocation2 + $0x10] sm:$0xff] %v1196
        %1233 = vst [vmem:[#allocation2 + $0x18] sm:$0xff] %v1197
        %1234 = vst [vmem:[#allocation2 + $0x20] sm:$0xff] %v1198
        %1235 = vst [vmem:[#allocation2 + $0x28] sm:$0xff] %v1199
        %1236 = vst [vmem:[#allocation2 + $0x30] sm:$0xff] %v1200
        %1237 = vst [vmem:[#allocation2 + $0x38] sm:$0xff] %v1201
        %1238 = vst [vmem:[#allocation2 + $0x40] sm:$0xff] %v1202
        %1239 = vst [vmem:[#allocation2 + $0x48] sm:$0xff] %v1203
        %1240 = vst [vmem:[#allocation2 + $0x50] sm:$0xff] %v1204
        %1241 = vst [vmem:[#allocation2 + $0x58] sm:$0xff] %v1205
        %1242 = vst [vmem:[#allocation2 + $0x60] sm:$0xff] %v1206
        %1243 = vst [vmem:[#allocation2 + $0x68] sm:$0xff] %v1207
        %1244 = vst [vmem:[#allocation2 + $0x70] sm:$0xff] %v1208
        %1245 = vst [vmem:[#allocation2 + $0x78] sm:$0xff] %v1209
        %1246 = vst [vmem:[#allocation2 + $0x80] sm:$0xff] %v1210
        %1247 = vst [vmem:[#allocation2 + $0x88] sm:$0xff] %v1211
        %1248 = vst [vmem:[#allocation2 + $0x90] sm:$0xff] %v1212
        %1249 = vst [vmem:[#allocation2 + $0x98] sm:$0xff] %v1213
        %1250 = vst [vmem:[#allocation2 + $0xa0] sm:$0xff] %v1214
        %1251 = vst [vmem:[#allocation2 + $0xa8] sm:$0xff] %v1215
        %1252 = vst [vmem:[#allocation2 + $0xb0] sm:$0xff] %v1216
        %1253 = vst [vmem:[#allocation2 + $0xb8] sm:$0xff] %v1217
        %1254 = vst [vmem:[#allocation2 + $0xc0] sm:$0xff] %v1218
        %1255 = vst [vmem:[#allocation2 + $0xc8] sm:$0xff] %v1219
        %1256 = vst [vmem:[#allocation2 + $0xd0] sm:$0xff] %v1220
        %1257 = vst [vmem:[#allocation2 + $0xd8] sm:$0xff] %v1221
        %1258 = vst [vmem:[#allocation2 + $0xe0] sm:$0xff] %v1222
        %1259 = vst [vmem:[#allocation2 + $0xe8] sm:$0xff] %v1223
        %1260 = vst [vmem:[#allocation2 + $0xf0] sm:$0xff] %v1224
        %1261 = vst [vmem:[#allocation2 + $0xf8] sm:$0xff] %v1225
        %1262 = vst [vmem:[#allocation2 + $0x100] sm:$0xff] %v1226
        %1263 = vst [vmem:[#allocation2 + $0x108] sm:$0xff] %v1227
        %1264 = vst [vmem:[#allocation2 + $0x110] sm:$0xff] %v1228
        %1265 = vst [vmem:[#allocation2 + $0x118] sm:$0xff] %v1229
        %v1266 = vld [vmem:[%s185 + $0x2] sm:$0xff]
        %v1267 = vld [vmem:[%s185 + $0xa] sm:$0xff]
        %v1268 = vld [vmem:[%s185 + $0x12] sm:$0xff]
        %v1269 = vld [vmem:[%s185 + $0x1a] sm:$0xff]
        %v1270 = vld [vmem:[%s185 + $0x22] sm:$0xff]
        %v1271 = vld [vmem:[%s185 + $0x2a] sm:$0xff]
        %v1272 = vld [vmem:[%s185 + $0x32] sm:$0xff]
        %v1273 = vld [vmem:[%s185 + $0x3a] sm:$0xff]
        %v1274 = vld [vmem:[%s185 + $0x42] sm:$0xff]
        %v1275 = vld [vmem:[%s185 + $0x4a] sm:$0xff]
        %v1276 = vld [vmem:[%s185 + $0x52] sm:$0xff]
        %v1277 = vld [vmem:[%s185 + $0x5a] sm:$0xff]
        %v1278 = vld [vmem:[%s185 + $0x62] sm:$0xff]
        %v1279 = vld [vmem:[%s185 + $0x6a] sm:$0xff]
        %v1280 = vld [vmem:[%s185 + $0x72] sm:$0xff]
        %v1281 = vld [vmem:[%s185 + $0x7a] sm:$0xff]
        %v1282 = vld [vmem:[%s185 + $0x82] sm:$0xff]
        %v1283 = vld [vmem:[%s185 + $0x8a] sm:$0xff]
        %v1284 = vld [vmem:[%s185 + $0x92] sm:$0xff]
        %v1285 = vld [vmem:[%s185 + $0x9a] sm:$0xff]
        %v1286 = vld [vmem:[%s185 + $0xa2] sm:$0xff]
        %v1287 = vld [vmem:[%s185 + $0xaa] sm:$0xff]
        %v1288 = vld [vmem:[%s185 + $0xb2] sm:$0xff]
        %v1289 = vld [vmem:[%s185 + $0xba] sm:$0xff]
        %v1290 = vld [vmem:[%s185 + $0xc2] sm:$0xff]
        %v1291 = vld [vmem:[%s185 + $0xca] sm:$0xff]
        %v1292 = vld [vmem:[%s185 + $0xd2] sm:$0xff]
        %v1293 = vld [vmem:[%s185 + $0xda] sm:$0xff]
        %v1294 = vld [vmem:[%s185 + $0xe2] sm:$0xff]
        %v1295 = vld [vmem:[%s185 + $0xea] sm:$0xff]
        %v1296 = vld [vmem:[%s185 + $0xf2] sm:$0xff]
        %v1297 = vld [vmem:[%s185 + $0xfa] sm:$0xff]
        %v1298 = vld [vmem:[%s185 + $0x102] sm:$0xff]
        %v1299 = vld [vmem:[%s185 + $0x10a] sm:$0xff]
        %v1300 = vld [vmem:[%s185 + $0x112] sm:$0xff]
        %v1301 = vld [vmem:[%s185 + $0x11a] sm:$0xff]
        %vm1302 = vcmp.ge.f32.partialorder %v1266, 0.0
        %vm1303 = vcmp.ge.f32.partialorder %v1267, 0.0
        %vm1304 = vcmp.ge.f32.partialorder %v1268, 0.0
        %vm1305 = vcmp.ge.f32.partialorder %v1269, 0.0
        %vm1306 = vcmp.ge.f32.partialorder %v1270, 0.0
        %vm1307 = vcmp.ge.f32.partialorder %v1271, 0.0
        %vm1308 = vcmp.ge.f32.partialorder %v1272, 0.0
        %vm1309 = vcmp.ge.f32.partialorder %v1273, 0.0
        %vm1310 = vcmp.ge.f32.partialorder %v1274, 0.0
        %vm1311 = vcmp.ge.f32.partialorder %v1275, 0.0
        %vm1312 = vcmp.ge.f32.partialorder %v1276, 0.0
        %vm1313 = vcmp.ge.f32.partialorder %v1277, 0.0
        %vm1314 = vcmp.ge.f32.partialorder %v1278, 0.0
        %vm1315 = vcmp.ge.f32.partialorder %v1279, 0.0
        %vm1316 = vcmp.ge.f32.partialorder %v1280, 0.0
        %vm1317 = vcmp.ge.f32.partialorder %v1281, 0.0
        %vm1318 = vcmp.ge.f32.partialorder %v1282, 0.0
        %vm1319 = vcmp.ge.f32.partialorder %v1283, 0.0
        %vm1320 = vcmp.ge.f32.partialorder %v1284, 0.0
        %vm1321 = vcmp.ge.f32.partialorder %v1285, 0.0
        %vm1322 = vcmp.ge.f32.partialorder %v1286, 0.0
        %vm1323 = vcmp.ge.f32.partialorder %v1287, 0.0
        %vm1324 = vcmp.ge.f32.partialorder %v1288, 0.0
        %vm1325 = vcmp.ge.f32.partialorder %v1289, 0.0
        %vm1326 = vcmp.ge.f32.partialorder %v1290, 0.0
        %vm1327 = vcmp.ge.f32.partialorder %v1291, 0.0
        %vm1328 = vcmp.ge.f32.partialorder %v1292, 0.0
        %vm1329 = vcmp.ge.f32.partialorder %v1293, 0.0
        %vm1330 = vcmp.ge.f32.partialorder %v1294, 0.0
        %vm1331 = vcmp.ge.f32.partialorder %v1295, 0.0
        %vm1332 = vcmp.ge.f32.partialorder %v1296, 0.0
        %vm1333 = vcmp.ge.f32.partialorder %v1297, 0.0
        %vm1334 = vcmp.ge.f32.partialorder %v1298, 0.0
        %vm1335 = vcmp.ge.f32.partialorder %v1299, 0.0
        %vm1336 = vcmp.ge.f32.partialorder %v1300, 0.0
        %vm1337 = vcmp.ge.f32.partialorder %v1301, 0.0
        %v1338 = vsel %vm1302, 1, 0
        %v1339 = vsel %vm1303, 1, 0
        %v1340 = vsel %vm1304, 1, 0
        %v1341 = vsel %vm1305, 1, 0
        %v1342 = vsel %vm1306, 1, 0
        %v1343 = vsel %vm1307, 1, 0
        %v1344 = vsel %vm1308, 1, 0
        %v1345 = vsel %vm1309, 1, 0
        %v1346 = vsel %vm1310, 1, 0
        %v1347 = vsel %vm1311, 1, 0
        %v1348 = vsel %vm1312, 1, 0
        %v1349 = vsel %vm1313, 1, 0
        %v1350 = vsel %vm1314, 1, 0
        %v1351 = vsel %vm1315, 1, 0
        %v1352 = vsel %vm1316, 1, 0
        %v1353 = vsel %vm1317, 1, 0
        %v1354 = vsel %vm1318, 1, 0
        %v1355 = vsel %vm1319, 1, 0
        %v1356 = vsel %vm1320, 1, 0
        %v1357 = vsel %vm1321, 1, 0
        %v1358 = vsel %vm1322, 1, 0
        %v1359 = vsel %vm1323, 1, 0
        %v1360 = vsel %vm1324, 1, 0
        %v1361 = vsel %vm1325, 1, 0
        %v1362 = vsel %vm1326, 1, 0
        %v1363 = vsel %vm1327, 1, 0
        %v1364 = vsel %vm1328, 1, 0
        %v1365 = vsel %vm1329, 1, 0
        %v1366 = vsel %vm1330, 1, 0
        %v1367 = vsel %vm1331, 1, 0
        %v1368 = vsel %vm1332, 1, 0
        %v1369 = vsel %vm1333, 1, 0
        %v1370 = vsel %vm1334, 1, 0
        %v1371 = vsel %vm1335, 1, 0
        %v1372 = vsel %vm1336, 1, 0
        %v1373 = vsel %vm1337, 1, 0
        %v1374 = vcvt.s32.f32 %v1338
        %v1375 = vcvt.s32.f32 %v1339
        %v1376 = vcvt.s32.f32 %v1340
        %v1377 = vcvt.s32.f32 %v1341
        %v1378 = vcvt.s32.f32 %v1342
        %v1379 = vcvt.s32.f32 %v1343
        %v1380 = vcvt.s32.f32 %v1344
        %v1381 = vcvt.s32.f32 %v1345
        %v1382 = vcvt.s32.f32 %v1346
        %v1383 = vcvt.s32.f32 %v1347
        %v1384 = vcvt.s32.f32 %v1348
        %v1385 = vcvt.s32.f32 %v1349
        %v1386 = vcvt.s32.f32 %v1350
        %v1387 = vcvt.s32.f32 %v1351
        %v1388 = vcvt.s32.f32 %v1352
        %v1389 = vcvt.s32.f32 %v1353
        %v1390 = vcvt.s32.f32 %v1354
        %v1391 = vcvt.s32.f32 %v1355
        %v1392 = vcvt.s32.f32 %v1356
        %v1393 = vcvt.s32.f32 %v1357
        %v1394 = vcvt.s32.f32 %v1358
        %v1395 = vcvt.s32.f32 %v1359
        %v1396 = vcvt.s32.f32 %v1360
        %v1397 = vcvt.s32.f32 %v1361
        %v1398 = vcvt.s32.f32 %v1362
        %v1399 = vcvt.s32.f32 %v1363
        %v1400 = vcvt.s32.f32 %v1364
        %v1401 = vcvt.s32.f32 %v1365
        %v1402 = vcvt.s32.f32 %v1366
        %v1403 = vcvt.s32.f32 %v1367
        %v1404 = vcvt.s32.f32 %v1368
        %v1405 = vcvt.s32.f32 %v1369
        %v1406 = vcvt.s32.f32 %v1370
        %v1407 = vcvt.s32.f32 %v1371
        %v1408 = vcvt.s32.f32 %v1372
        %v1409 = vcvt.s32.f32 %v1373
        %v1410 = vpack.c.bf16 %v1375, %v1374
        %v1411 = vpack.c.bf16 %v1377, %v1376
        %v1412 = vpack.c.bf16 %v1379, %v1378
        %v1413 = vpack.c.bf16 %v1381, %v1380
        %v1414 = vpack.c.bf16 %v1383, %v1382
        %v1415 = vpack.c.bf16 %v1385, %v1384
        %v1416 = vpack.c.bf16 %v1387, %v1386
        %v1417 = vpack.c.bf16 %v1389, %v1388
        %v1418 = vpack.c.bf16 %v1391, %v1390
        %v1419 = vpack.c.bf16 %v1393, %v1392
        %v1420 = vpack.c.bf16 %v1395, %v1394
        %v1421 = vpack.c.bf16 %v1397, %v1396
        %v1422 = vpack.c.bf16 %v1399, %v1398
        %v1423 = vpack.c.bf16 %v1401, %v1400
        %v1424 = vpack.c.bf16 %v1403, %v1402
        %v1425 = vpack.c.bf16 %v1405, %v1404
        %v1426 = vpack.c.bf16 %v1407, %v1406
        %v1427 = vpack.c.bf16 %v1409, %v1408
        %v1428 = vld [vmem:[#allocation2] sm:$0xff]
        %v1429 = vld [vmem:[#allocation2 + $0x8] sm:$0xff]
        %v1430 = vld [vmem:[#allocation2 + $0x10] sm:$0xff]
        %v1431 = vld [vmem:[#allocation2 + $0x18] sm:$0xff]
        %v1432 = vld [vmem:[#allocation2 + $0x20] sm:$0xff]
        %v1433 = vld [vmem:[#allocation2 + $0x28] sm:$0xff]
        %v1434 = vld [vmem:[#allocation2 + $0x30] sm:$0xff]
        %v1435 = vld [vmem:[#allocation2 + $0x38] sm:$0xff]
        %v1436 = vld [vmem:[#allocation2 + $0x40] sm:$0xff]
        %v1437 = vld [vmem:[#allocation2 + $0x48] sm:$0xff]
        %v1438 = vld [vmem:[#allocation2 + $0x50] sm:$0xff]
        %v1439 = vld [vmem:[#allocation2 + $0x58] sm:$0xff]
        %v1440 = vld [vmem:[#allocation2 + $0x60] sm:$0xff]
        %v1441 = vld [vmem:[#allocation2 + $0x68] sm:$0xff]
        %v1442 = vld [vmem:[#allocation2 + $0x70] sm:$0xff]
        %v1443 = vld [vmem:[#allocation2 + $0x78] sm:$0xff]
        %v1444 = vld [vmem:[#allocation2 + $0x80] sm:$0xff]
        %v1445 = vld [vmem:[#allocation2 + $0x88] sm:$0xff]
        %v1446 = vld [vmem:[#allocation2 + $0x90] sm:$0xff]
        %v1447 = vld [vmem:[#allocation2 + $0x98] sm:$0xff]
        %v1448 = vld [vmem:[#allocation2 + $0xa0] sm:$0xff]
        %v1449 = vld [vmem:[#allocation2 + $0xa8] sm:$0xff]
        %v1450 = vld [vmem:[#allocation2 + $0xb0] sm:$0xff]
        %v1451 = vld [vmem:[#allocation2 + $0xb8] sm:$0xff]
        %v1452 = vld [vmem:[#allocation2 + $0xc0] sm:$0xff]
        %v1453 = vld [vmem:[#allocation2 + $0xc8] sm:$0xff]
        %v1454 = vld [vmem:[#allocation2 + $0xd0] sm:$0xff]
        %v1455 = vld [vmem:[#allocation2 + $0xd8] sm:$0xff]
        %v1456 = vld [vmem:[#allocation2 + $0xe0] sm:$0xff]
        %v1457 = vld [vmem:[#allocation2 + $0xe8] sm:$0xff]
        %v1458 = vld [vmem:[#allocation2 + $0xf0] sm:$0xff]
        %v1459 = vld [vmem:[#allocation2 + $0xf8] sm:$0xff]
        %v1460 = vld [vmem:[#allocation2 + $0x100] sm:$0xff]
        %v1461 = vld [vmem:[#allocation2 + $0x108] sm:$0xff]
        %v1462 = vld [vmem:[#allocation2 + $0x110] sm:$0xff]
        %v1463 = vld [vmem:[#allocation2 + $0x118] sm:$0xff]
        %s1464 = scalar_lea.vmem [#allocation6], 4
        %v1465 = vld [vmem:[%s1464] sm:$0x3]
        %v1467 = vsel %vm452, %v1410, 0
        %v1470 = vsel %vm452, %v1411, 0
        %v1473 = vsel %vm452, %v1412, 0
        %v1476 = vsel %vm452, %v1413, 0
        %v1479 = vsel %vm452, %v1414, 0
        %v1482 = vsel %vm452, %v1415, 0
        %v1485 = vsel %vm452, %v1416, 0
        %v1488 = vsel %vm452, %v1417, 0
        %v1491 = vsel %vm452, %v1418, 0
        %v1494 = vsel %vm452, %v1419, 0
        %v1497 = vsel %vm452, %v1420, 0
        %v1500 = vsel %vm452, %v1421, 0
        %v1503 = vsel %vm452, %v1422, 0
        %v1506 = vsel %vm452, %v1423, 0
        %v1509 = vsel %vm452, %v1424, 0
        %v1512 = vsel %vm452, %v1425, 0
        %v1515 = vsel %vm452, %v1426, 0
        %v1518 = vsel %vm452, %v1427, 0
        %v1521 = vsel %vm507, %v1465, 0
        %1523 = vmatprep.subr.bf16.mxu0 0
        %1524 = vmatpush1.bf16.msra.mxu0 %v1521
        %1525 = vmatprep.subr.bf16.mxu0 0
        %1526 = vmatpush1.bf16.msra.mxu0 0
        %1527 = vmatprep.subr.bf16.mxu0 0
        %1528 = vmatpush1.bf16.msra.mxu0 0
        %1529 = vmatprep.subr.bf16.mxu0 0
        %1530 = vmatpush1.bf16.msra.mxu0 0
        %1531 = vmatprep.subr.bf16.mxu0 0
        %1532 = vmatpush1.bf16.msra.mxu0 0
        %1533 = vmatprep.subr.bf16.mxu0 0
        %1534 = vmatpush1.bf16.msra.mxu0 0
        %1535 = vmatprep.subr.bf16.mxu0 0
        %1536 = vmatpush1.bf16.msra.mxu0 0
        %1537 = vmatprep.subr.bf16.mxu0 0
        %1538 = vmatpush1.bf16.msra.mxu0 0
        %1539 = vmatprep.subr.bf16.mxu0 0
        %1540 = vmatpush1.bf16.msra.mxu0 0
        %1541 = vmatprep.subr.bf16.mxu0 0
        %1542 = vmatpush1.bf16.msra.mxu0 0
        %1543 = vmatprep.subr.bf16.mxu0 0
        %1544 = vmatpush1.bf16.msra.mxu0 0
        %1545 = vmatprep.subr.bf16.mxu0 0
        %1546 = vmatpush1.bf16.msra.mxu0 0
        %1547 = vmatprep.subr.bf16.mxu0 0
        %1548 = vmatpush1.bf16.msra.mxu0 0
        %1549 = vmatprep.subr.bf16.mxu0 0
        %1550 = vmatpush1.bf16.msra.mxu0 0
        %1551 = vmatprep.subr.bf16.mxu0 0
        %1552 = vmatpush1.bf16.msra.mxu0 0
        %1553 = vmatprep.subr.bf16.mxu0 0
        %1554 = vmatpush1.bf16.msra.mxu0 0
        %1555 = vmatprep.mubr.bf16.mxu0 0
        %1556 = vmatmul.mubr.bf16.gmra.mrb[0].mxu0 %v1467
        %v1557 = vpop.f32.mrb[0].mxu0
        %v1558 = vadd.f32 0.0, %v1557
        %v1559 = vpop.f32.mrb[0].mxu0
        %v1560 = vpop.f32.mrb[0].mxu0
        %v1561 = vadd.f32 0.0, %v1560
        %v1562 = vpop.f32.mrb[0].mxu0
        %1563 = vmatprep.mubr.bf16.mxu0 0
        %1564 = vmatmul.mubr.bf16.gmra.mrb[0].mxu0 %v1470
        %v1565 = vpop.f32.mrb[0].mxu0
        %v1566 = vadd.f32 0.0, %v1565
        %v1567 = vpop.f32.mrb[0].mxu0
        %v1568 = vpop.f32.mrb[0].mxu0
        %v1569 = vadd.f32 0.0, %v1568
        %v1570 = vpop.f32.mrb[0].mxu0
        %1571 = vmatprep.mubr.bf16.mxu0 0
        %1572 = vmatmul.mubr.bf16.gmra.mrb[0].mxu0 %v1473
        %v1573 = vpop.f32.mrb[0].mxu0
        %v1574 = vadd.f32 0.0, %v1573
        %v1575 = vpop.f32.mrb[0].mxu0
        %v1576 = vpop.f32.mrb[0].mxu0
        %v1577 = vadd.f32 0.0, %v1576
        %v1578 = vpop.f32.mrb[0].mxu0
        %1579 = vmatprep.mubr.bf16.mxu0 0
        %1580 = vmatmul.mubr.bf16.gmra.mrb[0].mxu0 %v1476
        %v1581 = vpop.f32.mrb[0].mxu0
        %v1582 = vadd.f32 0.0, %v1581
        %v1583 = vpop.f32.mrb[0].mxu0
        %v1584 = vpop.f32.mrb[0].mxu0
        %v1585 = vadd.f32 0.0, %v1584
        %v1586 = vpop.f32.mrb[0].mxu0
        %1587 = vmatprep.mubr.bf16.mxu0 0
        %1588 = vmatmul.mubr.bf16.gmra.mrb[0].mxu0 %v1479
        %v1589 = vpop.f32.mrb[0].mxu0
        %v1590 = vadd.f32 0.0, %v1589
        %v1591 = vpop.f32.mrb[0].mxu0
        %v1592 = vpop.f32.mrb[0].mxu0
        %v1593 = vadd.f32 0.0, %v1592
        %v1594 = vpop.f32.mrb[0].mxu0
        %1595 = vmatprep.mubr.bf16.mxu0 0
        %1596 = vmatmul.mubr.bf16.gmra.mrb[0].mxu0 %v1482
        %v1597 = vpop.f32.mrb[0].mxu0
        %v1598 = vadd.f32 0.0, %v1597
        %v1599 = vpop.f32.mrb[0].mxu0
        %v1600 = vpop.f32.mrb[0].mxu0
        %v1601 = vadd.f32 0.0, %v1600
        %v1602 = vpop.f32.mrb[0].mxu0
        %1603 = vmatprep.mubr.bf16.mxu0 0
        %1604 = vmatmul.mubr.bf16.gmra.mrb[0].mxu0 %v1485
        %v1605 = vpop.f32.mrb[0].mxu0
        %v1606 = vadd.f32 0.0, %v1605
        %v1607 = vpop.f32.mrb[0].mxu0
        %v1608 = vpop.f32.mrb[0].mxu0
        %v1609 = vadd.f32 0.0, %v1608
        %v1610 = vpop.f32.mrb[0].mxu0
        %1611 = vmatprep.mubr.bf16.mxu0 0
        %1612 = vmatmul.mubr.bf16.gmra.mrb[0].mxu0 %v1488
        %v1613 = vpop.f32.mrb[0].mxu0
        %v1614 = vadd.f32 0.0, %v1613
        %v1615 = vpop.f32.mrb[0].mxu0
        %v1616 = vpop.f32.mrb[0].mxu0
        %v1617 = vadd.f32 0.0, %v1616
        %v1618 = vpop.f32.mrb[0].mxu0
        %1619 = vmatprep.mubr.bf16.mxu0 0
        %1620 = vmatmul.mubr.bf16.gmra.mrb[0].mxu0 %v1491
        %v1621 = vpop.f32.mrb[0].mxu0
        %v1622 = vadd.f32 0.0, %v1621
        %v1623 = vpop.f32.mrb[0].mxu0
        %v1624 = vpop.f32.mrb[0].mxu0
        %v1625 = vadd.f32 0.0, %v1624
        %v1626 = vpop.f32.mrb[0].mxu0
        %1627 = vmatprep.mubr.bf16.mxu0 0
        %1628 = vmatmul.mubr.bf16.gmra.mrb[0].mxu0 %v1494
        %v1629 = vpop.f32.mrb[0].mxu0
        %v1630 = vadd.f32 0.0, %v1629
        %v1631 = vpop.f32.mrb[0].mxu0
        %v1632 = vpop.f32.mrb[0].mxu0
        %v1633 = vadd.f32 0.0, %v1632
        %v1634 = vpop.f32.mrb[0].mxu0
        %1635 = vmatprep.mubr.bf16.mxu0 0
        %1636 = vmatmul.mubr.bf16.gmra.mrb[0].mxu0 %v1497
        %v1637 = vpop.f32.mrb[0].mxu0
        %v1638 = vadd.f32 0.0, %v1637
        %v1639 = vpop.f32.mrb[0].mxu0
        %v1640 = vpop.f32.mrb[0].mxu0
        %v1641 = vadd.f32 0.0, %v1640
        %v1642 = vpop.f32.mrb[0].mxu0
        %1643 = vmatprep.mubr.bf16.mxu0 0
        %1644 = vmatmul.mubr.bf16.gmra.mrb[0].mxu0 %v1500
        %v1645 = vpop.f32.mrb[0].mxu0
        %v1646 = vadd.f32 0.0, %v1645
        %v1647 = vpop.f32.mrb[0].mxu0
        %v1648 = vpop.f32.mrb[0].mxu0
        %v1649 = vadd.f32 0.0, %v1648
        %v1650 = vpop.f32.mrb[0].mxu0
        %1651 = vmatprep.mubr.bf16.mxu0 0
        %1652 = vmatmul.mubr.bf16.gmra.mrb[0].mxu0 %v1503
        %v1653 = vpop.f32.mrb[0].mxu0
        %v1654 = vadd.f32 0.0, %v1653
        %v1655 = vpop.f32.mrb[0].mxu0
        %v1656 = vpop.f32.mrb[0].mxu0
        %v1657 = vadd.f32 0.0, %v1656
        %v1658 = vpop.f32.mrb[0].mxu0
        %1659 = vmatprep.mubr.bf16.mxu0 0
        %1660 = vmatmul.mubr.bf16.gmra.mrb[0].mxu0 %v1506
        %v1661 = vpop.f32.mrb[0].mxu0
        %v1662 = vadd.f32 0.0, %v1661
        %v1663 = vpop.f32.mrb[0].mxu0
        %v1664 = vpop.f32.mrb[0].mxu0
        %v1665 = vadd.f32 0.0, %v1664
        %v1666 = vpop.f32.mrb[0].mxu0
        %1667 = vmatprep.mubr.bf16.mxu0 0
        %1668 = vmatmul.mubr.bf16.gmra.mrb[0].mxu0 %v1509
        %v1669 = vpop.f32.mrb[0].mxu0
        %v1670 = vadd.f32 0.0, %v1669
        %v1671 = vpop.f32.mrb[0].mxu0
        %v1672 = vpop.f32.mrb[0].mxu0
        %v1673 = vadd.f32 0.0, %v1672
        %v1674 = vpop.f32.mrb[0].mxu0
        %1675 = vmatprep.mubr.bf16.mxu0 0
        %1676 = vmatmul.mubr.bf16.gmra.mrb[0].mxu0 %v1512
        %v1677 = vpop.f32.mrb[0].mxu0
        %v1678 = vadd.f32 0.0, %v1677
        %v1679 = vpop.f32.mrb[0].mxu0
        %v1680 = vpop.f32.mrb[0].mxu0
        %v1681 = vadd.f32 0.0, %v1680
        %v1682 = vpop.f32.mrb[0].mxu0
        %1683 = vmatprep.mubr.bf16.mxu0 0
        %1684 = vmatmul.mubr.bf16.gmra.mrb[0].mxu0 %v1515
        %v1685 = vpop.f32.mrb[0].mxu0
        %v1686 = vadd.f32 0.0, %v1685
        %v1687 = vpop.f32.mrb[0].mxu0
        %v1688 = vpop.f32.mrb[0].mxu0
        %v1689 = vadd.f32 0.0, %v1688
        %v1690 = vpop.f32.mrb[0].mxu0
        %1691 = vmatprep.mubr.bf16.mxu0 0
        %1692 = vmatmul.mubr.bf16.gmra.mrb[0].mxu0 %v1518
        %v1693 = vpop.f32.mrb[0].mxu0
        %v1694 = vadd.f32 0.0, %v1693
        %v1695 = vpop.f32.mrb[0].mxu0
        %v1696 = vpop.f32.mrb[0].mxu0
        %v1697 = vadd.f32 0.0, %v1696
        %v1698 = vpop.f32.mrb[0].mxu0
        %1699 = vdwg.mxu0
        %v1700 = vadd.f32 %v1428, %v1558
        %v1701 = vadd.f32 %v1429, %v1561
        %v1702 = vadd.f32 %v1430, %v1566
        %v1703 = vadd.f32 %v1431, %v1569
        %v1704 = vadd.f32 %v1432, %v1574
        %v1705 = vadd.f32 %v1433, %v1577
        %v1706 = vadd.f32 %v1434, %v1582
        %v1707 = vadd.f32 %v1435, %v1585
        %v1708 = vadd.f32 %v1436, %v1590
        %v1709 = vadd.f32 %v1437, %v1593
        %v1710 = vadd.f32 %v1438, %v1598
        %v1711 = vadd.f32 %v1439, %v1601
        %v1712 = vadd.f32 %v1440, %v1606
        %v1713 = vadd.f32 %v1441, %v1609
        %v1714 = vadd.f32 %v1442, %v1614
        %v1715 = vadd.f32 %v1443, %v1617
        %v1716 = vadd.f32 %v1444, %v1622
        %v1717 = vadd.f32 %v1445, %v1625
        %v1718 = vadd.f32 %v1446, %v1630
        %v1719 = vadd.f32 %v1447, %v1633
        %v1720 = vadd.f32 %v1448, %v1638
        %v1721 = vadd.f32 %v1449, %v1641
        %v1722 = vadd.f32 %v1450, %v1646
        %v1723 = vadd.f32 %v1451, %v1649
        %v1724 = vadd.f32 %v1452, %v1654
        %v1725 = vadd.f32 %v1453, %v1657
        %v1726 = vadd.f32 %v1454, %v1662
        %v1727 = vadd.f32 %v1455, %v1665
        %v1728 = vadd.f32 %v1456, %v1670
        %v1729 = vadd.f32 %v1457, %v1673
        %v1730 = vadd.f32 %v1458, %v1678
        %v1731 = vadd.f32 %v1459, %v1681
        %v1732 = vadd.f32 %v1460, %v1686
        %v1733 = vadd.f32 %v1461, %v1689
        %v1734 = vadd.f32 %v1462, %v1694
        %v1735 = vadd.f32 %v1463, %v1697
        %1736 = vst [vmem:[#allocation2] sm:$0xff] %v1700
        %1737 = vst [vmem:[#allocation2 + $0x8] sm:$0xff] %v1701
        %1738 = vst [vmem:[#allocation2 + $0x10] sm:$0xff] %v1702
        %1739 = vst [vmem:[#allocation2 + $0x18] sm:$0xff] %v1703
        %1740 = vst [vmem:[#allocation2 + $0x20] sm:$0xff] %v1704
        %1741 = vst [vmem:[#allocation2 + $0x28] sm:$0xff] %v1705
        %1742 = vst [vmem:[#allocation2 + $0x30] sm:$0xff] %v1706
        %1743 = vst [vmem:[#allocation2 + $0x38] sm:$0xff] %v1707
        %1744 = vst [vmem:[#allocation2 + $0x40] sm:$0xff] %v1708
        %1745 = vst [vmem:[#allocation2 + $0x48] sm:$0xff] %v1709
        %1746 = vst [vmem:[#allocation2 + $0x50] sm:$0xff] %v1710
        %1747 = vst [vmem:[#allocation2 + $0x58] sm:$0xff] %v1711
        %1748 = vst [vmem:[#allocation2 + $0x60] sm:$0xff] %v1712
        %1749 = vst [vmem:[#allocation2 + $0x68] sm:$0xff] %v1713
        %1750 = vst [vmem:[#allocation2 + $0x70] sm:$0xff] %v1714
        %1751 = vst [vmem:[#allocation2 + $0x78] sm:$0xff] %v1715
        %1752 = vst [vmem:[#allocation2 + $0x80] sm:$0xff] %v1716
        %1753 = vst [vmem:[#allocation2 + $0x88] sm:$0xff] %v1717
        %1754 = vst [vmem:[#allocation2 + $0x90] sm:$0xff] %v1718
        %1755 = vst [vmem:[#allocation2 + $0x98] sm:$0xff] %v1719
        %1756 = vst [vmem:[#allocation2 + $0xa0] sm:$0xff] %v1720
        %1757 = vst [vmem:[#allocation2 + $0xa8] sm:$0xff] %v1721
        %1758 = vst [vmem:[#allocation2 + $0xb0] sm:$0xff] %v1722
        %1759 = vst [vmem:[#allocation2 + $0xb8] sm:$0xff] %v1723
        %1760 = vst [vmem:[#allocation2 + $0xc0] sm:$0xff] %v1724
        %1761 = vst [vmem:[#allocation2 + $0xc8] sm:$0xff] %v1725
        %1762 = vst [vmem:[#allocation2 + $0xd0] sm:$0xff] %v1726
        %1763 = vst [vmem:[#allocation2 + $0xd8] sm:$0xff] %v1727
        %1764 = vst [vmem:[#allocation2 + $0xe0] sm:$0xff] %v1728
        %1765 = vst [vmem:[#allocation2 + $0xe8] sm:$0xff] %v1729
        %1766 = vst [vmem:[#allocation2 + $0xf0] sm:$0xff] %v1730
        %1767 = vst [vmem:[#allocation2 + $0xf8] sm:$0xff] %v1731
        %1768 = vst [vmem:[#allocation2 + $0x100] sm:$0xff] %v1732
        %1769 = vst [vmem:[#allocation2 + $0x108] sm:$0xff] %v1733
        %1770 = vst [vmem:[#allocation2 + $0x110] sm:$0xff] %v1734
        %1771 = vst [vmem:[#allocation2 + $0x118] sm:$0xff] %v1735
        %v1772 = vld [vmem:[%s185 + $0x12] sm:$0xff]
        %v1773 = vld [vmem:[%s185 + $0x1a] sm:$0xff]
        %v1774 = vld [vmem:[%s185 + $0x22] sm:$0xff]
        %v1775 = vld [vmem:[%s185 + $0x2a] sm:$0xff]
        %v1776 = vld [vmem:[%s185 + $0x32] sm:$0xff]
        %v1777 = vld [vmem:[%s185 + $0x3a] sm:$0xff]
        %v1778 = vld [vmem:[%s185 + $0x42] sm:$0xff]
        %v1779 = vld [vmem:[%s185 + $0x4a] sm:$0xff]
        %v1780 = vld [vmem:[%s185 + $0x52] sm:$0xff]
        %v1781 = vld [vmem:[%s185 + $0x5a] sm:$0xff]
        %v1782 = vld [vmem:[%s185 + $0x62] sm:$0xff]
        %v1783 = vld [vmem:[%s185 + $0x6a] sm:$0xff]
        %v1784 = vld [vmem:[%s185 + $0x72] sm:$0xff]
        %v1785 = vld [vmem:[%s185 + $0x7a] sm:$0xff]
        %v1786 = vld [vmem:[%s185 + $0x82] sm:$0xff]
        %v1787 = vld [vmem:[%s185 + $0x8a] sm:$0xff]
        %v1788 = vld [vmem:[%s185 + $0x92] sm:$0xff]
        %v1789 = vld [vmem:[%s185 + $0x9a] sm:$0xff]
        %v1790 = vld [vmem:[%s185 + $0xa2] sm:$0xff]
        %v1791 = vld [vmem:[%s185 + $0xaa] sm:$0xff]
        %v1792 = vld [vmem:[%s185 + $0xb2] sm:$0xff]
        %v1793 = vld [vmem:[%s185 + $0xba] sm:$0xff]
        %v1794 = vld [vmem:[%s185 + $0xc2] sm:$0xff]
        %v1795 = vld [vmem:[%s185 + $0xca] sm:$0xff]
        %v1796 = vld [vmem:[%s185 + $0xd2] sm:$0xff]
        %v1797 = vld [vmem:[%s185 + $0xda] sm:$0xff]
        %v1798 = vld [vmem:[%s185 + $0xe2] sm:$0xff]
        %v1799 = vld [vmem:[%s185 + $0xea] sm:$0xff]
        %v1800 = vld [vmem:[%s185 + $0xf2] sm:$0xff]
        %v1801 = vld [vmem:[%s185 + $0xfa] sm:$0xff]
        %v1802 = vld [vmem:[%s185 + $0x102] sm:$0xff]
        %v1803 = vld [vmem:[%s185 + $0x10a] sm:$0xff]
        %v1804 = vld [vmem:[%s185 + $0x112] sm:$0xff]
        %v1805 = vld [vmem:[%s185 + $0x11a] sm:$0xff]
        %v1806 = vld [vmem:[%s185 + $0x122] sm:$0xff]
        %v1807 = vld [vmem:[%s185 + $0x12a] sm:$0xff]
        %vm1808 = vcmp.ge.f32.partialorder %v1772, 0.0
        %vm1809 = vcmp.ge.f32.partialorder %v1773, 0.0
        %vm1810 = vcmp.ge.f32.partialorder %v1774, 0.0
        %vm1811 = vcmp.ge.f32.partialorder %v1775, 0.0
        %vm1812 = vcmp.ge.f32.partialorder %v1776, 0.0
        %vm1813 = vcmp.ge.f32.partialorder %v1777, 0.0
        %vm1814 = vcmp.ge.f32.partialorder %v1778, 0.0
        %vm1815 = vcmp.ge.f32.partialorder %v1779, 0.0
        %vm1816 = vcmp.ge.f32.partialorder %v1780, 0.0
        %vm1817 = vcmp.ge.f32.partialorder %v1781, 0.0
        %vm1818 = vcmp.ge.f32.partialorder %v1782, 0.0
        %vm1819 = vcmp.ge.f32.partialorder %v1783, 0.0
        %vm1820 = vcmp.ge.f32.partialorder %v1784, 0.0
        %vm1821 = vcmp.ge.f32.partialorder %v1785, 0.0
        %vm1822 = vcmp.ge.f32.partialorder %v1786, 0.0
        %vm1823 = vcmp.ge.f32.partialorder %v1787, 0.0
        %vm1824 = vcmp.ge.f32.partialorder %v1788, 0.0
        %vm1825 = vcmp.ge.f32.partialorder %v1789, 0.0
        %vm1826 = vcmp.ge.f32.partialorder %v1790, 0.0
        %vm1827 = vcmp.ge.f32.partialorder %v1791, 0.0
        %vm1828 = vcmp.ge.f32.partialorder %v1792, 0.0
        %vm1829 = vcmp.ge.f32.partialorder %v1793, 0.0
        %vm1830 = vcmp.ge.f32.partialorder %v1794, 0.0
        %vm1831 = vcmp.ge.f32.partialorder %v1795, 0.0
        %vm1832 = vcmp.ge.f32.partialorder %v1796, 0.0
        %vm1833 = vcmp.ge.f32.partialorder %v1797, 0.0
        %vm1834 = vcmp.ge.f32.partialorder %v1798, 0.0
        %vm1835 = vcmp.ge.f32.partialorder %v1799, 0.0
        %vm1836 = vcmp.ge.f32.partialorder %v1800, 0.0
        %vm1837 = vcmp.ge.f32.partialorder %v1801, 0.0
        %vm1838 = vcmp.ge.f32.partialorder %v1802, 0.0
        %vm1839 = vcmp.ge.f32.partialorder %v1803, 0.0
        %vm1840 = vcmp.ge.f32.partialorder %v1804, 0.0
        %vm1841 = vcmp.ge.f32.partialorder %v1805, 0.0
        %vm1842 = vcmp.ge.f32.partialorder %v1806, 0.0
        %vm1843 = vcmp.ge.f32.partialorder %v1807, 0.0
        %v1844 = vsel %vm1808, 1, 0
        %v1845 = vsel %vm1809, 1, 0
        %v1846 = vsel %vm1810, 1, 0
        %v1847 = vsel %vm1811, 1, 0
        %v1848 = vsel %vm1812, 1, 0
        %v1849 = vsel %vm1813, 1, 0
        %v1850 = vsel %vm1814, 1, 0
        %v1851 = vsel %vm1815, 1, 0
        %v1852 = vsel %vm1816, 1, 0
        %v1853 = vsel %vm1817, 1, 0
        %v1854 = vsel %vm1818, 1, 0
        %v1855 = vsel %vm1819, 1, 0
        %v1856 = vsel %vm1820, 1, 0
        %v1857 = vsel %vm1821, 1, 0
        %v1858 = vsel %vm1822, 1, 0
        %v1859 = vsel %vm1823, 1, 0
        %v1860 = vsel %vm1824, 1, 0
        %v1861 = vsel %vm1825, 1, 0
        %v1862 = vsel %vm1826, 1, 0
        %v1863 = vsel %vm1827, 1, 0
        %v1864 = vsel %vm1828, 1, 0
        %v1865 = vsel %vm1829, 1, 0
        %v1866 = vsel %vm1830, 1, 0
        %v1867 = vsel %vm1831, 1, 0
        %v1868 = vsel %vm1832, 1, 0
        %v1869 = vsel %vm1833, 1, 0
        %v1870 = vsel %vm1834, 1, 0
        %v1871 = vsel %vm1835, 1, 0
        %v1872 = vsel %vm1836, 1, 0
        %v1873 = vsel %vm1837, 1, 0
        %v1874 = vsel %vm1838, 1, 0
        %v1875 = vsel %vm1839, 1, 0
        %v1876 = vsel %vm1840, 1, 0
        %v1877 = vsel %vm1841, 1, 0
        %v1878 = vsel %vm1842, 1, 0
        %v1879 = vsel %vm1843, 1, 0
        %v1880 = vcvt.s32.f32 %v1844
        %v1881 = vcvt.s32.f32 %v1845
        %v1882 = vcvt.s32.f32 %v1846
        %v1883 = vcvt.s32.f32 %v1847
        %v1884 = vcvt.s32.f32 %v1848
        %v1885 = vcvt.s32.f32 %v1849
        %v1886 = vcvt.s32.f32 %v1850
        %v1887 = vcvt.s32.f32 %v1851
        %v1888 = vcvt.s32.f32 %v1852
        %v1889 = vcvt.s32.f32 %v1853
        %v1890 = vcvt.s32.f32 %v1854
        %v1891 = vcvt.s32.f32 %v1855
        %v1892 = vcvt.s32.f32 %v1856
        %v1893 = vcvt.s32.f32 %v1857
        %v1894 = vcvt.s32.f32 %v1858
        %v1895 = vcvt.s32.f32 %v1859
        %v1896 = vcvt.s32.f32 %v1860
        %v1897 = vcvt.s32.f32 %v1861
        %v1898 = vcvt.s32.f32 %v1862
        %v1899 = vcvt.s32.f32 %v1863
        %v1900 = vcvt.s32.f32 %v1864
        %v1901 = vcvt.s32.f32 %v1865
        %v1902 = vcvt.s32.f32 %v1866
        %v1903 = vcvt.s32.f32 %v1867
        %v1904 = vcvt.s32.f32 %v1868
        %v1905 = vcvt.s32.f32 %v1869
        %v1906 = vcvt.s32.f32 %v1870
        %v1907 = vcvt.s32.f32 %v1871
        %v1908 = vcvt.s32.f32 %v1872
        %v1909 = vcvt.s32.f32 %v1873
        %v1910 = vcvt.s32.f32 %v1874
        %v1911 = vcvt.s32.f32 %v1875
        %v1912 = vcvt.s32.f32 %v1876
        %v1913 = vcvt.s32.f32 %v1877
        %v1914 = vcvt.s32.f32 %v1878
        %v1915 = vcvt.s32.f32 %v1879
        %v1916 = vpack.c.bf16 %v1881, %v1880
        %v1917 = vpack.c.bf16 %v1883, %v1882
        %v1918 = vpack.c.bf16 %v1885, %v1884
        %v1919 = vpack.c.bf16 %v1887, %v1886
        %v1920 = vpack.c.bf16 %v1889, %v1888
        %v1921 = vpack.c.bf16 %v1891, %v1890
        %v1922 = vpack.c.bf16 %v1893, %v1892
        %v1923 = vpack.c.bf16 %v1895, %v1894
        %v1924 = vpack.c.bf16 %v1897, %v1896
        %v1925 = vpack.c.bf16 %v1899, %v1898
        %v1926 = vpack.c.bf16 %v1901, %v1900
        %v1927 = vpack.c.bf16 %v1903, %v1902
        %v1928 = vpack.c.bf16 %v1905, %v1904
        %v1929 = vpack.c.bf16 %v1907, %v1906
        %v1930 = vpack.c.bf16 %v1909, %v1908
        %v1931 = vpack.c.bf16 %v1911, %v1910
        %v1932 = vpack.c.bf16 %v1913, %v1912
        %v1933 = vpack.c.bf16 %v1915, %v1914
        %v1934 = vld [vmem:[#allocation2] sm:$0xff]
        %v1935 = vld [vmem:[#allocation2 + $0x8] sm:$0xff]
        %v1936 = vld [vmem:[#allocation2 + $0x10] sm:$0xff]
        %v1937 = vld [vmem:[#allocation2 + $0x18] sm:$0xff]
        %v1938 = vld [vmem:[#allocation2 + $0x20] sm:$0xff]
        %v1939 = vld [vmem:[#allocation2 + $0x28] sm:$0xff]
        %v1940 = vld [vmem:[#allocation2 + $0x30] sm:$0xff]
        %v1941 = vld [vmem:[#allocation2 + $0x38] sm:$0xff]
        %v1942 = vld [vmem:[#allocation2 + $0x40] sm:$0xff]
        %v1943 = vld [vmem:[#allocation2 + $0x48] sm:$0xff]
        %v1944 = vld [vmem:[#allocation2 + $0x50] sm:$0xff]
        %v1945 = vld [vmem:[#allocation2 + $0x58] sm:$0xff]
        %v1946 = vld [vmem:[#allocation2 + $0x60] sm:$0xff]
        %v1947 = vld [vmem:[#allocation2 + $0x68] sm:$0xff]
        %v1948 = vld [vmem:[#allocation2 + $0x70] sm:$0xff]
        %v1949 = vld [vmem:[#allocation2 + $0x78] sm:$0xff]
        %v1950 = vld [vmem:[#allocation2 + $0x80] sm:$0xff]
        %v1951 = vld [vmem:[#allocation2 + $0x88] sm:$0xff]
        %v1952 = vld [vmem:[#allocation2 + $0x90] sm:$0xff]
        %v1953 = vld [vmem:[#allocation2 + $0x98] sm:$0xff]
        %v1954 = vld [vmem:[#allocation2 + $0xa0] sm:$0xff]
        %v1955 = vld [vmem:[#allocation2 + $0xa8] sm:$0xff]
        %v1956 = vld [vmem:[#allocation2 + $0xb0] sm:$0xff]
        %v1957 = vld [vmem:[#allocation2 + $0xb8] sm:$0xff]
        %v1958 = vld [vmem:[#allocation2 + $0xc0] sm:$0xff]
        %v1959 = vld [vmem:[#allocation2 + $0xc8] sm:$0xff]
        %v1960 = vld [vmem:[#allocation2 + $0xd0] sm:$0xff]
        %v1961 = vld [vmem:[#allocation2 + $0xd8] sm:$0xff]
        %v1962 = vld [vmem:[#allocation2 + $0xe0] sm:$0xff]
        %v1963 = vld [vmem:[#allocation2 + $0xe8] sm:$0xff]
        %v1964 = vld [vmem:[#allocation2 + $0xf0] sm:$0xff]
        %v1965 = vld [vmem:[#allocation2 + $0xf8] sm:$0xff]
        %v1966 = vld [vmem:[#allocation2 + $0x100] sm:$0xff]
        %v1967 = vld [vmem:[#allocation2 + $0x108] sm:$0xff]
        %v1968 = vld [vmem:[#allocation2 + $0x110] sm:$0xff]
        %v1969 = vld [vmem:[#allocation2 + $0x118] sm:$0xff]
        %s1970 = scalar_lea.vmem [#allocation6], 6
        %v1971 = vld [vmem:[%s1970] sm:$0x3]
        %v1973 = vsel %vm452, %v1916, 0
        %v1976 = vsel %vm452, %v1917, 0
        %v1979 = vsel %vm452, %v1918, 0
        %v1982 = vsel %vm452, %v1919, 0
        %v1985 = vsel %vm452, %v1920, 0
        %v1988 = vsel %vm452, %v1921, 0
        %v1991 = vsel %vm452, %v1922, 0
        %v1994 = vsel %vm452, %v1923, 0
        %v1997 = vsel %vm452, %v1924, 0
        %v2000 = vsel %vm452, %v1925, 0
        %v2003 = vsel %vm452, %v1926, 0
        %v2006 = vsel %vm452, %v1927, 0
        %v2009 = vsel %vm452, %v1928, 0
        %v2012 = vsel %vm452, %v1929, 0
        %v2015 = vsel %vm452, %v1930, 0
        %v2018 = vsel %vm452, %v1931, 0
        %v2021 = vsel %vm452, %v1932, 0
        %v2024 = vsel %vm452, %v1933, 0
        %v2027 = vsel %vm507, %v1971, 0
        %2029 = vmatprep.subr.bf16.mxu0 0
        %2030 = vmatpush1.bf16.msra.mxu0 %v2027
        %2031 = vmatprep.subr.bf16.mxu0 0
        %2032 = vmatpush1.bf16.msra.mxu0 0
        %2033 = vmatprep.subr.bf16.mxu0 0
        %2034 = vmatpush1.bf16.msra.mxu0 0
        %2035 = vmatprep.subr.bf16.mxu0 0
        %2036 = vmatpush1.bf16.msra.mxu0 0
        %2037 = vmatprep.subr.bf16.mxu0 0
        %2038 = vmatpush1.bf16.msra.mxu0 0
        %2039 = vmatprep.subr.bf16.mxu0 0
        %2040 = vmatpush1.bf16.msra.mxu0 0
        %2041 = vmatprep.subr.bf16.mxu0 0
        %2042 = vmatpush1.bf16.msra.mxu0 0
        %2043 = vmatprep.subr.bf16.mxu0 0
        %2044 = vmatpush1.bf16.msra.mxu0 0
        %2045 = vmatprep.subr.bf16.mxu0 0
        %2046 = vmatpush1.bf16.msra.mxu0 0
        %2047 = vmatprep.subr.bf16.mxu0 0
        %2048 = vmatpush1.bf16.msra.mxu0 0
        %2049 = vmatprep.subr.bf16.mxu0 0
        %2050 = vmatpush1.bf16.msra.mxu0 0
        %2051 = vmatprep.subr.bf16.mxu0 0
        %2052 = vmatpush1.bf16.msra.mxu0 0
        %2053 = vmatprep.subr.bf16.mxu0 0
        %2054 = vmatpush1.bf16.msra.mxu0 0
        %2055 = vmatprep.subr.bf16.mxu0 0
        %2056 = vmatpush1.bf16.msra.mxu0 0
        %2057 = vmatprep.subr.bf16.mxu0 0
        %2058 = vmatpush1.bf16.msra.mxu0 0
        %2059 = vmatprep.subr.bf16.mxu0 0
        %2060 = vmatpush1.bf16.msra.mxu0 0
        %2061 = vmatprep.mubr.bf16.mxu0 0
        %2062 = vmatmul.mubr.bf16.gmra.mrb[0].mxu0 %v1973
        %v2063 = vpop.f32.mrb[0].mxu0
        %v2064 = vadd.f32 0.0, %v2063
        %v2065 = vpop.f32.mrb[0].mxu0
        %v2066 = vpop.f32.mrb[0].mxu0
        %v2067 = vadd.f32 0.0, %v2066
        %v2068 = vpop.f32.mrb[0].mxu0
        %2069 = vmatprep.mubr.bf16.mxu0 0
        %2070 = vmatmul.mubr.bf16.gmra.mrb[0].mxu0 %v1976
        %v2071 = vpop.f32.mrb[0].mxu0
        %v2072 = vadd.f32 0.0, %v2071
        %v2073 = vpop.f32.mrb[0].mxu0
        %v2074 = vpop.f32.mrb[0].mxu0
        %v2075 = vadd.f32 0.0, %v2074
        %v2076 = vpop.f32.mrb[0].mxu0
        %2077 = vmatprep.mubr.bf16.mxu0 0
        %2078 = vmatmul.mubr.bf16.gmra.mrb[0].mxu0 %v1979
        %v2079 = vpop.f32.mrb[0].mxu0
        %v2080 = vadd.f32 0.0, %v2079
        %v2081 = vpop.f32.mrb[0].mxu0
        %v2082 = vpop.f32.mrb[0].mxu0
        %v2083 = vadd.f32 0.0, %v2082
        %v2084 = vpop.f32.mrb[0].mxu0
        %2085 = vmatprep.mubr.bf16.mxu0 0
        %2086 = vmatmul.mubr.bf16.gmra.mrb[0].mxu0 %v1982
        %v2087 = vpop.f32.mrb[0].mxu0
        %v2088 = vadd.f32 0.0, %v2087
        %v2089 = vpop.f32.mrb[0].mxu0
        %v2090 = vpop.f32.mrb[0].mxu0
        %v2091 = vadd.f32 0.0, %v2090
        %v2092 = vpop.f32.mrb[0].mxu0
        %2093 = vmatprep.mubr.bf16.mxu0 0
        %2094 = vmatmul.mubr.bf16.gmra.mrb[0].mxu0 %v1985
        %v2095 = vpop.f32.mrb[0].mxu0
        %v2096 = vadd.f32 0.0, %v2095
        %v2097 = vpop.f32.mrb[0].mxu0
        %v2098 = vpop.f32.mrb[0].mxu0
        %v2099 = vadd.f32 0.0, %v2098
        %v2100 = vpop.f32.mrb[0].mxu0
        %2101 = vmatprep.mubr.bf16.mxu0 0
        %2102 = vmatmul.mubr.bf16.gmra.mrb[0].mxu0 %v1988
        %v2103 = vpop.f32.mrb[0].mxu0
        %v2104 = vadd.f32 0.0, %v2103
        %v2105 = vpop.f32.mrb[0].mxu0
        %v2106 = vpop.f32.mrb[0].mxu0
        %v2107 = vadd.f32 0.0, %v2106
        %v2108 = vpop.f32.mrb[0].mxu0
        %2109 = vmatprep.mubr.bf16.mxu0 0
        %2110 = vmatmul.mubr.bf16.gmra.mrb[0].mxu0 %v1991
        %v2111 = vpop.f32.mrb[0].mxu0
        %v2112 = vadd.f32 0.0, %v2111
        %v2113 = vpop.f32.mrb[0].mxu0
        %v2114 = vpop.f32.mrb[0].mxu0
        %v2115 = vadd.f32 0.0, %v2114
        %v2116 = vpop.f32.mrb[0].mxu0
        %2117 = vmatprep.mubr.bf16.mxu0 0
        %2118 = vmatmul.mubr.bf16.gmra.mrb[0].mxu0 %v1994
        %v2119 = vpop.f32.mrb[0].mxu0
        %v2120 = vadd.f32 0.0, %v2119
        %v2121 = vpop.f32.mrb[0].mxu0
        %v2122 = vpop.f32.mrb[0].mxu0
        %v2123 = vadd.f32 0.0, %v2122
        %v2124 = vpop.f32.mrb[0].mxu0
        %2125 = vmatprep.mubr.bf16.mxu0 0
        %2126 = vmatmul.mubr.bf16.gmra.mrb[0].mxu0 %v1997
        %v2127 = vpop.f32.mrb[0].mxu0
        %v2128 = vadd.f32 0.0, %v2127
        %v2129 = vpop.f32.mrb[0].mxu0
        %v2130 = vpop.f32.mrb[0].mxu0
        %v2131 = vadd.f32 0.0, %v2130
        %v2132 = vpop.f32.mrb[0].mxu0
        %2133 = vmatprep.mubr.bf16.mxu0 0
        %2134 = vmatmul.mubr.bf16.gmra.mrb[0].mxu0 %v2000
        %v2135 = vpop.f32.mrb[0].mxu0
        %v2136 = vadd.f32 0.0, %v2135
        %v2137 = vpop.f32.mrb[0].mxu0
        %v2138 = vpop.f32.mrb[0].mxu0
        %v2139 = vadd.f32 0.0, %v2138
        %v2140 = vpop.f32.mrb[0].mxu0
        %2141 = vmatprep.mubr.bf16.mxu0 0
        %2142 = vmatmul.mubr.bf16.gmra.mrb[0].mxu0 %v2003
        %v2143 = vpop.f32.mrb[0].mxu0
        %v2144 = vadd.f32 0.0, %v2143
        %v2145 = vpop.f32.mrb[0].mxu0
        %v2146 = vpop.f32.mrb[0].mxu0
        %v2147 = vadd.f32 0.0, %v2146
        %v2148 = vpop.f32.mrb[0].mxu0
        %2149 = vmatprep.mubr.bf16.mxu0 0
        %2150 = vmatmul.mubr.bf16.gmra.mrb[0].mxu0 %v2006
        %v2151 = vpop.f32.mrb[0].mxu0
        %v2152 = vadd.f32 0.0, %v2151
        %v2153 = vpop.f32.mrb[0].mxu0
        %v2154 = vpop.f32.mrb[0].mxu0
        %v2155 = vadd.f32 0.0, %v2154
        %v2156 = vpop.f32.mrb[0].mxu0
        %2157 = vmatprep.mubr.bf16.mxu0 0
        %2158 = vmatmul.mubr.bf16.gmra.mrb[0].mxu0 %v2009
        %v2159 = vpop.f32.mrb[0].mxu0
        %v2160 = vadd.f32 0.0, %v2159
        %v2161 = vpop.f32.mrb[0].mxu0
        %v2162 = vpop.f32.mrb[0].mxu0
        %v2163 = vadd.f32 0.0, %v2162
        %v2164 = vpop.f32.mrb[0].mxu0
        %2165 = vmatprep.mubr.bf16.mxu0 0
        %2166 = vmatmul.mubr.bf16.gmra.mrb[0].mxu0 %v2012
        %v2167 = vpop.f32.mrb[0].mxu0
        %v2168 = vadd.f32 0.0, %v2167
        %v2169 = vpop.f32.mrb[0].mxu0
        %v2170 = vpop.f32.mrb[0].mxu0
        %v2171 = vadd.f32 0.0, %v2170
        %v2172 = vpop.f32.mrb[0].mxu0
        %2173 = vmatprep.mubr.bf16.mxu0 0
        %2174 = vmatmul.mubr.bf16.gmra.mrb[0].mxu0 %v2015
        %v2175 = vpop.f32.mrb[0].mxu0
        %v2176 = vadd.f32 0.0, %v2175
        %v2177 = vpop.f32.mrb[0].mxu0
        %v2178 = vpop.f32.mrb[0].mxu0
        %v2179 = vadd.f32 0.0, %v2178
        %v2180 = vpop.f32.mrb[0].mxu0
        %2181 = vmatprep.mubr.bf16.mxu0 0
        %2182 = vmatmul.mubr.bf16.gmra.mrb[0].mxu0 %v2018
        %v2183 = vpop.f32.mrb[0].mxu0
        %v2184 = vadd.f32 0.0, %v2183
        %v2185 = vpop.f32.mrb[0].mxu0
        %v2186 = vpop.f32.mrb[0].mxu0
        %v2187 = vadd.f32 0.0, %v2186
        %v2188 = vpop.f32.mrb[0].mxu0
        %2189 = vmatprep.mubr.bf16.mxu0 0
        %2190 = vmatmul.mubr.bf16.gmra.mrb[0].mxu0 %v2021
        %v2191 = vpop.f32.mrb[0].mxu0
        %v2192 = vadd.f32 0.0, %v2191
        %v2193 = vpop.f32.mrb[0].mxu0
        %v2194 = vpop.f32.mrb[0].mxu0
        %v2195 = vadd.f32 0.0, %v2194
        %v2196 = vpop.f32.mrb[0].mxu0
        %2197 = vmatprep.mubr.bf16.mxu0 0
        %2198 = vmatmul.mubr.bf16.gmra.mrb[0].mxu0 %v2024
        %v2199 = vpop.f32.mrb[0].mxu0
        %v2200 = vadd.f32 0.0, %v2199
        %v2201 = vpop.f32.mrb[0].mxu0
        %v2202 = vpop.f32.mrb[0].mxu0
        %v2203 = vadd.f32 0.0, %v2202
        %v2204 = vpop.f32.mrb[0].mxu0
        %2205 = vdwg.mxu0
        %v2206 = vadd.f32 %v1934, %v2064
        %v2207 = vadd.f32 %v1935, %v2067
        %v2208 = vadd.f32 %v1936, %v2072
        %v2209 = vadd.f32 %v1937, %v2075
        %v2210 = vadd.f32 %v1938, %v2080
        %v2211 = vadd.f32 %v1939, %v2083
        %v2212 = vadd.f32 %v1940, %v2088
        %v2213 = vadd.f32 %v1941, %v2091
        %v2214 = vadd.f32 %v1942, %v2096
        %v2215 = vadd.f32 %v1943, %v2099
        %v2216 = vadd.f32 %v1944, %v2104
        %v2217 = vadd.f32 %v1945, %v2107
        %v2218 = vadd.f32 %v1946, %v2112
        %v2219 = vadd.f32 %v1947, %v2115
        %v2220 = vadd.f32 %v1948, %v2120
        %v2221 = vadd.f32 %v1949, %v2123
        %v2222 = vadd.f32 %v1950, %v2128
        %v2223 = vadd.f32 %v1951, %v2131
        %v2224 = vadd.f32 %v1952, %v2136
        %v2225 = vadd.f32 %v1953, %v2139
        %v2226 = vadd.f32 %v1954, %v2144
        %v2227 = vadd.f32 %v1955, %v2147
        %v2228 = vadd.f32 %v1956, %v2152
        %v2229 = vadd.f32 %v1957, %v2155
        %v2230 = vadd.f32 %v1958, %v2160
        %v2231 = vadd.f32 %v1959, %v2163
        %v2232 = vadd.f32 %v1960, %v2168
        %v2233 = vadd.f32 %v1961, %v2171
        %v2234 = vadd.f32 %v1962, %v2176
        %v2235 = vadd.f32 %v1963, %v2179
        %v2236 = vadd.f32 %v1964, %v2184
        %v2237 = vadd.f32 %v1965, %v2187
        %v2238 = vadd.f32 %v1966, %v2192
        %v2239 = vadd.f32 %v1967, %v2195
        %v2240 = vadd.f32 %v1968, %v2200
        %v2241 = vadd.f32 %v1969, %v2203
        %2242 = vst [vmem:[#allocation2] sm:$0xff] %v2206
        %2243 = vst [vmem:[#allocation2 + $0x8] sm:$0xff] %v2207
        %2244 = vst [vmem:[#allocation2 + $0x10] sm:$0xff] %v2208
        %2245 = vst [vmem:[#allocation2 + $0x18] sm:$0xff] %v2209
        %2246 = vst [vmem:[#allocation2 + $0x20] sm:$0xff] %v2210
        %2247 = vst [vmem:[#allocation2 + $0x28] sm:$0xff] %v2211
        %2248 = vst [vmem:[#allocation2 + $0x30] sm:$0xff] %v2212
        %2249 = vst [vmem:[#allocation2 + $0x38] sm:$0xff] %v2213
        %2250 = vst [vmem:[#allocation2 + $0x40] sm:$0xff] %v2214
        %2251 = vst [vmem:[#allocation2 + $0x48] sm:$0xff] %v2215
        %2252 = vst [vmem:[#allocation2 + $0x50] sm:$0xff] %v2216
        %2253 = vst [vmem:[#allocation2 + $0x58] sm:$0xff] %v2217
        %2254 = vst [vmem:[#allocation2 + $0x60] sm:$0xff] %v2218
        %2255 = vst [vmem:[#allocation2 + $0x68] sm:$0xff] %v2219
        %2256 = vst [vmem:[#allocation2 + $0x70] sm:$0xff] %v2220
        %2257 = vst [vmem:[#allocation2 + $0x78] sm:$0xff] %v2221
        %2258 = vst [vmem:[#allocation2 + $0x80] sm:$0xff] %v2222
        %2259 = vst [vmem:[#allocation2 + $0x88] sm:$0xff] %v2223
        %2260 = vst [vmem:[#allocation2 + $0x90] sm:$0xff] %v2224
        %2261 = vst [vmem:[#allocation2 + $0x98] sm:$0xff] %v2225
        %2262 = vst [vmem:[#allocation2 + $0xa0] sm:$0xff] %v2226
        %2263 = vst [vmem:[#allocation2 + $0xa8] sm:$0xff] %v2227
        %2264 = vst [vmem:[#allocation2 + $0xb0] sm:$0xff] %v2228
        %2265 = vst [vmem:[#allocation2 + $0xb8] sm:$0xff] %v2229
        %2266 = vst [vmem:[#allocation2 + $0xc0] sm:$0xff] %v2230
        %2267 = vst [vmem:[#allocation2 + $0xc8] sm:$0xff] %v2231
        %2268 = vst [vmem:[#allocation2 + $0xd0] sm:$0xff] %v2232
        %2269 = vst [vmem:[#allocation2 + $0xd8] sm:$0xff] %v2233
        %2270 = vst [vmem:[#allocation2 + $0xe0] sm:$0xff] %v2234
        %2271 = vst [vmem:[#allocation2 + $0xe8] sm:$0xff] %v2235
        %2272 = vst [vmem:[#allocation2 + $0xf0] sm:$0xff] %v2236
        %2273 = vst [vmem:[#allocation2 + $0xf8] sm:$0xff] %v2237
        %2274 = vst [vmem:[#allocation2 + $0x100] sm:$0xff] %v2238
        %2275 = vst [vmem:[#allocation2 + $0x108] sm:$0xff] %v2239
        %2276 = vst [vmem:[#allocation2 + $0x110] sm:$0xff] %v2240
        %2277 = vst [vmem:[#allocation2 + $0x118] sm:$0xff] %v2241
        %v2278 = vld [vmem:[%s185 + $0x13] sm:$0xff]
        %v2279 = vld [vmem:[%s185 + $0x1b] sm:$0xff]
        %v2280 = vld [vmem:[%s185 + $0x23] sm:$0xff]
        %v2281 = vld [vmem:[%s185 + $0x2b] sm:$0xff]
        %v2282 = vld [vmem:[%s185 + $0x33] sm:$0xff]
        %v2283 = vld [vmem:[%s185 + $0x3b] sm:$0xff]
        %v2284 = vld [vmem:[%s185 + $0x43] sm:$0xff]
        %v2285 = vld [vmem:[%s185 + $0x4b] sm:$0xff]
        %v2286 = vld [vmem:[%s185 + $0x53] sm:$0xff]
        %v2287 = vld [vmem:[%s185 + $0x5b] sm:$0xff]
        %v2288 = vld [vmem:[%s185 + $0x63] sm:$0xff]
        %v2289 = vld [vmem:[%s185 + $0x6b] sm:$0xff]
        %v2290 = vld [vmem:[%s185 + $0x73] sm:$0xff]
        %v2291 = vld [vmem:[%s185 + $0x7b] sm:$0xff]
        %v2292 = vld [vmem:[%s185 + $0x83] sm:$0xff]
        %v2293 = vld [vmem:[%s185 + $0x8b] sm:$0xff]
        %v2294 = vld [vmem:[%s185 + $0x93] sm:$0xff]
        %v2295 = vld [vmem:[%s185 + $0x9b] sm:$0xff]
        %v2296 = vld [vmem:[%s185 + $0xa3] sm:$0xff]
        %v2297 = vld [vmem:[%s185 + $0xab] sm:$0xff]
        %v2298 = vld [vmem:[%s185 + $0xb3] sm:$0xff]
        %v2299 = vld [vmem:[%s185 + $0xbb] sm:$0xff]
        %v2300 = vld [vmem:[%s185 + $0xc3] sm:$0xff]
        %v2301 = vld [vmem:[%s185 + $0xcb] sm:$0xff]
        %v2302 = vld [vmem:[%s185 + $0xd3] sm:$0xff]
        %v2303 = vld [vmem:[%s185 + $0xdb] sm:$0xff]
        %v2304 = vld [vmem:[%s185 + $0xe3] sm:$0xff]
        %v2305 = vld [vmem:[%s185 + $0xeb] sm:$0xff]
        %v2306 = vld [vmem:[%s185 + $0xf3] sm:$0xff]
        %v2307 = vld [vmem:[%s185 + $0xfb] sm:$0xff]
        %v2308 = vld [vmem:[%s185 + $0x103] sm:$0xff]
        %v2309 = vld [vmem:[%s185 + $0x10b] sm:$0xff]
        %v2310 = vld [vmem:[%s185 + $0x113] sm:$0xff]
        %v2311 = vld [vmem:[%s185 + $0x11b] sm:$0xff]
        %v2312 = vld [vmem:[%s185 + $0x123] sm:$0xff]
        %v2313 = vld [vmem:[%s185 + $0x12b] sm:$0xff]
        %vm2314 = vcmp.ge.f32.partialorder %v2278, 0.0
        %vm2315 = vcmp.ge.f32.partialorder %v2279, 0.0
        %vm2316 = vcmp.ge.f32.partialorder %v2280, 0.0
        %vm2317 = vcmp.ge.f32.partialorder %v2281, 0.0
        %vm2318 = vcmp.ge.f32.partialorder %v2282, 0.0
        %vm2319 = vcmp.ge.f32.partialorder %v2283, 0.0
        %vm2320 = vcmp.ge.f32.partialorder %v2284, 0.0
        %vm2321 = vcmp.ge.f32.partialorder %v2285, 0.0
        %vm2322 = vcmp.ge.f32.partialorder %v2286, 0.0
        %vm2323 = vcmp.ge.f32.partialorder %v2287, 0.0
        %vm2324 = vcmp.ge.f32.partialorder %v2288, 0.0
        %vm2325 = vcmp.ge.f32.partialorder %v2289, 0.0
        %vm2326 = vcmp.ge.f32.partialorder %v2290, 0.0
        %vm2327 = vcmp.ge.f32.partialorder %v2291, 0.0
        %vm2328 = vcmp.ge.f32.partialorder %v2292, 0.0
        %vm2329 = vcmp.ge.f32.partialorder %v2293, 0.0
        %vm2330 = vcmp.ge.f32.partialorder %v2294, 0.0
        %vm2331 = vcmp.ge.f32.partialorder %v2295, 0.0
        %vm2332 = vcmp.ge.f32.partialorder %v2296, 0.0
        %vm2333 = vcmp.ge.f32.partialorder %v2297, 0.0
        %vm2334 = vcmp.ge.f32.partialorder %v2298, 0.0
        %vm2335 = vcmp.ge.f32.partialorder %v2299, 0.0
        %vm2336 = vcmp.ge.f32.partialorder %v2300, 0.0
        %vm2337 = vcmp.ge.f32.partialorder %v2301, 0.0
        %vm2338 = vcmp.ge.f32.partialorder %v2302, 0.0
        %vm2339 = vcmp.ge.f32.partialorder %v2303, 0.0
        %vm2340 = vcmp.ge.f32.partialorder %v2304, 0.0
        %vm2341 = vcmp.ge.f32.partialorder %v2305, 0.0
        %vm2342 = vcmp.ge.f32.partialorder %v2306, 0.0
        %vm2343 = vcmp.ge.f32.partialorder %v2307, 0.0
        %vm2344 = vcmp.ge.f32.partialorder %v2308, 0.0
        %vm2345 = vcmp.ge.f32.partialorder %v2309, 0.0
        %vm2346 = vcmp.ge.f32.partialorder %v2310, 0.0
        %vm2347 = vcmp.ge.f32.partialorder %v2311, 0.0
        %vm2348 = vcmp.ge.f32.partialorder %v2312, 0.0
        %vm2349 = vcmp.ge.f32.partialorder %v2313, 0.0
        %v2350 = vsel %vm2314, 1, 0
        %v2351 = vsel %vm2315, 1, 0
        %v2352 = vsel %vm2316, 1, 0
        %v2353 = vsel %vm2317, 1, 0
        %v2354 = vsel %vm2318, 1, 0
        %v2355 = vsel %vm2319, 1, 0
        %v2356 = vsel %vm2320, 1, 0
        %v2357 = vsel %vm2321, 1, 0
        %v2358 = vsel %vm2322, 1, 0
        %v2359 = vsel %vm2323, 1, 0
        %v2360 = vsel %vm2324, 1, 0
        %v2361 = vsel %vm2325, 1, 0
        %v2362 = vsel %vm2326, 1, 0
        %v2363 = vsel %vm2327, 1, 0
        %v2364 = vsel %vm2328, 1, 0
        %v2365 = vsel %vm2329, 1, 0
        %v2366 = vsel %vm2330, 1, 0
        %v2367 = vsel %vm2331, 1, 0
        %v2368 = vsel %vm2332, 1, 0
        %v2369 = vsel %vm2333, 1, 0
        %v2370 = vsel %vm2334, 1, 0
        %v2371 = vsel %vm2335, 1, 0
        %v2372 = vsel %vm2336, 1, 0
        %v2373 = vsel %vm2337, 1, 0
        %v2374 = vsel %vm2338, 1, 0
        %v2375 = vsel %vm2339, 1, 0
        %v2376 = vsel %vm2340, 1, 0
        %v2377 = vsel %vm2341, 1, 0
        %v2378 = vsel %vm2342, 1, 0
        %v2379 = vsel %vm2343, 1, 0
        %v2380 = vsel %vm2344, 1, 0
        %v2381 = vsel %vm2345, 1, 0
        %v2382 = vsel %vm2346, 1, 0
        %v2383 = vsel %vm2347, 1, 0
        %v2384 = vsel %vm2348, 1, 0
        %v2385 = vsel %vm2349, 1, 0
        %v2386 = vcvt.s32.f32 %v2350
        %v2387 = vcvt.s32.f32 %v2351
        %v2388 = vcvt.s32.f32 %v2352
        %v2389 = vcvt.s32.f32 %v2353
        %v2390 = vcvt.s32.f32 %v2354
        %v2391 = vcvt.s32.f32 %v2355
        %v2392 = vcvt.s32.f32 %v2356
        %v2393 = vcvt.s32.f32 %v2357
        %v2394 = vcvt.s32.f32 %v2358
        %v2395 = vcvt.s32.f32 %v2359
        %v2396 = vcvt.s32.f32 %v2360
        %v2397 = vcvt.s32.f32 %v2361
        %v2398 = vcvt.s32.f32 %v2362
        %v2399 = vcvt.s32.f32 %v2363
        %v2400 = vcvt.s32.f32 %v2364
        %v2401 = vcvt.s32.f32 %v2365
        %v2402 = vcvt.s32.f32 %v2366
        %v2403 = vcvt.s32.f32 %v2367
        %v2404 = vcvt.s32.f32 %v2368
        %v2405 = vcvt.s32.f32 %v2369
        %v2406 = vcvt.s32.f32 %v2370
        %v2407 = vcvt.s32.f32 %v2371
        %v2408 = vcvt.s32.f32 %v2372
        %v2409 = vcvt.s32.f32 %v2373
        %v2410 = vcvt.s32.f32 %v2374
        %v2411 = vcvt.s32.f32 %v2375
        %v2412 = vcvt.s32.f32 %v2376
        %v2413 = vcvt.s32.f32 %v2377
        %v2414 = vcvt.s32.f32 %v2378
        %v2415 = vcvt.s32.f32 %v2379
        %v2416 = vcvt.s32.f32 %v2380
        %v2417 = vcvt.s32.f32 %v2381
        %v2418 = vcvt.s32.f32 %v2382
        %v2419 = vcvt.s32.f32 %v2383
        %v2420 = vcvt.s32.f32 %v2384
        %v2421 = vcvt.s32.f32 %v2385
        %v2422 = vpack.c.bf16 %v2387, %v2386
        %v2423 = vpack.c.bf16 %v2389, %v2388
        %v2424 = vpack.c.bf16 %v2391, %v2390
        %v2425 = vpack.c.bf16 %v2393, %v2392
        %v2426 = vpack.c.bf16 %v2395, %v2394
        %v2427 = vpack.c.bf16 %v2397, %v2396
        %v2428 = vpack.c.bf16 %v2399, %v2398
        %v2429 = vpack.c.bf16 %v2401, %v2400
        %v2430 = vpack.c.bf16 %v2403, %v2402
        %v2431 = vpack.c.bf16 %v2405, %v2404
        %v2432 = vpack.c.bf16 %v2407, %v2406
        %v2433 = vpack.c.bf16 %v2409, %v2408
        %v2434 = vpack.c.bf16 %v2411, %v2410
        %v2435 = vpack.c.bf16 %v2413, %v2412
        %v2436 = vpack.c.bf16 %v2415, %v2414
        %v2437 = vpack.c.bf16 %v2417, %v2416
        %v2438 = vpack.c.bf16 %v2419, %v2418
        %v2439 = vpack.c.bf16 %v2421, %v2420
        %v2440 = vld [vmem:[#allocation2] sm:$0xff]
        %v2441 = vld [vmem:[#allocation2 + $0x8] sm:$0xff]
        %v2442 = vld [vmem:[#allocation2 + $0x10] sm:$0xff]
        %v2443 = vld [vmem:[#allocation2 + $0x18] sm:$0xff]
        %v2444 = vld [vmem:[#allocation2 + $0x20] sm:$0xff]
        %v2445 = vld [vmem:[#allocation2 + $0x28] sm:$0xff]
        %v2446 = vld [vmem:[#allocation2 + $0x30] sm:$0xff]
        %v2447 = vld [vmem:[#allocation2 + $0x38] sm:$0xff]
        %v2448 = vld [vmem:[#allocation2 + $0x40] sm:$0xff]
        %v2449 = vld [vmem:[#allocation2 + $0x48] sm:$0xff]
        %v2450 = vld [vmem:[#allocation2 + $0x50] sm:$0xff]
        %v2451 = vld [vmem:[#allocation2 + $0x58] sm:$0xff]
        %v2452 = vld [vmem:[#allocation2 + $0x60] sm:$0xff]
        %v2453 = vld [vmem:[#allocation2 + $0x68] sm:$0xff]
        %v2454 = vld [vmem:[#allocation2 + $0x70] sm:$0xff]
        %v2455 = vld [vmem:[#allocation2 + $0x78] sm:$0xff]
        %v2456 = vld [vmem:[#allocation2 + $0x80] sm:$0xff]
        %v2457 = vld [vmem:[#allocation2 + $0x88] sm:$0xff]
        %v2458 = vld [vmem:[#allocation2 + $0x90] sm:$0xff]
        %v2459 = vld [vmem:[#allocation2 + $0x98] sm:$0xff]
        %v2460 = vld [vmem:[#allocation2 + $0xa0] sm:$0xff]
        %v2461 = vld [vmem:[#allocation2 + $0xa8] sm:$0xff]
        %v2462 = vld [vmem:[#allocation2 + $0xb0] sm:$0xff]
        %v2463 = vld [vmem:[#allocation2 + $0xb8] sm:$0xff]
        %v2464 = vld [vmem:[#allocation2 + $0xc0] sm:$0xff]
        %v2465 = vld [vmem:[#allocation2 + $0xc8] sm:$0xff]
        %v2466 = vld [vmem:[#allocation2 + $0xd0] sm:$0xff]
        %v2467 = vld [vmem:[#allocation2 + $0xd8] sm:$0xff]
        %v2468 = vld [vmem:[#allocation2 + $0xe0] sm:$0xff]
        %v2469 = vld [vmem:[#allocation2 + $0xe8] sm:$0xff]
        %v2470 = vld [vmem:[#allocation2 + $0xf0] sm:$0xff]
        %v2471 = vld [vmem:[#allocation2 + $0xf8] sm:$0xff]
        %v2472 = vld [vmem:[#allocation2 + $0x100] sm:$0xff]
        %v2473 = vld [vmem:[#allocation2 + $0x108] sm:$0xff]
        %v2474 = vld [vmem:[#allocation2 + $0x110] sm:$0xff]
        %v2475 = vld [vmem:[#allocation2 + $0x118] sm:$0xff]
        %s2476 = scalar_lea.vmem [#allocation6], 8
        %v2477 = vld [vmem:[%s2476] sm:$0x3]
        %v2479 = vsel %vm452, %v2422, 0
        %v2482 = vsel %vm452, %v2423, 0
        %v2485 = vsel %vm452, %v2424, 0
        %v2488 = vsel %vm452, %v2425, 0
        %v2491 = vsel %vm452, %v2426, 0
        %v2494 = vsel %vm452, %v2427, 0
        %v2497 = vsel %vm452, %v2428, 0
        %v2500 = vsel %vm452, %v2429, 0
        %v2503 = vsel %vm452, %v2430, 0
        %v2506 = vsel %vm452, %v2431, 0
        %v2509 = vsel %vm452, %v2432, 0
        %v2512 = vsel %vm452, %v2433, 0
        %v2515 = vsel %vm452, %v2434, 0
        %v2518 = vsel %vm452, %v2435, 0
        %v2521 = vsel %vm452, %v2436, 0
        %v2524 = vsel %vm452, %v2437, 0
        %v2527 = vsel %vm452, %v2438, 0
        %v2530 = vsel %vm452, %v2439, 0
        %v2533 = vsel %vm507, %v2477, 0
        %2535 = vmatprep.subr.bf16.mxu0 0
        %2536 = vmatpush1.bf16.msra.mxu0 %v2533
        %2537 = vmatprep.subr.bf16.mxu0 0
        %2538 = vmatpush1.bf16.msra.mxu0 0
        %2539 = vmatprep.subr.bf16.mxu0 0
        %2540 = vmatpush1.bf16.msra.mxu0 0
        %2541 = vmatprep.subr.bf16.mxu0 0
        %2542 = vmatpush1.bf16.msra.mxu0 0
        %2543 = vmatprep.subr.bf16.mxu0 0
        %2544 = vmatpush1.bf16.msra.mxu0 0
        %2545 = vmatprep.subr.bf16.mxu0 0
        %2546 = vmatpush1.bf16.msra.mxu0 0
        %2547 = vmatprep.subr.bf16.mxu0 0
        %2548 = vmatpush1.bf16.msra.mxu0 0
        %2549 = vmatprep.subr.bf16.mxu0 0
        %2550 = vmatpush1.bf16.msra.mxu0 0
        %2551 = vmatprep.subr.bf16.mxu0 0
        %2552 = vmatpush1.bf16.msra.mxu0 0
        %2553 = vmatprep.subr.bf16.mxu0 0
        %2554 = vmatpush1.bf16.msra.mxu0 0
        %2555 = vmatprep.subr.bf16.mxu0 0
        %2556 = vmatpush1.bf16.msra.mxu0 0
        %2557 = vmatprep.subr.bf16.mxu0 0
        %2558 = vmatpush1.bf16.msra.mxu0 0
        %2559 = vmatprep.subr.bf16.mxu0 0
        %2560 = vmatpush1.bf16.msra.mxu0 0
        %2561 = vmatprep.subr.bf16.mxu0 0
        %2562 = vmatpush1.bf16.msra.mxu0 0
        %2563 = vmatprep.subr.bf16.mxu0 0
        %2564 = vmatpush1.bf16.msra.mxu0 0
        %2565 = vmatprep.subr.bf16.mxu0 0
        %2566 = vmatpush1.bf16.msra.mxu0 0
        %2567 = vmatprep.mubr.bf16.mxu0 0
        %2568 = vmatmul.mubr.bf16.gmra.mrb[0].mxu0 %v2479
        %v2569 = vpop.f32.mrb[0].mxu0
        %v2570 = vadd.f32 0.0, %v2569
        %v2571 = vpop.f32.mrb[0].mxu0
        %v2572 = vpop.f32.mrb[0].mxu0
        %v2573 = vadd.f32 0.0, %v2572
        %v2574 = vpop.f32.mrb[0].mxu0
        %2575 = vmatprep.mubr.bf16.mxu0 0
        %2576 = vmatmul.mubr.bf16.gmra.mrb[0].mxu0 %v2482
        %v2577 = vpop.f32.mrb[0].mxu0
        %v2578 = vadd.f32 0.0, %v2577
        %v2579 = vpop.f32.mrb[0].mxu0
        %v2580 = vpop.f32.mrb[0].mxu0
        %v2581 = vadd.f32 0.0, %v2580
        %v2582 = vpop.f32.mrb[0].mxu0
        %2583 = vmatprep.mubr.bf16.mxu0 0
        %2584 = vmatmul.mubr.bf16.gmra.mrb[0].mxu0 %v2485
        %v2585 = vpop.f32.mrb[0].mxu0
        %v2586 = vadd.f32 0.0, %v2585
        %v2587 = vpop.f32.mrb[0].mxu0
        %v2588 = vpop.f32.mrb[0].mxu0
        %v2589 = vadd.f32 0.0, %v2588
        %v2590 = vpop.f32.mrb[0].mxu0
        %2591 = vmatprep.mubr.bf16.mxu0 0
        %2592 = vmatmul.mubr.bf16.gmra.mrb[0].mxu0 %v2488
        %v2593 = vpop.f32.mrb[0].mxu0
        %v2594 = vadd.f32 0.0, %v2593
        %v2595 = vpop.f32.mrb[0].mxu0
        %v2596 = vpop.f32.mrb[0].mxu0
        %v2597 = vadd.f32 0.0, %v2596
        %v2598 = vpop.f32.mrb[0].mxu0
        %2599 = vmatprep.mubr.bf16.mxu0 0
        %2600 = vmatmul.mubr.bf16.gmra.mrb[0].mxu0 %v2491
        %v2601 = vpop.f32.mrb[0].mxu0
        %v2602 = vadd.f32 0.0, %v2601
        %v2603 = vpop.f32.mrb[0].mxu0
        %v2604 = vpop.f32.mrb[0].mxu0
        %v2605 = vadd.f32 0.0, %v2604
        %v2606 = vpop.f32.mrb[0].mxu0
        %2607 = vmatprep.mubr.bf16.mxu0 0
        %2608 = vmatmul.mubr.bf16.gmra.mrb[0].mxu0 %v2494
        %v2609 = vpop.f32.mrb[0].mxu0
        %v2610 = vadd.f32 0.0, %v2609
        %v2611 = vpop.f32.mrb[0].mxu0
        %v2612 = vpop.f32.mrb[0].mxu0
        %v2613 = vadd.f32 0.0, %v2612
        %v2614 = vpop.f32.mrb[0].mxu0
        %2615 = vmatprep.mubr.bf16.mxu0 0
        %2616 = vmatmul.mubr.bf16.gmra.mrb[0].mxu0 %v2497
        %v2617 = vpop.f32.mrb[0].mxu0
        %v2618 = vadd.f32 0.0, %v2617
        %v2619 = vpop.f32.mrb[0].mxu0
        %v2620 = vpop.f32.mrb[0].mxu0
        %v2621 = vadd.f32 0.0, %v2620
        %v2622 = vpop.f32.mrb[0].mxu0
        %2623 = vmatprep.mubr.bf16.mxu0 0
        %2624 = vmatmul.mubr.bf16.gmra.mrb[0].mxu0 %v2500
        %v2625 = vpop.f32.mrb[0].mxu0
        %v2626 = vadd.f32 0.0, %v2625
        %v2627 = vpop.f32.mrb[0].mxu0
        %v2628 = vpop.f32.mrb[0].mxu0
        %v2629 = vadd.f32 0.0, %v2628
        %v2630 = vpop.f32.mrb[0].mxu0
        %2631 = vmatprep.mubr.bf16.mxu0 0
        %2632 = vmatmul.mubr.bf16.gmra.mrb[0].mxu0 %v2503
        %v2633 = vpop.f32.mrb[0].mxu0
        %v2634 = vadd.f32 0.0, %v2633
        %v2635 = vpop.f32.mrb[0].mxu0
        %v2636 = vpop.f32.mrb[0].mxu0
        %v2637 = vadd.f32 0.0, %v2636
        %v2638 = vpop.f32.mrb[0].mxu0
        %2639 = vmatprep.mubr.bf16.mxu0 0
        %2640 = vmatmul.mubr.bf16.gmra.mrb[0].mxu0 %v2506
        %v2641 = vpop.f32.mrb[0].mxu0
        %v2642 = vadd.f32 0.0, %v2641
        %v2643 = vpop.f32.mrb[0].mxu0
        %v2644 = vpop.f32.mrb[0].mxu0
        %v2645 = vadd.f32 0.0, %v2644
        %v2646 = vpop.f32.mrb[0].mxu0
        %2647 = vmatprep.mubr.bf16.mxu0 0
        %2648 = vmatmul.mubr.bf16.gmra.mrb[0].mxu0 %v2509
        %v2649 = vpop.f32.mrb[0].mxu0
        %v2650 = vadd.f32 0.0, %v2649
        %v2651 = vpop.f32.mrb[0].mxu0
        %v2652 = vpop.f32.mrb[0].mxu0
        %v2653 = vadd.f32 0.0, %v2652
        %v2654 = vpop.f32.mrb[0].mxu0
        %2655 = vmatprep.mubr.bf16.mxu0 0
        %2656 = vmatmul.mubr.bf16.gmra.mrb[0].mxu0 %v2512
        %v2657 = vpop.f32.mrb[0].mxu0
        %v2658 = vadd.f32 0.0, %v2657
        %v2659 = vpop.f32.mrb[0].mxu0
        %v2660 = vpop.f32.mrb[0].mxu0
        %v2661 = vadd.f32 0.0, %v2660
        %v2662 = vpop.f32.mrb[0].mxu0
        %2663 = vmatprep.mubr.bf16.mxu0 0
        %2664 = vmatmul.mubr.bf16.gmra.mrb[0].mxu0 %v2515
        %v2665 = vpop.f32.mrb[0].mxu0
        %v2666 = vadd.f32 0.0, %v2665
        %v2667 = vpop.f32.mrb[0].mxu0
        %v2668 = vpop.f32.mrb[0].mxu0
        %v2669 = vadd.f32 0.0, %v2668
        %v2670 = vpop.f32.mrb[0].mxu0
        %2671 = vmatprep.mubr.bf16.mxu0 0
        %2672 = vmatmul.mubr.bf16.gmra.mrb[0].mxu0 %v2518
        %v2673 = vpop.f32.mrb[0].mxu0
        %v2674 = vadd.f32 0.0, %v2673
        %v2675 = vpop.f32.mrb[0].mxu0
        %v2676 = vpop.f32.mrb[0].mxu0
        %v2677 = vadd.f32 0.0, %v2676
        %v2678 = vpop.f32.mrb[0].mxu0
        %2679 = vmatprep.mubr.bf16.mxu0 0
        %2680 = vmatmul.mubr.bf16.gmra.mrb[0].mxu0 %v2521
        %v2681 = vpop.f32.mrb[0].mxu0
        %v2682 = vadd.f32 0.0, %v2681
        %v2683 = vpop.f32.mrb[0].mxu0
        %v2684 = vpop.f32.mrb[0].mxu0
        %v2685 = vadd.f32 0.0, %v2684
        %v2686 = vpop.f32.mrb[0].mxu0
        %2687 = vmatprep.mubr.bf16.mxu0 0
        %2688 = vmatmul.mubr.bf16.gmra.mrb[0].mxu0 %v2524
        %v2689 = vpop.f32.mrb[0].mxu0
        %v2690 = vadd.f32 0.0, %v2689
        %v2691 = vpop.f32.mrb[0].mxu0
        %v2692 = vpop.f32.mrb[0].mxu0
        %v2693 = vadd.f32 0.0, %v2692
        %v2694 = vpop.f32.mrb[0].mxu0
        %2695 = vmatprep.mubr.bf16.mxu0 0
        %2696 = vmatmul.mubr.bf16.gmra.mrb[0].mxu0 %v2527
        %v2697 = vpop.f32.mrb[0].mxu0
        %v2698 = vadd.f32 0.0, %v2697
        %v2699 = vpop.f32.mrb[0].mxu0
        %v2700 = vpop.f32.mrb[0].mxu0
        %v2701 = vadd.f32 0.0, %v2700
        %v2702 = vpop.f32.mrb[0].mxu0
        %2703 = vmatprep.mubr.bf16.mxu0 0
        %2704 = vmatmul.mubr.bf16.gmra.mrb[0].mxu0 %v2530
        %v2705 = vpop.f32.mrb[0].mxu0
        %v2706 = vadd.f32 0.0, %v2705
        %v2707 = vpop.f32.mrb[0].mxu0
        %v2708 = vpop.f32.mrb[0].mxu0
        %v2709 = vadd.f32 0.0, %v2708
        %v2710 = vpop.f32.mrb[0].mxu0
        %2711 = vdwg.mxu0
        %v2712 = vadd.f32 %v2440, %v2570
        %v2713 = vadd.f32 %v2441, %v2573
        %v2714 = vadd.f32 %v2442, %v2578
        %v2715 = vadd.f32 %v2443, %v2581
        %v2716 = vadd.f32 %v2444, %v2586
        %v2717 = vadd.f32 %v2445, %v2589
        %v2718 = vadd.f32 %v2446, %v2594
        %v2719 = vadd.f32 %v2447, %v2597
        %v2720 = vadd.f32 %v2448, %v2602
        %v2721 = vadd.f32 %v2449, %v2605
        %v2722 = vadd.f32 %v2450, %v2610
        %v2723 = vadd.f32 %v2451, %v2613
        %v2724 = vadd.f32 %v2452, %v2618
        %v2725 = vadd.f32 %v2453, %v2621
        %v2726 = vadd.f32 %v2454, %v2626
        %v2727 = vadd.f32 %v2455, %v2629
        %v2728 = vadd.f32 %v2456, %v2634
        %v2729 = vadd.f32 %v2457, %v2637
        %v2730 = vadd.f32 %v2458, %v2642
        %v2731 = vadd.f32 %v2459, %v2645
        %v2732 = vadd.f32 %v2460, %v2650
        %v2733 = vadd.f32 %v2461, %v2653
        %v2734 = vadd.f32 %v2462, %v2658
        %v2735 = vadd.f32 %v2463, %v2661
        %v2736 = vadd.f32 %v2464, %v2666
        %v2737 = vadd.f32 %v2465, %v2669
        %v2738 = vadd.f32 %v2466, %v2674
        %v2739 = vadd.f32 %v2467, %v2677
        %v2740 = vadd.f32 %v2468, %v2682
        %v2741 = vadd.f32 %v2469, %v2685
        %v2742 = vadd.f32 %v2470, %v2690
        %v2743 = vadd.f32 %v2471, %v2693
        %v2744 = vadd.f32 %v2472, %v2698
        %v2745 = vadd.f32 %v2473, %v2701
        %v2746 = vadd.f32 %v2474, %v2706
        %v2747 = vadd.f32 %v2475, %v2709
        %2748 = vst [vmem:[#allocation2] sm:$0xff] %v2712
        %2749 = vst [vmem:[#allocation2 + $0x8] sm:$0xff] %v2713
        %2750 = vst [vmem:[#allocation2 + $0x10] sm:$0xff] %v2714
        %2751 = vst [vmem:[#allocation2 + $0x18] sm:$0xff] %v2715
        %2752 = vst [vmem:[#allocation2 + $0x20] sm:$0xff] %v2716
        %2753 = vst [vmem:[#allocation2 + $0x28] sm:$0xff] %v2717
        %2754 = vst [vmem:[#allocation2 + $0x30] sm:$0xff] %v2718
        %2755 = vst [vmem:[#allocation2 + $0x38] sm:$0xff] %v2719
        %2756 = vst [vmem:[#allocation2 + $0x40] sm:$0xff] %v2720
        %2757 = vst [vmem:[#allocation2 + $0x48] sm:$0xff] %v2721
        %2758 = vst [vmem:[#allocation2 + $0x50] sm:$0xff] %v2722
        %2759 = vst [vmem:[#allocation2 + $0x58] sm:$0xff] %v2723
        %2760 = vst [vmem:[#allocation2 + $0x60] sm:$0xff] %v2724
        %2761 = vst [vmem:[#allocation2 + $0x68] sm:$0xff] %v2725
        %2762 = vst [vmem:[#allocation2 + $0x70] sm:$0xff] %v2726
        %2763 = vst [vmem:[#allocation2 + $0x78] sm:$0xff] %v2727
        %2764 = vst [vmem:[#allocation2 + $0x80] sm:$0xff] %v2728
        %2765 = vst [vmem:[#allocation2 + $0x88] sm:$0xff] %v2729
        %2766 = vst [vmem:[#allocation2 + $0x90] sm:$0xff] %v2730
        %2767 = vst [vmem:[#allocation2 + $0x98] sm:$0xff] %v2731
        %2768 = vst [vmem:[#allocation2 + $0xa0] sm:$0xff] %v2732
        %2769 = vst [vmem:[#allocation2 + $0xa8] sm:$0xff] %v2733
        %2770 = vst [vmem:[#allocation2 + $0xb0] sm:$0xff] %v2734
        %2771 = vst [vmem:[#allocation2 + $0xb8] sm:$0xff] %v2735
        %2772 = vst [vmem:[#allocation2 + $0xc0] sm:$0xff] %v2736
        %2773 = vst [vmem:[#allocation2 + $0xc8] sm:$0xff] %v2737
        %2774 = vst [vmem:[#allocation2 + $0xd0] sm:$0xff] %v2738
        %2775 = vst [vmem:[#allocation2 + $0xd8] sm:$0xff] %v2739
        %2776 = vst [vmem:[#allocation2 + $0xe0] sm:$0xff] %v2740
        %2777 = vst [vmem:[#allocation2 + $0xe8] sm:$0xff] %v2741
        %2778 = vst [vmem:[#allocation2 + $0xf0] sm:$0xff] %v2742
        %2779 = vst [vmem:[#allocation2 + $0xf8] sm:$0xff] %v2743
        %2780 = vst [vmem:[#allocation2 + $0x100] sm:$0xff] %v2744
        %2781 = vst [vmem:[#allocation2 + $0x108] sm:$0xff] %v2745
        %2782 = vst [vmem:[#allocation2 + $0x110] sm:$0xff] %v2746
        %2783 = vst [vmem:[#allocation2 + $0x118] sm:$0xff] %v2747
        %v2784 = vld [vmem:[%s185 + $0x14] sm:$0xff]
        %v2785 = vld [vmem:[%s185 + $0x1c] sm:$0xff]
        %v2786 = vld [vmem:[%s185 + $0x24] sm:$0xff]
        %v2787 = vld [vmem:[%s185 + $0x2c] sm:$0xff]
        %v2788 = vld [vmem:[%s185 + $0x34] sm:$0xff]
        %v2789 = vld [vmem:[%s185 + $0x3c] sm:$0xff]
        %v2790 = vld [vmem:[%s185 + $0x44] sm:$0xff]
        %v2791 = vld [vmem:[%s185 + $0x4c] sm:$0xff]
        %v2792 = vld [vmem:[%s185 + $0x54] sm:$0xff]
        %v2793 = vld [vmem:[%s185 + $0x5c] sm:$0xff]
        %v2794 = vld [vmem:[%s185 + $0x64] sm:$0xff]
        %v2795 = vld [vmem:[%s185 + $0x6c] sm:$0xff]
        %v2796 = vld [vmem:[%s185 + $0x74] sm:$0xff]
        %v2797 = vld [vmem:[%s185 + $0x7c] sm:$0xff]
        %v2798 = vld [vmem:[%s185 + $0x84] sm:$0xff]
        %v2799 = vld [vmem:[%s185 + $0x8c] sm:$0xff]
        %v2800 = vld [vmem:[%s185 + $0x94] sm:$0xff]
        %v2801 = vld [vmem:[%s185 + $0x9c] sm:$0xff]
        %v2802 = vld [vmem:[%s185 + $0xa4] sm:$0xff]
        %v2803 = vld [vmem:[%s185 + $0xac] sm:$0xff]
        %v2804 = vld [vmem:[%s185 + $0xb4] sm:$0xff]
        %v2805 = vld [vmem:[%s185 + $0xbc] sm:$0xff]
        %v2806 = vld [vmem:[%s185 + $0xc4] sm:$0xff]
        %v2807 = vld [vmem:[%s185 + $0xcc] sm:$0xff]
        %v2808 = vld [vmem:[%s185 + $0xd4] sm:$0xff]
        %v2809 = vld [vmem:[%s185 + $0xdc] sm:$0xff]
        %v2810 = vld [vmem:[%s185 + $0xe4] sm:$0xff]
        %v2811 = vld [vmem:[%s185 + $0xec] sm:$0xff]
        %v2812 = vld [vmem:[%s185 + $0xf4] sm:$0xff]
        %v2813 = vld [vmem:[%s185 + $0xfc] sm:$0xff]
        %v2814 = vld [vmem:[%s185 + $0x104] sm:$0xff]
        %v2815 = vld [vmem:[%s185 + $0x10c] sm:$0xff]
        %v2816 = vld [vmem:[%s185 + $0x114] sm:$0xff]
        %v2817 = vld [vmem:[%s185 + $0x11c] sm:$0xff]
        %v2818 = vld [vmem:[%s185 + $0x124] sm:$0xff]
        %v2819 = vld [vmem:[%s185 + $0x12c] sm:$0xff]
        %vm2820 = vcmp.ge.f32.partialorder %v2784, 0.0
        %vm2821 = vcmp.ge.f32.partialorder %v2785, 0.0
        %vm2822 = vcmp.ge.f32.partialorder %v2786, 0.0
        %vm2823 = vcmp.ge.f32.partialorder %v2787, 0.0
        %vm2824 = vcmp.ge.f32.partialorder %v2788, 0.0
        %vm2825 = vcmp.ge.f32.partialorder %v2789, 0.0
        %vm2826 = vcmp.ge.f32.partialorder %v2790, 0.0
        %vm2827 = vcmp.ge.f32.partialorder %v2791, 0.0
        %vm2828 = vcmp.ge.f32.partialorder %v2792, 0.0
        %vm2829 = vcmp.ge.f32.partialorder %v2793, 0.0
        %vm2830 = vcmp.ge.f32.partialorder %v2794, 0.0
        %vm2831 = vcmp.ge.f32.partialorder %v2795, 0.0
        %vm2832 = vcmp.ge.f32.partialorder %v2796, 0.0
        %vm2833 = vcmp.ge.f32.partialorder %v2797, 0.0
        %vm2834 = vcmp.ge.f32.partialorder %v2798, 0.0
        %vm2835 = vcmp.ge.f32.partialorder %v2799, 0.0
        %vm2836 = vcmp.ge.f32.partialorder %v2800, 0.0
        %vm2837 = vcmp.ge.f32.partialorder %v2801, 0.0
        %vm2838 = vcmp.ge.f32.partialorder %v2802, 0.0
        %vm2839 = vcmp.ge.f32.partialorder %v2803, 0.0
        %vm2840 = vcmp.ge.f32.partialorder %v2804, 0.0
        %vm2841 = vcmp.ge.f32.partialorder %v2805, 0.0
        %vm2842 = vcmp.ge.f32.partialorder %v2806, 0.0
        %vm2843 = vcmp.ge.f32.partialorder %v2807, 0.0
        %vm2844 = vcmp.ge.f32.partialorder %v2808, 0.0
        %vm2845 = vcmp.ge.f32.partialorder %v2809, 0.0
        %vm2846 = vcmp.ge.f32.partialorder %v2810, 0.0
        %vm2847 = vcmp.ge.f32.partialorder %v2811, 0.0
        %vm2848 = vcmp.ge.f32.partialorder %v2812, 0.0
        %vm2849 = vcmp.ge.f32.partialorder %v2813, 0.0
        %vm2850 = vcmp.ge.f32.partialorder %v2814, 0.0
        %vm2851 = vcmp.ge.f32.partialorder %v2815, 0.0
        %vm2852 = vcmp.ge.f32.partialorder %v2816, 0.0
        %vm2853 = vcmp.ge.f32.partialorder %v2817, 0.0
        %vm2854 = vcmp.ge.f32.partialorder %v2818, 0.0
        %vm2855 = vcmp.ge.f32.partialorder %v2819, 0.0
        %v2856 = vsel %vm2820, 1, 0
        %v2857 = vsel %vm2821, 1, 0
        %v2858 = vsel %vm2822, 1, 0
        %v2859 = vsel %vm2823, 1, 0
        %v2860 = vsel %vm2824, 1, 0
        %v2861 = vsel %vm2825, 1, 0
        %v2862 = vsel %vm2826, 1, 0
        %v2863 = vsel %vm2827, 1, 0
        %v2864 = vsel %vm2828, 1, 0
        %v2865 = vsel %vm2829, 1, 0
        %v2866 = vsel %vm2830, 1, 0
        %v2867 = vsel %vm2831, 1, 0
        %v2868 = vsel %vm2832, 1, 0
        %v2869 = vsel %vm2833, 1, 0
        %v2870 = vsel %vm2834, 1, 0
        %v2871 = vsel %vm2835, 1, 0
        %v2872 = vsel %vm2836, 1, 0
        %v2873 = vsel %vm2837, 1, 0
        %v2874 = vsel %vm2838, 1, 0
        %v2875 = vsel %vm2839, 1, 0
        %v2876 = vsel %vm2840, 1, 0
        %v2877 = vsel %vm2841, 1, 0
        %v2878 = vsel %vm2842, 1, 0
        %v2879 = vsel %vm2843, 1, 0
        %v2880 = vsel %vm2844, 1, 0
        %v2881 = vsel %vm2845, 1, 0
        %v2882 = vsel %vm2846, 1, 0
        %v2883 = vsel %vm2847, 1, 0
        %v2884 = vsel %vm2848, 1, 0
        %v2885 = vsel %vm2849, 1, 0
        %v2886 = vsel %vm2850, 1, 0
        %v2887 = vsel %vm2851, 1, 0
        %v2888 = vsel %vm2852, 1, 0
        %v2889 = vsel %vm2853, 1, 0
        %v2890 = vsel %vm2854, 1, 0
        %v2891 = vsel %vm2855, 1, 0
        %v2892 = vcvt.s32.f32 %v2856
        %v2893 = vcvt.s32.f32 %v2857
        %v2894 = vcvt.s32.f32 %v2858
        %v2895 = vcvt.s32.f32 %v2859
        %v2896 = vcvt.s32.f32 %v2860
        %v2897 = vcvt.s32.f32 %v2861
        %v2898 = vcvt.s32.f32 %v2862
        %v2899 = vcvt.s32.f32 %v2863
        %v2900 = vcvt.s32.f32 %v2864
        %v2901 = vcvt.s32.f32 %v2865
        %v2902 = vcvt.s32.f32 %v2866
        %v2903 = vcvt.s32.f32 %v2867
        %v2904 = vcvt.s32.f32 %v2868
        %v2905 = vcvt.s32.f32 %v2869
        %v2906 = vcvt.s32.f32 %v2870
        %v2907 = vcvt.s32.f32 %v2871
        %v2908 = vcvt.s32.f32 %v2872
        %v2909 = vcvt.s32.f32 %v2873
        %v2910 = vcvt.s32.f32 %v2874
        %v2911 = vcvt.s32.f32 %v2875
        %v2912 = vcvt.s32.f32 %v2876
        %v2913 = vcvt.s32.f32 %v2877
        %v2914 = vcvt.s32.f32 %v2878
        %v2915 = vcvt.s32.f32 %v2879
        %v2916 = vcvt.s32.f32 %v2880
        %v2917 = vcvt.s32.f32 %v2881
        %v2918 = vcvt.s32.f32 %v2882
        %v2919 = vcvt.s32.f32 %v2883
        %v2920 = vcvt.s32.f32 %v2884
        %v2921 = vcvt.s32.f32 %v2885
        %v2922 = vcvt.s32.f32 %v2886
        %v2923 = vcvt.s32.f32 %v2887
        %v2924 = vcvt.s32.f32 %v2888
        %v2925 = vcvt.s32.f32 %v2889
        %v2926 = vcvt.s32.f32 %v2890
        %v2927 = vcvt.s32.f32 %v2891
        %v2928 = vpack.c.bf16 %v2893, %v2892
        %v2929 = vpack.c.bf16 %v2895, %v2894
        %v2930 = vpack.c.bf16 %v2897, %v2896
        %v2931 = vpack.c.bf16 %v2899, %v2898
        %v2932 = vpack.c.bf16 %v2901, %v2900
        %v2933 = vpack.c.bf16 %v2903, %v2902
        %v2934 = vpack.c.bf16 %v2905, %v2904
        %v2935 = vpack.c.bf16 %v2907, %v2906
        %v2936 = vpack.c.bf16 %v2909, %v2908
        %v2937 = vpack.c.bf16 %v2911, %v2910
        %v2938 = vpack.c.bf16 %v2913, %v2912
        %v2939 = vpack.c.bf16 %v2915, %v2914
        %v2940 = vpack.c.bf16 %v2917, %v2916
        %v2941 = vpack.c.bf16 %v2919, %v2918
        %v2942 = vpack.c.bf16 %v2921, %v2920
        %v2943 = vpack.c.bf16 %v2923, %v2922
        %v2944 = vpack.c.bf16 %v2925, %v2924
        %v2945 = vpack.c.bf16 %v2927, %v2926
        %v2946 = vld [vmem:[#allocation2] sm:$0xff]
        %v2947 = vld [vmem:[#allocation2 + $0x8] sm:$0xff]
        %v2948 = vld [vmem:[#allocation2 + $0x10] sm:$0xff]
        %v2949 = vld [vmem:[#allocation2 + $0x18] sm:$0xff]
        %v2950 = vld [vmem:[#allocation2 + $0x20] sm:$0xff]
        %v2951 = vld [vmem:[#allocation2 + $0x28] sm:$0xff]
        %v2952 = vld [vmem:[#allocation2 + $0x30] sm:$0xff]
        %v2953 = vld [vmem:[#allocation2 + $0x38] sm:$0xff]
        %v2954 = vld [vmem:[#allocation2 + $0x40] sm:$0xff]
        %v2955 = vld [vmem:[#allocation2 + $0x48] sm:$0xff]
        %v2956 = vld [vmem:[#allocation2 + $0x50] sm:$0xff]
        %v2957 = vld [vmem:[#allocation2 + $0x58] sm:$0xff]
        %v2958 = vld [vmem:[#allocation2 + $0x60] sm:$0xff]
        %v2959 = vld [vmem:[#allocation2 + $0x68] sm:$0xff]
        %v2960 = vld [vmem:[#allocation2 + $0x70] sm:$0xff]
        %v2961 = vld [vmem:[#allocation2 + $0x78] sm:$0xff]
        %v2962 = vld [vmem:[#allocation2 + $0x80] sm:$0xff]
        %v2963 = vld [vmem:[#allocation2 + $0x88] sm:$0xff]
        %v2964 = vld [vmem:[#allocation2 + $0x90] sm:$0xff]
        %v2965 = vld [vmem:[#allocation2 + $0x98] sm:$0xff]
        %v2966 = vld [vmem:[#allocation2 + $0xa0] sm:$0xff]
        %v2967 = vld [vmem:[#allocation2 + $0xa8] sm:$0xff]
        %v2968 = vld [vmem:[#allocation2 + $0xb0] sm:$0xff]
        %v2969 = vld [vmem:[#allocation2 + $0xb8] sm:$0xff]
        %v2970 = vld [vmem:[#allocation2 + $0xc0] sm:$0xff]
        %v2971 = vld [vmem:[#allocation2 + $0xc8] sm:$0xff]
        %v2972 = vld [vmem:[#allocation2 + $0xd0] sm:$0xff]
        %v2973 = vld [vmem:[#allocation2 + $0xd8] sm:$0xff]
        %v2974 = vld [vmem:[#allocation2 + $0xe0] sm:$0xff]
        %v2975 = vld [vmem:[#allocation2 + $0xe8] sm:$0xff]
        %v2976 = vld [vmem:[#allocation2 + $0xf0] sm:$0xff]
        %v2977 = vld [vmem:[#allocation2 + $0xf8] sm:$0xff]
        %v2978 = vld [vmem:[#allocation2 + $0x100] sm:$0xff]
        %v2979 = vld [vmem:[#allocation2 + $0x108] sm:$0xff]
        %v2980 = vld [vmem:[#allocation2 + $0x110] sm:$0xff]
        %v2981 = vld [vmem:[#allocation2 + $0x118] sm:$0xff]
        %s2982 = scalar_lea.vmem [#allocation6], 10
        %v2983 = vld [vmem:[%s2982] sm:$0x3]
        %v2985 = vsel %vm452, %v2928, 0
        %v2988 = vsel %vm452, %v2929, 0
        %v2991 = vsel %vm452, %v2930, 0
        %v2994 = vsel %vm452, %v2931, 0
        %v2997 = vsel %vm452, %v2932, 0
        %v3000 = vsel %vm452, %v2933, 0
        %v3003 = vsel %vm452, %v2934, 0
        %v3006 = vsel %vm452, %v2935, 0
        %v3009 = vsel %vm452, %v2936, 0
        %v3012 = vsel %vm452, %v2937, 0
        %v3015 = vsel %vm452, %v2938, 0
        %v3018 = vsel %vm452, %v2939, 0
        %v3021 = vsel %vm452, %v2940, 0
        %v3024 = vsel %vm452, %v2941, 0
        %v3027 = vsel %vm452, %v2942, 0
        %v3030 = vsel %vm452, %v2943, 0
        %v3033 = vsel %vm452, %v2944, 0
        %v3036 = vsel %vm452, %v2945, 0
        %v3039 = vsel %vm507, %v2983, 0
        %3041 = vmatprep.subr.bf16.mxu0 0
        %3042 = vmatpush1.bf16.msra.mxu0 %v3039
        %3043 = vmatprep.subr.bf16.mxu0 0
        %3044 = vmatpush1.bf16.msra.mxu0 0
        %3045 = vmatprep.subr.bf16.mxu0 0
        %3046 = vmatpush1.bf16.msra.mxu0 0
        %3047 = vmatprep.subr.bf16.mxu0 0
        %3048 = vmatpush1.bf16.msra.mxu0 0
        %3049 = vmatprep.subr.bf16.mxu0 0
        %3050 = vmatpush1.bf16.msra.mxu0 0
        %3051 = vmatprep.subr.bf16.mxu0 0
        %3052 = vmatpush1.bf16.msra.mxu0 0
        %3053 = vmatprep.subr.bf16.mxu0 0
        %3054 = vmatpush1.bf16.msra.mxu0 0
        %3055 = vmatprep.subr.bf16.mxu0 0
        %3056 = vmatpush1.bf16.msra.mxu0 0
        %3057 = vmatprep.subr.bf16.mxu0 0
        %3058 = vmatpush1.bf16.msra.mxu0 0
        %3059 = vmatprep.subr.bf16.mxu0 0
        %3060 = vmatpush1.bf16.msra.mxu0 0
        %3061 = vmatprep.subr.bf16.mxu0 0
        %3062 = vmatpush1.bf16.msra.mxu0 0
        %3063 = vmatprep.subr.bf16.mxu0 0
        %3064 = vmatpush1.bf16.msra.mxu0 0
        %3065 = vmatprep.subr.bf16.mxu0 0
        %3066 = vmatpush1.bf16.msra.mxu0 0
        %3067 = vmatprep.subr.bf16.mxu0 0
        %3068 = vmatpush1.bf16.msra.mxu0 0
        %3069 = vmatprep.subr.bf16.mxu0 0
        %3070 = vmatpush1.bf16.msra.mxu0 0
        %3071 = vmatprep.subr.bf16.mxu0 0
        %3072 = vmatpush1.bf16.msra.mxu0 0
        %3073 = vmatprep.mubr.bf16.mxu0 0
        %3074 = vmatmul.mubr.bf16.gmra.mrb[0].mxu0 %v2985
        %v3075 = vpop.f32.mrb[0].mxu0
        %v3076 = vadd.f32 0.0, %v3075
        %v3077 = vpop.f32.mrb[0].mxu0
        %v3078 = vpop.f32.mrb[0].mxu0
        %v3079 = vadd.f32 0.0, %v3078
        %v3080 = vpop.f32.mrb[0].mxu0
        %3081 = vmatprep.mubr.bf16.mxu0 0
        %3082 = vmatmul.mubr.bf16.gmra.mrb[0].mxu0 %v2988
        %v3083 = vpop.f32.mrb[0].mxu0
        %v3084 = vadd.f32 0.0, %v3083
        %v3085 = vpop.f32.mrb[0].mxu0
        %v3086 = vpop.f32.mrb[0].mxu0
        %v3087 = vadd.f32 0.0, %v3086
        %v3088 = vpop.f32.mrb[0].mxu0
        %3089 = vmatprep.mubr.bf16.mxu0 0
        %3090 = vmatmul.mubr.bf16.gmra.mrb[0].mxu0 %v2991
        %v3091 = vpop.f32.mrb[0].mxu0
        %v3092 = vadd.f32 0.0, %v3091
        %v3093 = vpop.f32.mrb[0].mxu0
        %v3094 = vpop.f32.mrb[0].mxu0
        %v3095 = vadd.f32 0.0, %v3094
        %v3096 = vpop.f32.mrb[0].mxu0
        %3097 = vmatprep.mubr.bf16.mxu0 0
        %3098 = vmatmul.mubr.bf16.gmra.mrb[0].mxu0 %v2994
        %v3099 = vpop.f32.mrb[0].mxu0
        %v3100 = vadd.f32 0.0, %v3099
        %v3101 = vpop.f32.mrb[0].mxu0
        %v3102 = vpop.f32.mrb[0].mxu0
        %v3103 = vadd.f32 0.0, %v3102
        %v3104 = vpop.f32.mrb[0].mxu0
        %3105 = vmatprep.mubr.bf16.mxu0 0
        %3106 = vmatmul.mubr.bf16.gmra.mrb[0].mxu0 %v2997
        %v3107 = vpop.f32.mrb[0].mxu0
        %v3108 = vadd.f32 0.0, %v3107
        %v3109 = vpop.f32.mrb[0].mxu0
        %v3110 = vpop.f32.mrb[0].mxu0
        %v3111 = vadd.f32 0.0, %v3110
        %v3112 = vpop.f32.mrb[0].mxu0
        %3113 = vmatprep.mubr.bf16.mxu0 0
        %3114 = vmatmul.mubr.bf16.gmra.mrb[0].mxu0 %v3000
        %v3115 = vpop.f32.mrb[0].mxu0
        %v3116 = vadd.f32 0.0, %v3115
        %v3117 = vpop.f32.mrb[0].mxu0
        %v3118 = vpop.f32.mrb[0].mxu0
        %v3119 = vadd.f32 0.0, %v3118
        %v3120 = vpop.f32.mrb[0].mxu0
        %3121 = vmatprep.mubr.bf16.mxu0 0
        %3122 = vmatmul.mubr.bf16.gmra.mrb[0].mxu0 %v3003
        %v3123 = vpop.f32.mrb[0].mxu0
        %v3124 = vadd.f32 0.0, %v3123
        %v3125 = vpop.f32.mrb[0].mxu0
        %v3126 = vpop.f32.mrb[0].mxu0
        %v3127 = vadd.f32 0.0, %v3126
        %v3128 = vpop.f32.mrb[0].mxu0
        %3129 = vmatprep.mubr.bf16.mxu0 0
        %3130 = vmatmul.mubr.bf16.gmra.mrb[0].mxu0 %v3006
        %v3131 = vpop.f32.mrb[0].mxu0
        %v3132 = vadd.f32 0.0, %v3131
        %v3133 = vpop.f32.mrb[0].mxu0
        %v3134 = vpop.f32.mrb[0].mxu0
        %v3135 = vadd.f32 0.0, %v3134
        %v3136 = vpop.f32.mrb[0].mxu0
        %3137 = vmatprep.mubr.bf16.mxu0 0
        %3138 = vmatmul.mubr.bf16.gmra.mrb[0].mxu0 %v3009
        %v3139 = vpop.f32.mrb[0].mxu0
        %v3140 = vadd.f32 0.0, %v3139
        %v3141 = vpop.f32.mrb[0].mxu0
        %v3142 = vpop.f32.mrb[0].mxu0
        %v3143 = vadd.f32 0.0, %v3142
        %v3144 = vpop.f32.mrb[0].mxu0
        %3145 = vmatprep.mubr.bf16.mxu0 0
        %3146 = vmatmul.mubr.bf16.gmra.mrb[0].mxu0 %v3012
        %v3147 = vpop.f32.mrb[0].mxu0
        %v3148 = vadd.f32 0.0, %v3147
        %v3149 = vpop.f32.mrb[0].mxu0
        %v3150 = vpop.f32.mrb[0].mxu0
        %v3151 = vadd.f32 0.0, %v3150
        %v3152 = vpop.f32.mrb[0].mxu0
        %3153 = vmatprep.mubr.bf16.mxu0 0
        %3154 = vmatmul.mubr.bf16.gmra.mrb[0].mxu0 %v3015
        %v3155 = vpop.f32.mrb[0].mxu0
        %v3156 = vadd.f32 0.0, %v3155
        %v3157 = vpop.f32.mrb[0].mxu0
        %v3158 = vpop.f32.mrb[0].mxu0
        %v3159 = vadd.f32 0.0, %v3158
        %v3160 = vpop.f32.mrb[0].mxu0
        %3161 = vmatprep.mubr.bf16.mxu0 0
        %3162 = vmatmul.mubr.bf16.gmra.mrb[0].mxu0 %v3018
        %v3163 = vpop.f32.mrb[0].mxu0
        %v3164 = vadd.f32 0.0, %v3163
        %v3165 = vpop.f32.mrb[0].mxu0
        %v3166 = vpop.f32.mrb[0].mxu0
        %v3167 = vadd.f32 0.0, %v3166
        %v3168 = vpop.f32.mrb[0].mxu0
        %3169 = vmatprep.mubr.bf16.mxu0 0
        %3170 = vmatmul.mubr.bf16.gmra.mrb[0].mxu0 %v3021
        %v3171 = vpop.f32.mrb[0].mxu0
        %v3172 = vadd.f32 0.0, %v3171
        %v3173 = vpop.f32.mrb[0].mxu0
        %v3174 = vpop.f32.mrb[0].mxu0
        %v3175 = vadd.f32 0.0, %v3174
        %v3176 = vpop.f32.mrb[0].mxu0
        %3177 = vmatprep.mubr.bf16.mxu0 0
        %3178 = vmatmul.mubr.bf16.gmra.mrb[0].mxu0 %v3024
        %v3179 = vpop.f32.mrb[0].mxu0
        %v3180 = vadd.f32 0.0, %v3179
        %v3181 = vpop.f32.mrb[0].mxu0
        %v3182 = vpop.f32.mrb[0].mxu0
        %v3183 = vadd.f32 0.0, %v3182
        %v3184 = vpop.f32.mrb[0].mxu0
        %3185 = vmatprep.mubr.bf16.mxu0 0
        %3186 = vmatmul.mubr.bf16.gmra.mrb[0].mxu0 %v3027
        %v3187 = vpop.f32.mrb[0].mxu0
        %v3188 = vadd.f32 0.0, %v3187
        %v3189 = vpop.f32.mrb[0].mxu0
        %v3190 = vpop.f32.mrb[0].mxu0
        %v3191 = vadd.f32 0.0, %v3190
        %v3192 = vpop.f32.mrb[0].mxu0
        %3193 = vmatprep.mubr.bf16.mxu0 0
        %3194 = vmatmul.mubr.bf16.gmra.mrb[0].mxu0 %v3030
        %v3195 = vpop.f32.mrb[0].mxu0
        %v3196 = vadd.f32 0.0, %v3195
        %v3197 = vpop.f32.mrb[0].mxu0
        %v3198 = vpop.f32.mrb[0].mxu0
        %v3199 = vadd.f32 0.0, %v3198
        %v3200 = vpop.f32.mrb[0].mxu0
        %3201 = vmatprep.mubr.bf16.mxu0 0
        %3202 = vmatmul.mubr.bf16.gmra.mrb[0].mxu0 %v3033
        %v3203 = vpop.f32.mrb[0].mxu0
        %v3204 = vadd.f32 0.0, %v3203
        %v3205 = vpop.f32.mrb[0].mxu0
        %v3206 = vpop.f32.mrb[0].mxu0
        %v3207 = vadd.f32 0.0, %v3206
        %v3208 = vpop.f32.mrb[0].mxu0
        %3209 = vmatprep.mubr.bf16.mxu0 0
        %3210 = vmatmul.mubr.bf16.gmra.mrb[0].mxu0 %v3036
        %v3211 = vpop.f32.mrb[0].mxu0
        %v3212 = vadd.f32 0.0, %v3211
        %v3213 = vpop.f32.mrb[0].mxu0
        %v3214 = vpop.f32.mrb[0].mxu0
        %v3215 = vadd.f32 0.0, %v3214
        %v3216 = vpop.f32.mrb[0].mxu0
        %3217 = vdwg.mxu0
        %v3218 = vadd.f32 %v2946, %v3076
        %v3219 = vadd.f32 %v2947, %v3079
        %v3220 = vadd.f32 %v2948, %v3084
        %v3221 = vadd.f32 %v2949, %v3087
        %v3222 = vadd.f32 %v2950, %v3092
        %v3223 = vadd.f32 %v2951, %v3095
        %v3224 = vadd.f32 %v2952, %v3100
        %v3225 = vadd.f32 %v2953, %v3103
        %v3226 = vadd.f32 %v2954, %v3108
        %v3227 = vadd.f32 %v2955, %v3111
        %v3228 = vadd.f32 %v2956, %v3116
        %v3229 = vadd.f32 %v2957, %v3119
        %v3230 = vadd.f32 %v2958, %v3124
        %v3231 = vadd.f32 %v2959, %v3127
        %v3232 = vadd.f32 %v2960, %v3132
        %v3233 = vadd.f32 %v2961, %v3135
        %v3234 = vadd.f32 %v2962, %v3140
        %v3235 = vadd.f32 %v2963, %v3143
        %v3236 = vadd.f32 %v2964, %v3148
        %v3237 = vadd.f32 %v2965, %v3151
        %v3238 = vadd.f32 %v2966, %v3156
        %v3239 = vadd.f32 %v2967, %v3159
        %v3240 = vadd.f32 %v2968, %v3164
        %v3241 = vadd.f32 %v2969, %v3167
        %v3242 = vadd.f32 %v2970, %v3172
        %v3243 = vadd.f32 %v2971, %v3175
        %v3244 = vadd.f32 %v2972, %v3180
        %v3245 = vadd.f32 %v2973, %v3183
        %v3246 = vadd.f32 %v2974, %v3188
        %v3247 = vadd.f32 %v2975, %v3191
        %v3248 = vadd.f32 %v2976, %v3196
        %v3249 = vadd.f32 %v2977, %v3199
        %v3250 = vadd.f32 %v2978, %v3204
        %v3251 = vadd.f32 %v2979, %v3207
        %v3252 = vadd.f32 %v2980, %v3212
        %v3253 = vadd.f32 %v2981, %v3215
        %3254 = vst [vmem:[#allocation2] sm:$0xff] %v3218
        %3255 = vst [vmem:[#allocation2 + $0x8] sm:$0xff] %v3219
        %3256 = vst [vmem:[#allocation2 + $0x10] sm:$0xff] %v3220
        %3257 = vst [vmem:[#allocation2 + $0x18] sm:$0xff] %v3221
        %3258 = vst [vmem:[#allocation2 + $0x20] sm:$0xff] %v3222
        %3259 = vst [vmem:[#allocation2 + $0x28] sm:$0xff] %v3223
        %3260 = vst [vmem:[#allocation2 + $0x30] sm:$0xff] %v3224
        %3261 = vst [vmem:[#allocation2 + $0x38] sm:$0xff] %v3225
        %3262 = vst [vmem:[#allocation2 + $0x40] sm:$0xff] %v3226
        %3263 = vst [vmem:[#allocation2 + $0x48] sm:$0xff] %v3227
        %3264 = vst [vmem:[#allocation2 + $0x50] sm:$0xff] %v3228
        %3265 = vst [vmem:[#allocation2 + $0x58] sm:$0xff] %v3229
        %3266 = vst [vmem:[#allocation2 + $0x60] sm:$0xff] %v3230
        %3267 = vst [vmem:[#allocation2 + $0x68] sm:$0xff] %v3231
        %3268 = vst [vmem:[#allocation2 + $0x70] sm:$0xff] %v3232
        %3269 = vst [vmem:[#allocation2 + $0x78] sm:$0xff] %v3233
        %3270 = vst [vmem:[#allocation2 + $0x80] sm:$0xff] %v3234
        %3271 = vst [vmem:[#allocation2 + $0x88] sm:$0xff] %v3235
        %3272 = vst [vmem:[#allocation2 + $0x90] sm:$0xff] %v3236
        %3273 = vst [vmem:[#allocation2 + $0x98] sm:$0xff] %v3237
        %3274 = vst [vmem:[#allocation2 + $0xa0] sm:$0xff] %v3238
        %3275 = vst [vmem:[#allocation2 + $0xa8] sm:$0xff] %v3239
        %3276 = vst [vmem:[#allocation2 + $0xb0] sm:$0xff] %v3240
        %3277 = vst [vmem:[#allocation2 + $0xb8] sm:$0xff] %v3241
        %3278 = vst [vmem:[#allocation2 + $0xc0] sm:$0xff] %v3242
        %3279 = vst [vmem:[#allocation2 + $0xc8] sm:$0xff] %v3243
        %3280 = vst [vmem:[#allocation2 + $0xd0] sm:$0xff] %v3244
        %3281 = vst [vmem:[#allocation2 + $0xd8] sm:$0xff] %v3245
        %3282 = vst [vmem:[#allocation2 + $0xe0] sm:$0xff] %v3246
        %3283 = vst [vmem:[#allocation2 + $0xe8] sm:$0xff] %v3247
        %3284 = vst [vmem:[#allocation2 + $0xf0] sm:$0xff] %v3248
        %3285 = vst [vmem:[#allocation2 + $0xf8] sm:$0xff] %v3249
        %3286 = vst [vmem:[#allocation2 + $0x100] sm:$0xff] %v3250
        %3287 = vst [vmem:[#allocation2 + $0x108] sm:$0xff] %v3251
        %3288 = vst [vmem:[#allocation2 + $0x110] sm:$0xff] %v3252
        %3289 = vst [vmem:[#allocation2 + $0x118] sm:$0xff] %v3253
        %v3290 = vld [vmem:[%s185 + $0x24] sm:$0xff]
        %v3291 = vld [vmem:[%s185 + $0x2c] sm:$0xff]
        %v3292 = vld [vmem:[%s185 + $0x34] sm:$0xff]
        %v3293 = vld [vmem:[%s185 + $0x3c] sm:$0xff]
        %v3294 = vld [vmem:[%s185 + $0x44] sm:$0xff]
        %v3295 = vld [vmem:[%s185 + $0x4c] sm:$0xff]
        %v3296 = vld [vmem:[%s185 + $0x54] sm:$0xff]
        %v3297 = vld [vmem:[%s185 + $0x5c] sm:$0xff]
        %v3298 = vld [vmem:[%s185 + $0x64] sm:$0xff]
        %v3299 = vld [vmem:[%s185 + $0x6c] sm:$0xff]
        %v3300 = vld [vmem:[%s185 + $0x74] sm:$0xff]
        %v3301 = vld [vmem:[%s185 + $0x7c] sm:$0xff]
        %v3302 = vld [vmem:[%s185 + $0x84] sm:$0xff]
        %v3303 = vld [vmem:[%s185 + $0x8c] sm:$0xff]
        %v3304 = vld [vmem:[%s185 + $0x94] sm:$0xff]
        %v3305 = vld [vmem:[%s185 + $0x9c] sm:$0xff]
        %v3306 = vld [vmem:[%s185 + $0xa4] sm:$0xff]
        %v3307 = vld [vmem:[%s185 + $0xac] sm:$0xff]
        %v3308 = vld [vmem:[%s185 + $0xb4] sm:$0xff]
        %v3309 = vld [vmem:[%s185 + $0xbc] sm:$0xff]
        %v3310 = vld [vmem:[%s185 + $0xc4] sm:$0xff]
        %v3311 = vld [vmem:[%s185 + $0xcc] sm:$0xff]
        %v3312 = vld [vmem:[%s185 + $0xd4] sm:$0xff]
        %v3313 = vld [vmem:[%s185 + $0xdc] sm:$0xff]
        %v3314 = vld [vmem:[%s185 + $0xe4] sm:$0xff]
        %v3315 = vld [vmem:[%s185 + $0xec] sm:$0xff]
        %v3316 = vld [vmem:[%s185 + $0xf4] sm:$0xff]
        %v3317 = vld [vmem:[%s185 + $0xfc] sm:$0xff]
        %v3318 = vld [vmem:[%s185 + $0x104] sm:$0xff]
        %v3319 = vld [vmem:[%s185 + $0x10c] sm:$0xff]
        %v3320 = vld [vmem:[%s185 + $0x114] sm:$0xff]
        %v3321 = vld [vmem:[%s185 + $0x11c] sm:$0xff]
        %v3322 = vld [vmem:[%s185 + $0x124] sm:$0xff]
        %v3323 = vld [vmem:[%s185 + $0x12c] sm:$0xff]
        %v3324 = vld [vmem:[%s185 + $0x134] sm:$0xff]
        %v3325 = vld [vmem:[%s185 + $0x13c] sm:$0xff]
        %vm3326 = vcmp.ge.f32.partialorder %v3290, 0.0
        %vm3327 = vcmp.ge.f32.partialorder %v3291, 0.0
        %vm3328 = vcmp.ge.f32.partialorder %v3292, 0.0
        %vm3329 = vcmp.ge.f32.partialorder %v3293, 0.0
        %vm3330 = vcmp.ge.f32.partialorder %v3294, 0.0
        %vm3331 = vcmp.ge.f32.partialorder %v3295, 0.0
        %vm3332 = vcmp.ge.f32.partialorder %v3296, 0.0
        %vm3333 = vcmp.ge.f32.partialorder %v3297, 0.0
        %vm3334 = vcmp.ge.f32.partialorder %v3298, 0.0
        %vm3335 = vcmp.ge.f32.partialorder %v3299, 0.0
        %vm3336 = vcmp.ge.f32.partialorder %v3300, 0.0
        %vm3337 = vcmp.ge.f32.partialorder %v3301, 0.0
        %vm3338 = vcmp.ge.f32.partialorder %v3302, 0.0
        %vm3339 = vcmp.ge.f32.partialorder %v3303, 0.0
        %vm3340 = vcmp.ge.f32.partialorder %v3304, 0.0
        %vm3341 = vcmp.ge.f32.partialorder %v3305, 0.0
        %vm3342 = vcmp.ge.f32.partialorder %v3306, 0.0
        %vm3343 = vcmp.ge.f32.partialorder %v3307, 0.0
        %vm3344 = vcmp.ge.f32.partialorder %v3308, 0.0
        %vm3345 = vcmp.ge.f32.partialorder %v3309, 0.0
        %vm3346 = vcmp.ge.f32.partialorder %v3310, 0.0
        %vm3347 = vcmp.ge.f32.partialorder %v3311, 0.0
        %vm3348 = vcmp.ge.f32.partialorder %v3312, 0.0
        %vm3349 = vcmp.ge.f32.partialorder %v3313, 0.0
        %vm3350 = vcmp.ge.f32.partialorder %v3314, 0.0
        %vm3351 = vcmp.ge.f32.partialorder %v3315, 0.0
        %vm3352 = vcmp.ge.f32.partialorder %v3316, 0.0
        %vm3353 = vcmp.ge.f32.partialorder %v3317, 0.0
        %vm3354 = vcmp.ge.f32.partialorder %v3318, 0.0
        %vm3355 = vcmp.ge.f32.partialorder %v3319, 0.0
        %vm3356 = vcmp.ge.f32.partialorder %v3320, 0.0
        %vm3357 = vcmp.ge.f32.partialorder %v3321, 0.0
        %vm3358 = vcmp.ge.f32.partialorder %v3322, 0.0
        %vm3359 = vcmp.ge.f32.partialorder %v3323, 0.0
        %vm3360 = vcmp.ge.f32.partialorder %v3324, 0.0
        %vm3361 = vcmp.ge.f32.partialorder %v3325, 0.0
        %v3362 = vsel %vm3326, 1, 0
        %v3363 = vsel %vm3327, 1, 0
        %v3364 = vsel %vm3328, 1, 0
        %v3365 = vsel %vm3329, 1, 0
        %v3366 = vsel %vm3330, 1, 0
        %v3367 = vsel %vm3331, 1, 0
        %v3368 = vsel %vm3332, 1, 0
        %v3369 = vsel %vm3333, 1, 0
        %v3370 = vsel %vm3334, 1, 0
        %v3371 = vsel %vm3335, 1, 0
        %v3372 = vsel %vm3336, 1, 0
        %v3373 = vsel %vm3337, 1, 0
        %v3374 = vsel %vm3338, 1, 0
        %v3375 = vsel %vm3339, 1, 0
        %v3376 = vsel %vm3340, 1, 0
        %v3377 = vsel %vm3341, 1, 0
        %v3378 = vsel %vm3342, 1, 0
        %v3379 = vsel %vm3343, 1, 0
        %v3380 = vsel %vm3344, 1, 0
        %v3381 = vsel %vm3345, 1, 0
        %v3382 = vsel %vm3346, 1, 0
        %v3383 = vsel %vm3347, 1, 0
        %v3384 = vsel %vm3348, 1, 0
        %v3385 = vsel %vm3349, 1, 0
        %v3386 = vsel %vm3350, 1, 0
        %v3387 = vsel %vm3351, 1, 0
        %v3388 = vsel %vm3352, 1, 0
        %v3389 = vsel %vm3353, 1, 0
        %v3390 = vsel %vm3354, 1, 0
        %v3391 = vsel %vm3355, 1, 0
        %v3392 = vsel %vm3356, 1, 0
        %v3393 = vsel %vm3357, 1, 0
        %v3394 = vsel %vm3358, 1, 0
        %v3395 = vsel %vm3359, 1, 0
        %v3396 = vsel %vm3360, 1, 0
        %v3397 = vsel %vm3361, 1, 0
        %v3398 = vcvt.s32.f32 %v3362
        %v3399 = vcvt.s32.f32 %v3363
        %v3400 = vcvt.s32.f32 %v3364
        %v3401 = vcvt.s32.f32 %v3365
        %v3402 = vcvt.s32.f32 %v3366
        %v3403 = vcvt.s32.f32 %v3367
        %v3404 = vcvt.s32.f32 %v3368
        %v3405 = vcvt.s32.f32 %v3369
        %v3406 = vcvt.s32.f32 %v3370
        %v3407 = vcvt.s32.f32 %v3371
        %v3408 = vcvt.s32.f32 %v3372
        %v3409 = vcvt.s32.f32 %v3373
        %v3410 = vcvt.s32.f32 %v3374
        %v3411 = vcvt.s32.f32 %v3375
        %v3412 = vcvt.s32.f32 %v3376
        %v3413 = vcvt.s32.f32 %v3377
        %v3414 = vcvt.s32.f32 %v3378
        %v3415 = vcvt.s32.f32 %v3379
        %v3416 = vcvt.s32.f32 %v3380
        %v3417 = vcvt.s32.f32 %v3381
        %v3418 = vcvt.s32.f32 %v3382
        %v3419 = vcvt.s32.f32 %v3383
        %v3420 = vcvt.s32.f32 %v3384
        %v3421 = vcvt.s32.f32 %v3385
        %v3422 = vcvt.s32.f32 %v3386
        %v3423 = vcvt.s32.f32 %v3387
        %v3424 = vcvt.s32.f32 %v3388
        %v3425 = vcvt.s32.f32 %v3389
        %v3426 = vcvt.s32.f32 %v3390
        %v3427 = vcvt.s32.f32 %v3391
        %v3428 = vcvt.s32.f32 %v3392
        %v3429 = vcvt.s32.f32 %v3393
        %v3430 = vcvt.s32.f32 %v3394
        %v3431 = vcvt.s32.f32 %v3395
        %v3432 = vcvt.s32.f32 %v3396
        %v3433 = vcvt.s32.f32 %v3397
        %v3434 = vpack.c.bf16 %v3399, %v3398
        %v3435 = vpack.c.bf16 %v3401, %v3400
        %v3436 = vpack.c.bf16 %v3403, %v3402
        %v3437 = vpack.c.bf16 %v3405, %v3404
        %v3438 = vpack.c.bf16 %v3407, %v3406
        %v3439 = vpack.c.bf16 %v3409, %v3408
        %v3440 = vpack.c.bf16 %v3411, %v3410
        %v3441 = vpack.c.bf16 %v3413, %v3412
        %v3442 = vpack.c.bf16 %v3415, %v3414
        %v3443 = vpack.c.bf16 %v3417, %v3416
        %v3444 = vpack.c.bf16 %v3419, %v3418
        %v3445 = vpack.c.bf16 %v3421, %v3420
        %v3446 = vpack.c.bf16 %v3423, %v3422
        %v3447 = vpack.c.bf16 %v3425, %v3424
        %v3448 = vpack.c.bf16 %v3427, %v3426
        %v3449 = vpack.c.bf16 %v3429, %v3428
        %v3450 = vpack.c.bf16 %v3431, %v3430
        %v3451 = vpack.c.bf16 %v3433, %v3432
        %v3452 = vld [vmem:[#allocation2] sm:$0xff]
        %v3453 = vld [vmem:[#allocation2 + $0x8] sm:$0xff]
        %v3454 = vld [vmem:[#allocation2 + $0x10] sm:$0xff]
        %v3455 = vld [vmem:[#allocation2 + $0x18] sm:$0xff]
        %v3456 = vld [vmem:[#allocation2 + $0x20] sm:$0xff]
        %v3457 = vld [vmem:[#allocation2 + $0x28] sm:$0xff]
        %v3458 = vld [vmem:[#allocation2 + $0x30] sm:$0xff]
        %v3459 = vld [vmem:[#allocation2 + $0x38] sm:$0xff]
        %v3460 = vld [vmem:[#allocation2 + $0x40] sm:$0xff]
        %v3461 = vld [vmem:[#allocation2 + $0x48] sm:$0xff]
        %v3462 = vld [vmem:[#allocation2 + $0x50] sm:$0xff]
        %v3463 = vld [vmem:[#allocation2 + $0x58] sm:$0xff]
        %v3464 = vld [vmem:[#allocation2 + $0x60] sm:$0xff]
        %v3465 = vld [vmem:[#allocation2 + $0x68] sm:$0xff]
        %v3466 = vld [vmem:[#allocation2 + $0x70] sm:$0xff]
        %v3467 = vld [vmem:[#allocation2 + $0x78] sm:$0xff]
        %v3468 = vld [vmem:[#allocation2 + $0x80] sm:$0xff]
        %v3469 = vld [vmem:[#allocation2 + $0x88] sm:$0xff]
        %v3470 = vld [vmem:[#allocation2 + $0x90] sm:$0xff]
        %v3471 = vld [vmem:[#allocation2 + $0x98] sm:$0xff]
        %v3472 = vld [vmem:[#allocation2 + $0xa0] sm:$0xff]
        %v3473 = vld [vmem:[#allocation2 + $0xa8] sm:$0xff]
        %v3474 = vld [vmem:[#allocation2 + $0xb0] sm:$0xff]
        %v3475 = vld [vmem:[#allocation2 + $0xb8] sm:$0xff]
        %v3476 = vld [vmem:[#allocation2 + $0xc0] sm:$0xff]
        %v3477 = vld [vmem:[#allocation2 + $0xc8] sm:$0xff]
        %v3478 = vld [vmem:[#allocation2 + $0xd0] sm:$0xff]
        %v3479 = vld [vmem:[#allocation2 + $0xd8] sm:$0xff]
        %v3480 = vld [vmem:[#allocation2 + $0xe0] sm:$0xff]
        %v3481 = vld [vmem:[#allocation2 + $0xe8] sm:$0xff]
        %v3482 = vld [vmem:[#allocation2 + $0xf0] sm:$0xff]
        %v3483 = vld [vmem:[#allocation2 + $0xf8] sm:$0xff]
        %v3484 = vld [vmem:[#allocation2 + $0x100] sm:$0xff]
        %v3485 = vld [vmem:[#allocation2 + $0x108] sm:$0xff]
        %v3486 = vld [vmem:[#allocation2 + $0x110] sm:$0xff]
        %v3487 = vld [vmem:[#allocation2 + $0x118] sm:$0xff]
        %s3488 = scalar_lea.vmem [#allocation6], 12
        %v3489 = vld [vmem:[%s3488] sm:$0x3]
        %v3491 = vsel %vm452, %v3434, 0
        %v3494 = vsel %vm452, %v3435, 0
        %v3497 = vsel %vm452, %v3436, 0
        %v3500 = vsel %vm452, %v3437, 0
        %v3503 = vsel %vm452, %v3438, 0
        %v3506 = vsel %vm452, %v3439, 0
        %v3509 = vsel %vm452, %v3440, 0
        %v3512 = vsel %vm452, %v3441, 0
        %v3515 = vsel %vm452, %v3442, 0
        %v3518 = vsel %vm452, %v3443, 0
        %v3521 = vsel %vm452, %v3444, 0
        %v3524 = vsel %vm452, %v3445, 0
        %v3527 = vsel %vm452, %v3446, 0
        %v3530 = vsel %vm452, %v3447, 0
        %v3533 = vsel %vm452, %v3448, 0
        %v3536 = vsel %vm452, %v3449, 0
        %v3539 = vsel %vm452, %v3450, 0
        %v3542 = vsel %vm452, %v3451, 0
        %v3545 = vsel %vm507, %v3489, 0
        %3547 = vmatprep.subr.bf16.mxu0 0
        %3548 = vmatpush1.bf16.msra.mxu0 %v3545
        %3549 = vmatprep.subr.bf16.mxu0 0
        %3550 = vmatpush1.bf16.msra.mxu0 0
        %3551 = vmatprep.subr.bf16.mxu0 0
        %3552 = vmatpush1.bf16.msra.mxu0 0
        %3553 = vmatprep.subr.bf16.mxu0 0
        %3554 = vmatpush1.bf16.msra.mxu0 0
        %3555 = vmatprep.subr.bf16.mxu0 0
        %3556 = vmatpush1.bf16.msra.mxu0 0
        %3557 = vmatprep.subr.bf16.mxu0 0
        %3558 = vmatpush1.bf16.msra.mxu0 0
        %3559 = vmatprep.subr.bf16.mxu0 0
        %3560 = vmatpush1.bf16.msra.mxu0 0
        %3561 = vmatprep.subr.bf16.mxu0 0
        %3562 = vmatpush1.bf16.msra.mxu0 0
        %3563 = vmatprep.subr.bf16.mxu0 0
        %3564 = vmatpush1.bf16.msra.mxu0 0
        %3565 = vmatprep.subr.bf16.mxu0 0
        %3566 = vmatpush1.bf16.msra.mxu0 0
        %3567 = vmatprep.subr.bf16.mxu0 0
        %3568 = vmatpush1.bf16.msra.mxu0 0
        %3569 = vmatprep.subr.bf16.mxu0 0
        %3570 = vmatpush1.bf16.msra.mxu0 0
        %3571 = vmatprep.subr.bf16.mxu0 0
        %3572 = vmatpush1.bf16.msra.mxu0 0
        %3573 = vmatprep.subr.bf16.mxu0 0
        %3574 = vmatpush1.bf16.msra.mxu0 0
        %3575 = vmatprep.subr.bf16.mxu0 0
        %3576 = vmatpush1.bf16.msra.mxu0 0
        %3577 = vmatprep.subr.bf16.mxu0 0
        %3578 = vmatpush1.bf16.msra.mxu0 0
        %3579 = vmatprep.mubr.bf16.mxu0 0
        %3580 = vmatmul.mubr.bf16.gmra.mrb[0].mxu0 %v3491
        %v3581 = vpop.f32.mrb[0].mxu0
        %v3582 = vadd.f32 0.0, %v3581
        %v3583 = vpop.f32.mrb[0].mxu0
        %v3584 = vpop.f32.mrb[0].mxu0
        %v3585 = vadd.f32 0.0, %v3584
        %v3586 = vpop.f32.mrb[0].mxu0
        %3587 = vmatprep.mubr.bf16.mxu0 0
        %3588 = vmatmul.mubr.bf16.gmra.mrb[0].mxu0 %v3494
        %v3589 = vpop.f32.mrb[0].mxu0
        %v3590 = vadd.f32 0.0, %v3589
        %v3591 = vpop.f32.mrb[0].mxu0
        %v3592 = vpop.f32.mrb[0].mxu0
        %v3593 = vadd.f32 0.0, %v3592
        %v3594 = vpop.f32.mrb[0].mxu0
        %3595 = vmatprep.mubr.bf16.mxu0 0
        %3596 = vmatmul.mubr.bf16.gmra.mrb[0].mxu0 %v3497
        %v3597 = vpop.f32.mrb[0].mxu0
        %v3598 = vadd.f32 0.0, %v3597
        %v3599 = vpop.f32.mrb[0].mxu0
        %v3600 = vpop.f32.mrb[0].mxu0
        %v3601 = vadd.f32 0.0, %v3600
        %v3602 = vpop.f32.mrb[0].mxu0
        %3603 = vmatprep.mubr.bf16.mxu0 0
        %3604 = vmatmul.mubr.bf16.gmra.mrb[0].mxu0 %v3500
        %v3605 = vpop.f32.mrb[0].mxu0
        %v3606 = vadd.f32 0.0, %v3605
        %v3607 = vpop.f32.mrb[0].mxu0
        %v3608 = vpop.f32.mrb[0].mxu0
        %v3609 = vadd.f32 0.0, %v3608
        %v3610 = vpop.f32.mrb[0].mxu0
        %3611 = vmatprep.mubr.bf16.mxu0 0
        %3612 = vmatmul.mubr.bf16.gmra.mrb[0].mxu0 %v3503
        %v3613 = vpop.f32.mrb[0].mxu0
        %v3614 = vadd.f32 0.0, %v3613
        %v3615 = vpop.f32.mrb[0].mxu0
        %v3616 = vpop.f32.mrb[0].mxu0
        %v3617 = vadd.f32 0.0, %v3616
        %v3618 = vpop.f32.mrb[0].mxu0
        %3619 = vmatprep.mubr.bf16.mxu0 0
        %3620 = vmatmul.mubr.bf16.gmra.mrb[0].mxu0 %v3506
        %v3621 = vpop.f32.mrb[0].mxu0
        %v3622 = vadd.f32 0.0, %v3621
        %v3623 = vpop.f32.mrb[0].mxu0
        %v3624 = vpop.f32.mrb[0].mxu0
        %v3625 = vadd.f32 0.0, %v3624
        %v3626 = vpop.f32.mrb[0].mxu0
        %3627 = vmatprep.mubr.bf16.mxu0 0
        %3628 = vmatmul.mubr.bf16.gmra.mrb[0].mxu0 %v3509
        %v3629 = vpop.f32.mrb[0].mxu0
        %v3630 = vadd.f32 0.0, %v3629
        %v3631 = vpop.f32.mrb[0].mxu0
        %v3632 = vpop.f32.mrb[0].mxu0
        %v3633 = vadd.f32 0.0, %v3632
        %v3634 = vpop.f32.mrb[0].mxu0
        %3635 = vmatprep.mubr.bf16.mxu0 0
        %3636 = vmatmul.mubr.bf16.gmra.mrb[0].mxu0 %v3512
        %v3637 = vpop.f32.mrb[0].mxu0
        %v3638 = vadd.f32 0.0, %v3637
        %v3639 = vpop.f32.mrb[0].mxu0
        %v3640 = vpop.f32.mrb[0].mxu0
        %v3641 = vadd.f32 0.0, %v3640
        %v3642 = vpop.f32.mrb[0].mxu0
        %3643 = vmatprep.mubr.bf16.mxu0 0
        %3644 = vmatmul.mubr.bf16.gmra.mrb[0].mxu0 %v3515
        %v3645 = vpop.f32.mrb[0].mxu0
        %v3646 = vadd.f32 0.0, %v3645
        %v3647 = vpop.f32.mrb[0].mxu0
        %v3648 = vpop.f32.mrb[0].mxu0
        %v3649 = vadd.f32 0.0, %v3648
        %v3650 = vpop.f32.mrb[0].mxu0
        %3651 = vmatprep.mubr.bf16.mxu0 0
        %3652 = vmatmul.mubr.bf16.gmra.mrb[0].mxu0 %v3518
        %v3653 = vpop.f32.mrb[0].mxu0
        %v3654 = vadd.f32 0.0, %v3653
        %v3655 = vpop.f32.mrb[0].mxu0
        %v3656 = vpop.f32.mrb[0].mxu0
        %v3657 = vadd.f32 0.0, %v3656
        %v3658 = vpop.f32.mrb[0].mxu0
        %3659 = vmatprep.mubr.bf16.mxu0 0
        %3660 = vmatmul.mubr.bf16.gmra.mrb[0].mxu0 %v3521
        %v3661 = vpop.f32.mrb[0].mxu0
        %v3662 = vadd.f32 0.0, %v3661
        %v3663 = vpop.f32.mrb[0].mxu0
        %v3664 = vpop.f32.mrb[0].mxu0
        %v3665 = vadd.f32 0.0, %v3664
        %v3666 = vpop.f32.mrb[0].mxu0
        %3667 = vmatprep.mubr.bf16.mxu0 0
        %3668 = vmatmul.mubr.bf16.gmra.mrb[0].mxu0 %v3524
        %v3669 = vpop.f32.mrb[0].mxu0
        %v3670 = vadd.f32 0.0, %v3669
        %v3671 = vpop.f32.mrb[0].mxu0
        %v3672 = vpop.f32.mrb[0].mxu0
        %v3673 = vadd.f32 0.0, %v3672
        %v3674 = vpop.f32.mrb[0].mxu0
        %3675 = vmatprep.mubr.bf16.mxu0 0
        %3676 = vmatmul.mubr.bf16.gmra.mrb[0].mxu0 %v3527
        %v3677 = vpop.f32.mrb[0].mxu0
        %v3678 = vadd.f32 0.0, %v3677
        %v3679 = vpop.f32.mrb[0].mxu0
        %v3680 = vpop.f32.mrb[0].mxu0
        %v3681 = vadd.f32 0.0, %v3680
        %v3682 = vpop.f32.mrb[0].mxu0
        %3683 = vmatprep.mubr.bf16.mxu0 0
        %3684 = vmatmul.mubr.bf16.gmra.mrb[0].mxu0 %v3530
        %v3685 = vpop.f32.mrb[0].mxu0
        %v3686 = vadd.f32 0.0, %v3685
        %v3687 = vpop.f32.mrb[0].mxu0
        %v3688 = vpop.f32.mrb[0].mxu0
        %v3689 = vadd.f32 0.0, %v3688
        %v3690 = vpop.f32.mrb[0].mxu0
        %3691 = vmatprep.mubr.bf16.mxu0 0
        %3692 = vmatmul.mubr.bf16.gmra.mrb[0].mxu0 %v3533
        %v3693 = vpop.f32.mrb[0].mxu0
        %v3694 = vadd.f32 0.0, %v3693
        %v3695 = vpop.f32.mrb[0].mxu0
        %v3696 = vpop.f32.mrb[0].mxu0
        %v3697 = vadd.f32 0.0, %v3696
        %v3698 = vpop.f32.mrb[0].mxu0
        %3699 = vmatprep.mubr.bf16.mxu0 0
        %3700 = vmatmul.mubr.bf16.gmra.mrb[0].mxu0 %v3536
        %v3701 = vpop.f32.mrb[0].mxu0
        %v3702 = vadd.f32 0.0, %v3701
        %v3703 = vpop.f32.mrb[0].mxu0
        %v3704 = vpop.f32.mrb[0].mxu0
        %v3705 = vadd.f32 0.0, %v3704
        %v3706 = vpop.f32.mrb[0].mxu0
        %3707 = vmatprep.mubr.bf16.mxu0 0
        %3708 = vmatmul.mubr.bf16.gmra.mrb[0].mxu0 %v3539
        %v3709 = vpop.f32.mrb[0].mxu0
        %v3710 = vadd.f32 0.0, %v3709
        %v3711 = vpop.f32.mrb[0].mxu0
        %v3712 = vpop.f32.mrb[0].mxu0
        %v3713 = vadd.f32 0.0, %v3712
        %v3714 = vpop.f32.mrb[0].mxu0
        %3715 = vmatprep.mubr.bf16.mxu0 0
        %3716 = vmatmul.mubr.bf16.gmra.mrb[0].mxu0 %v3542
        %v3717 = vpop.f32.mrb[0].mxu0
        %v3718 = vadd.f32 0.0, %v3717
        %v3719 = vpop.f32.mrb[0].mxu0
        %v3720 = vpop.f32.mrb[0].mxu0
        %v3721 = vadd.f32 0.0, %v3720
        %v3722 = vpop.f32.mrb[0].mxu0
        %3723 = vdwg.mxu0
        %v3724 = vadd.f32 %v3452, %v3582
        %v3725 = vadd.f32 %v3453, %v3585
        %v3726 = vadd.f32 %v3454, %v3590
        %v3727 = vadd.f32 %v3455, %v3593
        %v3728 = vadd.f32 %v3456, %v3598
        %v3729 = vadd.f32 %v3457, %v3601
        %v3730 = vadd.f32 %v3458, %v3606
        %v3731 = vadd.f32 %v3459, %v3609
        %v3732 = vadd.f32 %v3460, %v3614
        %v3733 = vadd.f32 %v3461, %v3617
        %v3734 = vadd.f32 %v3462, %v3622
        %v3735 = vadd.f32 %v3463, %v3625
        %v3736 = vadd.f32 %v3464, %v3630
        %v3737 = vadd.f32 %v3465, %v3633
        %v3738 = vadd.f32 %v3466, %v3638
        %v3739 = vadd.f32 %v3467, %v3641
        %v3740 = vadd.f32 %v3468, %v3646
        %v3741 = vadd.f32 %v3469, %v3649
        %v3742 = vadd.f32 %v3470, %v3654
        %v3743 = vadd.f32 %v3471, %v3657
        %v3744 = vadd.f32 %v3472, %v3662
        %v3745 = vadd.f32 %v3473, %v3665
        %v3746 = vadd.f32 %v3474, %v3670
        %v3747 = vadd.f32 %v3475, %v3673
        %v3748 = vadd.f32 %v3476, %v3678
        %v3749 = vadd.f32 %v3477, %v3681
        %v3750 = vadd.f32 %v3478, %v3686
        %v3751 = vadd.f32 %v3479, %v3689
        %v3752 = vadd.f32 %v3480, %v3694
        %v3753 = vadd.f32 %v3481, %v3697
        %v3754 = vadd.f32 %v3482, %v3702
        %v3755 = vadd.f32 %v3483, %v3705
        %v3756 = vadd.f32 %v3484, %v3710
        %v3757 = vadd.f32 %v3485, %v3713
        %v3758 = vadd.f32 %v3486, %v3718
        %v3759 = vadd.f32 %v3487, %v3721
        %3760 = vst [vmem:[#allocation2] sm:$0xff] %v3724
        %3761 = vst [vmem:[#allocation2 + $0x8] sm:$0xff] %v3725
        %3762 = vst [vmem:[#allocation2 + $0x10] sm:$0xff] %v3726
        %3763 = vst [vmem:[#allocation2 + $0x18] sm:$0xff] %v3727
        %3764 = vst [vmem:[#allocation2 + $0x20] sm:$0xff] %v3728
        %3765 = vst [vmem:[#allocation2 + $0x28] sm:$0xff] %v3729
        %3766 = vst [vmem:[#allocation2 + $0x30] sm:$0xff] %v3730
        %3767 = vst [vmem:[#allocation2 + $0x38] sm:$0xff] %v3731
        %3768 = vst [vmem:[#allocation2 + $0x40] sm:$0xff] %v3732
        %3769 = vst [vmem:[#allocation2 + $0x48] sm:$0xff] %v3733
        %3770 = vst [vmem:[#allocation2 + $0x50] sm:$0xff] %v3734
        %3771 = vst [vmem:[#allocation2 + $0x58] sm:$0xff] %v3735
        %3772 = vst [vmem:[#allocation2 + $0x60] sm:$0xff] %v3736
        %3773 = vst [vmem:[#allocation2 + $0x68] sm:$0xff] %v3737
        %3774 = vst [vmem:[#allocation2 + $0x70] sm:$0xff] %v3738
        %3775 = vst [vmem:[#allocation2 + $0x78] sm:$0xff] %v3739
        %3776 = vst [vmem:[#allocation2 + $0x80] sm:$0xff] %v3740
        %3777 = vst [vmem:[#allocation2 + $0x88] sm:$0xff] %v3741
        %3778 = vst [vmem:[#allocation2 + $0x90] sm:$0xff] %v3742
        %3779 = vst [vmem:[#allocation2 + $0x98] sm:$0xff] %v3743
        %3780 = vst [vmem:[#allocation2 + $0xa0] sm:$0xff] %v3744
        %3781 = vst [vmem:[#allocation2 + $0xa8] sm:$0xff] %v3745
        %3782 = vst [vmem:[#allocation2 + $0xb0] sm:$0xff] %v3746
        %3783 = vst [vmem:[#allocation2 + $0xb8] sm:$0xff] %v3747
        %3784 = vst [vmem:[#allocation2 + $0xc0] sm:$0xff] %v3748
        %3785 = vst [vmem:[#allocation2 + $0xc8] sm:$0xff] %v3749
        %3786 = vst [vmem:[#allocation2 + $0xd0] sm:$0xff] %v3750
        %3787 = vst [vmem:[#allocation2 + $0xd8] sm:$0xff] %v3751
        %3788 = vst [vmem:[#allocation2 + $0xe0] sm:$0xff] %v3752
        %3789 = vst [vmem:[#allocation2 + $0xe8] sm:$0xff] %v3753
        %3790 = vst [vmem:[#allocation2 + $0xf0] sm:$0xff] %v3754
        %3791 = vst [vmem:[#allocation2 + $0xf8] sm:$0xff] %v3755
        %3792 = vst [vmem:[#allocation2 + $0x100] sm:$0xff] %v3756
        %3793 = vst [vmem:[#allocation2 + $0x108] sm:$0xff] %v3757
        %3794 = vst [vmem:[#allocation2 + $0x110] sm:$0xff] %v3758
        %3795 = vst [vmem:[#allocation2 + $0x118] sm:$0xff] %v3759
        %v3796 = vld [vmem:[%s185 + $0x25] sm:$0xff]
        %v3797 = vld [vmem:[%s185 + $0x2d] sm:$0xff]
        %v3798 = vld [vmem:[%s185 + $0x35] sm:$0xff]
        %v3799 = vld [vmem:[%s185 + $0x3d] sm:$0xff]
        %v3800 = vld [vmem:[%s185 + $0x45] sm:$0xff]
        %v3801 = vld [vmem:[%s185 + $0x4d] sm:$0xff]
        %v3802 = vld [vmem:[%s185 + $0x55] sm:$0xff]
        %v3803 = vld [vmem:[%s185 + $0x5d] sm:$0xff]
        %v3804 = vld [vmem:[%s185 + $0x65] sm:$0xff]
        %v3805 = vld [vmem:[%s185 + $0x6d] sm:$0xff]
        %v3806 = vld [vmem:[%s185 + $0x75] sm:$0xff]
        %v3807 = vld [vmem:[%s185 + $0x7d] sm:$0xff]
        %v3808 = vld [vmem:[%s185 + $0x85] sm:$0xff]
        %v3809 = vld [vmem:[%s185 + $0x8d] sm:$0xff]
        %v3810 = vld [vmem:[%s185 + $0x95] sm:$0xff]
        %v3811 = vld [vmem:[%s185 + $0x9d] sm:$0xff]
        %v3812 = vld [vmem:[%s185 + $0xa5] sm:$0xff]
        %v3813 = vld [vmem:[%s185 + $0xad] sm:$0xff]
        %v3814 = vld [vmem:[%s185 + $0xb5] sm:$0xff]
        %v3815 = vld [vmem:[%s185 + $0xbd] sm:$0xff]
        %v3816 = vld [vmem:[%s185 + $0xc5] sm:$0xff]
        %v3817 = vld [vmem:[%s185 + $0xcd] sm:$0xff]
        %v3818 = vld [vmem:[%s185 + $0xd5] sm:$0xff]
        %v3819 = vld [vmem:[%s185 + $0xdd] sm:$0xff]
        %v3820 = vld [vmem:[%s185 + $0xe5] sm:$0xff]
        %v3821 = vld [vmem:[%s185 + $0xed] sm:$0xff]
        %v3822 = vld [vmem:[%s185 + $0xf5] sm:$0xff]
        %v3823 = vld [vmem:[%s185 + $0xfd] sm:$0xff]
        %v3824 = vld [vmem:[%s185 + $0x105] sm:$0xff]
        %v3825 = vld [vmem:[%s185 + $0x10d] sm:$0xff]
        %v3826 = vld [vmem:[%s185 + $0x115] sm:$0xff]
        %v3827 = vld [vmem:[%s185 + $0x11d] sm:$0xff]
        %v3828 = vld [vmem:[%s185 + $0x125] sm:$0xff]
        %v3829 = vld [vmem:[%s185 + $0x12d] sm:$0xff]
        %v3830 = vld [vmem:[%s185 + $0x135] sm:$0xff]
        %v3831 = vld [vmem:[%s185 + $0x13d] sm:$0xff]
        %vm3832 = vcmp.ge.f32.partialorder %v3796, 0.0
        %vm3833 = vcmp.ge.f32.partialorder %v3797, 0.0
        %vm3834 = vcmp.ge.f32.partialorder %v3798, 0.0
        %vm3835 = vcmp.ge.f32.partialorder %v3799, 0.0
        %vm3836 = vcmp.ge.f32.partialorder %v3800, 0.0
        %vm3837 = vcmp.ge.f32.partialorder %v3801, 0.0
        %vm3838 = vcmp.ge.f32.partialorder %v3802, 0.0
        %vm3839 = vcmp.ge.f32.partialorder %v3803, 0.0
        %vm3840 = vcmp.ge.f32.partialorder %v3804, 0.0
        %vm3841 = vcmp.ge.f32.partialorder %v3805, 0.0
        %vm3842 = vcmp.ge.f32.partialorder %v3806, 0.0
        %vm3843 = vcmp.ge.f32.partialorder %v3807, 0.0
        %vm3844 = vcmp.ge.f32.partialorder %v3808, 0.0
        %vm3845 = vcmp.ge.f32.partialorder %v3809, 0.0
        %vm3846 = vcmp.ge.f32.partialorder %v3810, 0.0
        %vm3847 = vcmp.ge.f32.partialorder %v3811, 0.0
        %vm3848 = vcmp.ge.f32.partialorder %v3812, 0.0
        %vm3849 = vcmp.ge.f32.partialorder %v3813, 0.0
        %vm3850 = vcmp.ge.f32.partialorder %v3814, 0.0
        %vm3851 = vcmp.ge.f32.partialorder %v3815, 0.0
        %vm3852 = vcmp.ge.f32.partialorder %v3816, 0.0
        %vm3853 = vcmp.ge.f32.partialorder %v3817, 0.0
        %vm3854 = vcmp.ge.f32.partialorder %v3818, 0.0
        %vm3855 = vcmp.ge.f32.partialorder %v3819, 0.0
        %vm3856 = vcmp.ge.f32.partialorder %v3820, 0.0
        %vm3857 = vcmp.ge.f32.partialorder %v3821, 0.0
        %vm3858 = vcmp.ge.f32.partialorder %v3822, 0.0
        %vm3859 = vcmp.ge.f32.partialorder %v3823, 0.0
        %vm3860 = vcmp.ge.f32.partialorder %v3824, 0.0
        %vm3861 = vcmp.ge.f32.partialorder %v3825, 0.0
        %vm3862 = vcmp.ge.f32.partialorder %v3826, 0.0
        %vm3863 = vcmp.ge.f32.partialorder %v3827, 0.0
        %vm3864 = vcmp.ge.f32.partialorder %v3828, 0.0
        %vm3865 = vcmp.ge.f32.partialorder %v3829, 0.0
        %vm3866 = vcmp.ge.f32.partialorder %v3830, 0.0
        %vm3867 = vcmp.ge.f32.partialorder %v3831, 0.0
        %v3868 = vsel %vm3832, 1, 0
        %v3869 = vsel %vm3833, 1, 0
        %v3870 = vsel %vm3834, 1, 0
        %v3871 = vsel %vm3835, 1, 0
        %v3872 = vsel %vm3836, 1, 0
        %v3873 = vsel %vm3837, 1, 0
        %v3874 = vsel %vm3838, 1, 0
        %v3875 = vsel %vm3839, 1, 0
        %v3876 = vsel %vm3840, 1, 0
        %v3877 = vsel %vm3841, 1, 0
        %v3878 = vsel %vm3842, 1, 0
        %v3879 = vsel %vm3843, 1, 0
        %v3880 = vsel %vm3844, 1, 0
        %v3881 = vsel %vm3845, 1, 0
        %v3882 = vsel %vm3846, 1, 0
        %v3883 = vsel %vm3847, 1, 0
        %v3884 = vsel %vm3848, 1, 0
        %v3885 = vsel %vm3849, 1, 0
        %v3886 = vsel %vm3850, 1, 0
        %v3887 = vsel %vm3851, 1, 0
        %v3888 = vsel %vm3852, 1, 0
        %v3889 = vsel %vm3853, 1, 0
        %v3890 = vsel %vm3854, 1, 0
        %v3891 = vsel %vm3855, 1, 0
        %v3892 = vsel %vm3856, 1, 0
        %v3893 = vsel %vm3857, 1, 0
        %v3894 = vsel %vm3858, 1, 0
        %v3895 = vsel %vm3859, 1, 0
        %v3896 = vsel %vm3860, 1, 0
        %v3897 = vsel %vm3861, 1, 0
        %v3898 = vsel %vm3862, 1, 0
        %v3899 = vsel %vm3863, 1, 0
        %v3900 = vsel %vm3864, 1, 0
        %v3901 = vsel %vm3865, 1, 0
        %v3902 = vsel %vm3866, 1, 0
        %v3903 = vsel %vm3867, 1, 0
        %v3904 = vcvt.s32.f32 %v3868
        %v3905 = vcvt.s32.f32 %v3869
        %v3906 = vcvt.s32.f32 %v3870
        %v3907 = vcvt.s32.f32 %v3871
        %v3908 = vcvt.s32.f32 %v3872
        %v3909 = vcvt.s32.f32 %v3873
        %v3910 = vcvt.s32.f32 %v3874
        %v3911 = vcvt.s32.f32 %v3875
        %v3912 = vcvt.s32.f32 %v3876
        %v3913 = vcvt.s32.f32 %v3877
        %v3914 = vcvt.s32.f32 %v3878
        %v3915 = vcvt.s32.f32 %v3879
        %v3916 = vcvt.s32.f32 %v3880
        %v3917 = vcvt.s32.f32 %v3881
        %v3918 = vcvt.s32.f32 %v3882
        %v3919 = vcvt.s32.f32 %v3883
        %v3920 = vcvt.s32.f32 %v3884
        %v3921 = vcvt.s32.f32 %v3885
        %v3922 = vcvt.s32.f32 %v3886
        %v3923 = vcvt.s32.f32 %v3887
        %v3924 = vcvt.s32.f32 %v3888
        %v3925 = vcvt.s32.f32 %v3889
        %v3926 = vcvt.s32.f32 %v3890
        %v3927 = vcvt.s32.f32 %v3891
        %v3928 = vcvt.s32.f32 %v3892
        %v3929 = vcvt.s32.f32 %v3893
        %v3930 = vcvt.s32.f32 %v3894
        %v3931 = vcvt.s32.f32 %v3895
        %v3932 = vcvt.s32.f32 %v3896
        %v3933 = vcvt.s32.f32 %v3897
        %v3934 = vcvt.s32.f32 %v3898
        %v3935 = vcvt.s32.f32 %v3899
        %v3936 = vcvt.s32.f32 %v3900
        %v3937 = vcvt.s32.f32 %v3901
        %v3938 = vcvt.s32.f32 %v3902
        %v3939 = vcvt.s32.f32 %v3903
        %v3940 = vpack.c.bf16 %v3905, %v3904
        %v3941 = vpack.c.bf16 %v3907, %v3906
        %v3942 = vpack.c.bf16 %v3909, %v3908
        %v3943 = vpack.c.bf16 %v3911, %v3910
        %v3944 = vpack.c.bf16 %v3913, %v3912
        %v3945 = vpack.c.bf16 %v3915, %v3914
        %v3946 = vpack.c.bf16 %v3917, %v3916
        %v3947 = vpack.c.bf16 %v3919, %v3918
        %v3948 = vpack.c.bf16 %v3921, %v3920
        %v3949 = vpack.c.bf16 %v3923, %v3922
        %v3950 = vpack.c.bf16 %v3925, %v3924
        %v3951 = vpack.c.bf16 %v3927, %v3926
        %v3952 = vpack.c.bf16 %v3929, %v3928
        %v3953 = vpack.c.bf16 %v3931, %v3930
        %v3954 = vpack.c.bf16 %v3933, %v3932
        %v3955 = vpack.c.bf16 %v3935, %v3934
        %v3956 = vpack.c.bf16 %v3937, %v3936
        %v3957 = vpack.c.bf16 %v3939, %v3938
        %v3958 = vld [vmem:[#allocation2] sm:$0xff]
        %v3959 = vld [vmem:[#allocation2 + $0x8] sm:$0xff]
        %v3960 = vld [vmem:[#allocation2 + $0x10] sm:$0xff]
        %v3961 = vld [vmem:[#allocation2 + $0x18] sm:$0xff]
        %v3962 = vld [vmem:[#allocation2 + $0x20] sm:$0xff]
        %v3963 = vld [vmem:[#allocation2 + $0x28] sm:$0xff]
        %v3964 = vld [vmem:[#allocation2 + $0x30] sm:$0xff]
        %v3965 = vld [vmem:[#allocation2 + $0x38] sm:$0xff]
        %v3966 = vld [vmem:[#allocation2 + $0x40] sm:$0xff]
        %v3967 = vld [vmem:[#allocation2 + $0x48] sm:$0xff]
        %v3968 = vld [vmem:[#allocation2 + $0x50] sm:$0xff]
        %v3969 = vld [vmem:[#allocation2 + $0x58] sm:$0xff]
        %v3970 = vld [vmem:[#allocation2 + $0x60] sm:$0xff]
        %v3971 = vld [vmem:[#allocation2 + $0x68] sm:$0xff]
        %v3972 = vld [vmem:[#allocation2 + $0x70] sm:$0xff]
        %v3973 = vld [vmem:[#allocation2 + $0x78] sm:$0xff]
        %v3974 = vld [vmem:[#allocation2 + $0x80] sm:$0xff]
        %v3975 = vld [vmem:[#allocation2 + $0x88] sm:$0xff]
        %v3976 = vld [vmem:[#allocation2 + $0x90] sm:$0xff]
        %v3977 = vld [vmem:[#allocation2 + $0x98] sm:$0xff]
        %v3978 = vld [vmem:[#allocation2 + $0xa0] sm:$0xff]
        %v3979 = vld [vmem:[#allocation2 + $0xa8] sm:$0xff]
        %v3980 = vld [vmem:[#allocation2 + $0xb0] sm:$0xff]
        %v3981 = vld [vmem:[#allocation2 + $0xb8] sm:$0xff]
        %v3982 = vld [vmem:[#allocation2 + $0xc0] sm:$0xff]
        %v3983 = vld [vmem:[#allocation2 + $0xc8] sm:$0xff]
        %v3984 = vld [vmem:[#allocation2 + $0xd0] sm:$0xff]
        %v3985 = vld [vmem:[#allocation2 + $0xd8] sm:$0xff]
        %v3986 = vld [vmem:[#allocation2 + $0xe0] sm:$0xff]
        %v3987 = vld [vmem:[#allocation2 + $0xe8] sm:$0xff]
        %v3988 = vld [vmem:[#allocation2 + $0xf0] sm:$0xff]
        %v3989 = vld [vmem:[#allocation2 + $0xf8] sm:$0xff]
        %v3990 = vld [vmem:[#allocation2 + $0x100] sm:$0xff]
        %v3991 = vld [vmem:[#allocation2 + $0x108] sm:$0xff]
        %v3992 = vld [vmem:[#allocation2 + $0x110] sm:$0xff]
        %v3993 = vld [vmem:[#allocation2 + $0x118] sm:$0xff]
        %s3994 = scalar_lea.vmem [#allocation6], 14
        %v3995 = vld [vmem:[%s3994] sm:$0x3]
        %v3997 = vsel %vm452, %v3940, 0
        %v4000 = vsel %vm452, %v3941, 0
        %v4003 = vsel %vm452, %v3942, 0
        %v4006 = vsel %vm452, %v3943, 0
        %v4009 = vsel %vm452, %v3944, 0
        %v4012 = vsel %vm452, %v3945, 0
        %v4015 = vsel %vm452, %v3946, 0
        %v4018 = vsel %vm452, %v3947, 0
        %v4021 = vsel %vm452, %v3948, 0
        %v4024 = vsel %vm452, %v3949, 0
        %v4027 = vsel %vm452, %v3950, 0
        %v4030 = vsel %vm452, %v3951, 0
        %v4033 = vsel %vm452, %v3952, 0
        %v4036 = vsel %vm452, %v3953, 0
        %v4039 = vsel %vm452, %v3954, 0
        %v4042 = vsel %vm452, %v3955, 0
        %v4045 = vsel %vm452, %v3956, 0
        %v4048 = vsel %vm452, %v3957, 0
        %v4051 = vsel %vm507, %v3995, 0
        %4053 = vmatprep.subr.bf16.mxu0 0
        %4054 = vmatpush1.bf16.msra.mxu0 %v4051
        %4055 = vmatprep.subr.bf16.mxu0 0
        %4056 = vmatpush1.bf16.msra.mxu0 0
        %4057 = vmatprep.subr.bf16.mxu0 0
        %4058 = vmatpush1.bf16.msra.mxu0 0
        %4059 = vmatprep.subr.bf16.mxu0 0
        %4060 = vmatpush1.bf16.msra.mxu0 0
        %4061 = vmatprep.subr.bf16.mxu0 0
        %4062 = vmatpush1.bf16.msra.mxu0 0
        %4063 = vmatprep.subr.bf16.mxu0 0
        %4064 = vmatpush1.bf16.msra.mxu0 0
        %4065 = vmatprep.subr.bf16.mxu0 0
        %4066 = vmatpush1.bf16.msra.mxu0 0
        %4067 = vmatprep.subr.bf16.mxu0 0
        %4068 = vmatpush1.bf16.msra.mxu0 0
        %4069 = vmatprep.subr.bf16.mxu0 0
        %4070 = vmatpush1.bf16.msra.mxu0 0
        %4071 = vmatprep.subr.bf16.mxu0 0
        %4072 = vmatpush1.bf16.msra.mxu0 0
        %4073 = vmatprep.subr.bf16.mxu0 0
        %4074 = vmatpush1.bf16.msra.mxu0 0
        %4075 = vmatprep.subr.bf16.mxu0 0
        %4076 = vmatpush1.bf16.msra.mxu0 0
        %4077 = vmatprep.subr.bf16.mxu0 0
        %4078 = vmatpush1.bf16.msra.mxu0 0
        %4079 = vmatprep.subr.bf16.mxu0 0
        %4080 = vmatpush1.bf16.msra.mxu0 0
        %4081 = vmatprep.subr.bf16.mxu0 0
        %4082 = vmatpush1.bf16.msra.mxu0 0
        %4083 = vmatprep.subr.bf16.mxu0 0
        %4084 = vmatpush1.bf16.msra.mxu0 0
        %4085 = vmatprep.mubr.bf16.mxu0 0
        %4086 = vmatmul.mubr.bf16.gmra.mrb[0].mxu0 %v3997
        %v4087 = vpop.f32.mrb[0].mxu0
        %v4088 = vadd.f32 0.0, %v4087
        %v4089 = vpop.f32.mrb[0].mxu0
        %v4090 = vpop.f32.mrb[0].mxu0
        %v4091 = vadd.f32 0.0, %v4090
        %v4092 = vpop.f32.mrb[0].mxu0
        %4093 = vmatprep.mubr.bf16.mxu0 0
        %4094 = vmatmul.mubr.bf16.gmra.mrb[0].mxu0 %v4000
        %v4095 = vpop.f32.mrb[0].mxu0
        %v4096 = vadd.f32 0.0, %v4095
        %v4097 = vpop.f32.mrb[0].mxu0
        %v4098 = vpop.f32.mrb[0].mxu0
        %v4099 = vadd.f32 0.0, %v4098
        %v4100 = vpop.f32.mrb[0].mxu0
        %4101 = vmatprep.mubr.bf16.mxu0 0
        %4102 = vmatmul.mubr.bf16.gmra.mrb[0].mxu0 %v4003
        %v4103 = vpop.f32.mrb[0].mxu0
        %v4104 = vadd.f32 0.0, %v4103
        %v4105 = vpop.f32.mrb[0].mxu0
        %v4106 = vpop.f32.mrb[0].mxu0
        %v4107 = vadd.f32 0.0, %v4106
        %v4108 = vpop.f32.mrb[0].mxu0
        %4109 = vmatprep.mubr.bf16.mxu0 0
        %4110 = vmatmul.mubr.bf16.gmra.mrb[0].mxu0 %v4006
        %v4111 = vpop.f32.mrb[0].mxu0
        %v4112 = vadd.f32 0.0, %v4111
        %v4113 = vpop.f32.mrb[0].mxu0
        %v4114 = vpop.f32.mrb[0].mxu0
        %v4115 = vadd.f32 0.0, %v4114
        %v4116 = vpop.f32.mrb[0].mxu0
        %4117 = vmatprep.mubr.bf16.mxu0 0
        %4118 = vmatmul.mubr.bf16.gmra.mrb[0].mxu0 %v4009
        %v4119 = vpop.f32.mrb[0].mxu0
        %v4120 = vadd.f32 0.0, %v4119
        %v4121 = vpop.f32.mrb[0].mxu0
        %v4122 = vpop.f32.mrb[0].mxu0
        %v4123 = vadd.f32 0.0, %v4122
        %v4124 = vpop.f32.mrb[0].mxu0
        %4125 = vmatprep.mubr.bf16.mxu0 0
        %4126 = vmatmul.mubr.bf16.gmra.mrb[0].mxu0 %v4012
        %v4127 = vpop.f32.mrb[0].mxu0
        %v4128 = vadd.f32 0.0, %v4127
        %v4129 = vpop.f32.mrb[0].mxu0
        %v4130 = vpop.f32.mrb[0].mxu0
        %v4131 = vadd.f32 0.0, %v4130
        %v4132 = vpop.f32.mrb[0].mxu0
        %4133 = vmatprep.mubr.bf16.mxu0 0
        %4134 = vmatmul.mubr.bf16.gmra.mrb[0].mxu0 %v4015
        %v4135 = vpop.f32.mrb[0].mxu0
        %v4136 = vadd.f32 0.0, %v4135
        %v4137 = vpop.f32.mrb[0].mxu0
        %v4138 = vpop.f32.mrb[0].mxu0
        %v4139 = vadd.f32 0.0, %v4138
        %v4140 = vpop.f32.mrb[0].mxu0
        %4141 = vmatprep.mubr.bf16.mxu0 0
        %4142 = vmatmul.mubr.bf16.gmra.mrb[0].mxu0 %v4018
        %v4143 = vpop.f32.mrb[0].mxu0
        %v4144 = vadd.f32 0.0, %v4143
        %v4145 = vpop.f32.mrb[0].mxu0
        %v4146 = vpop.f32.mrb[0].mxu0
        %v4147 = vadd.f32 0.0, %v4146
        %v4148 = vpop.f32.mrb[0].mxu0
        %4149 = vmatprep.mubr.bf16.mxu0 0
        %4150 = vmatmul.mubr.bf16.gmra.mrb[0].mxu0 %v4021
        %v4151 = vpop.f32.mrb[0].mxu0
        %v4152 = vadd.f32 0.0, %v4151
        %v4153 = vpop.f32.mrb[0].mxu0
        %v4154 = vpop.f32.mrb[0].mxu0
        %v4155 = vadd.f32 0.0, %v4154
        %v4156 = vpop.f32.mrb[0].mxu0
        %4157 = vmatprep.mubr.bf16.mxu0 0
        %4158 = vmatmul.mubr.bf16.gmra.mrb[0].mxu0 %v4024
        %v4159 = vpop.f32.mrb[0].mxu0
        %v4160 = vadd.f32 0.0, %v4159
        %v4161 = vpop.f32.mrb[0].mxu0
        %v4162 = vpop.f32.mrb[0].mxu0
        %v4163 = vadd.f32 0.0, %v4162
        %v4164 = vpop.f32.mrb[0].mxu0
        %4165 = vmatprep.mubr.bf16.mxu0 0
        %4166 = vmatmul.mubr.bf16.gmra.mrb[0].mxu0 %v4027
        %v4167 = vpop.f32.mrb[0].mxu0
        %v4168 = vadd.f32 0.0, %v4167
        %v4169 = vpop.f32.mrb[0].mxu0
        %v4170 = vpop.f32.mrb[0].mxu0
        %v4171 = vadd.f32 0.0, %v4170
        %v4172 = vpop.f32.mrb[0].mxu0
        %4173 = vmatprep.mubr.bf16.mxu0 0
        %4174 = vmatmul.mubr.bf16.gmra.mrb[0].mxu0 %v4030
        %v4175 = vpop.f32.mrb[0].mxu0
        %v4176 = vadd.f32 0.0, %v4175
        %v4177 = vpop.f32.mrb[0].mxu0
        %v4178 = vpop.f32.mrb[0].mxu0
        %v4179 = vadd.f32 0.0, %v4178
        %v4180 = vpop.f32.mrb[0].mxu0
        %4181 = vmatprep.mubr.bf16.mxu0 0
        %4182 = vmatmul.mubr.bf16.gmra.mrb[0].mxu0 %v4033
        %v4183 = vpop.f32.mrb[0].mxu0
        %v4184 = vadd.f32 0.0, %v4183
        %v4185 = vpop.f32.mrb[0].mxu0
        %v4186 = vpop.f32.mrb[0].mxu0
        %v4187 = vadd.f32 0.0, %v4186
        %v4188 = vpop.f32.mrb[0].mxu0
        %4189 = vmatprep.mubr.bf16.mxu0 0
        %4190 = vmatmul.mubr.bf16.gmra.mrb[0].mxu0 %v4036
        %v4191 = vpop.f32.mrb[0].mxu0
        %v4192 = vadd.f32 0.0, %v4191
        %v4193 = vpop.f32.mrb[0].mxu0
        %v4194 = vpop.f32.mrb[0].mxu0
        %v4195 = vadd.f32 0.0, %v4194
        %v4196 = vpop.f32.mrb[0].mxu0
        %4197 = vmatprep.mubr.bf16.mxu0 0
        %4198 = vmatmul.mubr.bf16.gmra.mrb[0].mxu0 %v4039
        %v4199 = vpop.f32.mrb[0].mxu0
        %v4200 = vadd.f32 0.0, %v4199
        %v4201 = vpop.f32.mrb[0].mxu0
        %v4202 = vpop.f32.mrb[0].mxu0
        %v4203 = vadd.f32 0.0, %v4202
        %v4204 = vpop.f32.mrb[0].mxu0
        %4205 = vmatprep.mubr.bf16.mxu0 0
        %4206 = vmatmul.mubr.bf16.gmra.mrb[0].mxu0 %v4042
        %v4207 = vpop.f32.mrb[0].mxu0
        %v4208 = vadd.f32 0.0, %v4207
        %v4209 = vpop.f32.mrb[0].mxu0
        %v4210 = vpop.f32.mrb[0].mxu0
        %v4211 = vadd.f32 0.0, %v4210
        %v4212 = vpop.f32.mrb[0].mxu0
        %4213 = vmatprep.mubr.bf16.mxu0 0
        %4214 = vmatmul.mubr.bf16.gmra.mrb[0].mxu0 %v4045
        %v4215 = vpop.f32.mrb[0].mxu0
        %v4216 = vadd.f32 0.0, %v4215
        %v4217 = vpop.f32.mrb[0].mxu0
        %v4218 = vpop.f32.mrb[0].mxu0
        %v4219 = vadd.f32 0.0, %v4218
        %v4220 = vpop.f32.mrb[0].mxu0
        %4221 = vmatprep.mubr.bf16.mxu0 0
        %4222 = vmatmul.mubr.bf16.gmra.mrb[0].mxu0 %v4048
        %v4223 = vpop.f32.mrb[0].mxu0
        %v4224 = vadd.f32 0.0, %v4223
        %v4225 = vpop.f32.mrb[0].mxu0
        %v4226 = vpop.f32.mrb[0].mxu0
        %v4227 = vadd.f32 0.0, %v4226
        %v4228 = vpop.f32.mrb[0].mxu0
        %4229 = vdwg.mxu0
        %v4230 = vadd.f32 %v3958, %v4088
        %v4231 = vadd.f32 %v3959, %v4091
        %v4232 = vadd.f32 %v3960, %v4096
        %v4233 = vadd.f32 %v3961, %v4099
        %v4234 = vadd.f32 %v3962, %v4104
        %v4235 = vadd.f32 %v3963, %v4107
        %v4236 = vadd.f32 %v3964, %v4112
        %v4237 = vadd.f32 %v3965, %v4115
        %v4238 = vadd.f32 %v3966, %v4120
        %v4239 = vadd.f32 %v3967, %v4123
        %v4240 = vadd.f32 %v3968, %v4128
        %v4241 = vadd.f32 %v3969, %v4131
        %v4242 = vadd.f32 %v3970, %v4136
        %v4243 = vadd.f32 %v3971, %v4139
        %v4244 = vadd.f32 %v3972, %v4144
        %v4245 = vadd.f32 %v3973, %v4147
        %v4246 = vadd.f32 %v3974, %v4152
        %v4247 = vadd.f32 %v3975, %v4155
        %v4248 = vadd.f32 %v3976, %v4160
        %v4249 = vadd.f32 %v3977, %v4163
        %v4250 = vadd.f32 %v3978, %v4168
        %v4251 = vadd.f32 %v3979, %v4171
        %v4252 = vadd.f32 %v3980, %v4176
        %v4253 = vadd.f32 %v3981, %v4179
        %v4254 = vadd.f32 %v3982, %v4184
        %v4255 = vadd.f32 %v3983, %v4187
        %v4256 = vadd.f32 %v3984, %v4192
        %v4257 = vadd.f32 %v3985, %v4195
        %v4258 = vadd.f32 %v3986, %v4200
        %v4259 = vadd.f32 %v3987, %v4203
        %v4260 = vadd.f32 %v3988, %v4208
        %v4261 = vadd.f32 %v3989, %v4211
        %v4262 = vadd.f32 %v3990, %v4216
        %v4263 = vadd.f32 %v3991, %v4219
        %v4264 = vadd.f32 %v3992, %v4224
        %v4265 = vadd.f32 %v3993, %v4227
        %4266 = vst [vmem:[#allocation2] sm:$0xff] %v4230
        %4267 = vst [vmem:[#allocation2 + $0x8] sm:$0xff] %v4231
        %4268 = vst [vmem:[#allocation2 + $0x10] sm:$0xff] %v4232
        %4269 = vst [vmem:[#allocation2 + $0x18] sm:$0xff] %v4233
        %4270 = vst [vmem:[#allocation2 + $0x20] sm:$0xff] %v4234
        %4271 = vst [vmem:[#allocation2 + $0x28] sm:$0xff] %v4235
        %4272 = vst [vmem:[#allocation2 + $0x30] sm:$0xff] %v4236
        %4273 = vst [vmem:[#allocation2 + $0x38] sm:$0xff] %v4237
        %4274 = vst [vmem:[#allocation2 + $0x40] sm:$0xff] %v4238
        %4275 = vst [vmem:[#allocation2 + $0x48] sm:$0xff] %v4239
        %4276 = vst [vmem:[#allocation2 + $0x50] sm:$0xff] %v4240
        %4277 = vst [vmem:[#allocation2 + $0x58] sm:$0xff] %v4241
        %4278 = vst [vmem:[#allocation2 + $0x60] sm:$0xff] %v4242
        %4279 = vst [vmem:[#allocation2 + $0x68] sm:$0xff] %v4243
        %4280 = vst [vmem:[#allocation2 + $0x70] sm:$0xff] %v4244
        %4281 = vst [vmem:[#allocation2 + $0x78] sm:$0xff] %v4245
        %4282 = vst [vmem:[#allocation2 + $0x80] sm:$0xff] %v4246
        %4283 = vst [vmem:[#allocation2 + $0x88] sm:$0xff] %v4247
        %4284 = vst [vmem:[#allocation2 + $0x90] sm:$0xff] %v4248
        %4285 = vst [vmem:[#allocation2 + $0x98] sm:$0xff] %v4249
        %4286 = vst [vmem:[#allocation2 + $0xa0] sm:$0xff] %v4250
        %4287 = vst [vmem:[#allocation2 + $0xa8] sm:$0xff] %v4251
        %4288 = vst [vmem:[#allocation2 + $0xb0] sm:$0xff] %v4252
        %4289 = vst [vmem:[#allocation2 + $0xb8] sm:$0xff] %v4253
        %4290 = vst [vmem:[#allocation2 + $0xc0] sm:$0xff] %v4254
        %4291 = vst [vmem:[#allocation2 + $0xc8] sm:$0xff] %v4255
        %4292 = vst [vmem:[#allocation2 + $0xd0] sm:$0xff] %v4256
        %4293 = vst [vmem:[#allocation2 + $0xd8] sm:$0xff] %v4257
        %4294 = vst [vmem:[#allocation2 + $0xe0] sm:$0xff] %v4258
        %4295 = vst [vmem:[#allocation2 + $0xe8] sm:$0xff] %v4259
        %4296 = vst [vmem:[#allocation2 + $0xf0] sm:$0xff] %v4260
        %4297 = vst [vmem:[#allocation2 + $0xf8] sm:$0xff] %v4261
        %4298 = vst [vmem:[#allocation2 + $0x100] sm:$0xff] %v4262
        %4299 = vst [vmem:[#allocation2 + $0x108] sm:$0xff] %v4263
        %4300 = vst [vmem:[#allocation2 + $0x110] sm:$0xff] %v4264
        %4301 = vst [vmem:[#allocation2 + $0x118] sm:$0xff] %v4265
        %v4302 = vld [vmem:[%s185 + $0x26] sm:$0xff]
        %v4303 = vld [vmem:[%s185 + $0x2e] sm:$0xff]
        %v4304 = vld [vmem:[%s185 + $0x36] sm:$0xff]
        %v4305 = vld [vmem:[%s185 + $0x3e] sm:$0xff]
        %v4306 = vld [vmem:[%s185 + $0x46] sm:$0xff]
        %v4307 = vld [vmem:[%s185 + $0x4e] sm:$0xff]
        %v4308 = vld [vmem:[%s185 + $0x56] sm:$0xff]
        %v4309 = vld [vmem:[%s185 + $0x5e] sm:$0xff]
        %v4310 = vld [vmem:[%s185 + $0x66] sm:$0xff]
        %v4311 = vld [vmem:[%s185 + $0x6e] sm:$0xff]
        %v4312 = vld [vmem:[%s185 + $0x76] sm:$0xff]
        %v4313 = vld [vmem:[%s185 + $0x7e] sm:$0xff]
        %v4314 = vld [vmem:[%s185 + $0x86] sm:$0xff]
        %v4315 = vld [vmem:[%s185 + $0x8e] sm:$0xff]
        %v4316 = vld [vmem:[%s185 + $0x96] sm:$0xff]
        %v4317 = vld [vmem:[%s185 + $0x9e] sm:$0xff]
        %v4318 = vld [vmem:[%s185 + $0xa6] sm:$0xff]
        %v4319 = vld [vmem:[%s185 + $0xae] sm:$0xff]
        %v4320 = vld [vmem:[%s185 + $0xb6] sm:$0xff]
        %v4321 = vld [vmem:[%s185 + $0xbe] sm:$0xff]
        %v4322 = vld [vmem:[%s185 + $0xc6] sm:$0xff]
        %v4323 = vld [vmem:[%s185 + $0xce] sm:$0xff]
        %v4324 = vld [vmem:[%s185 + $0xd6] sm:$0xff]
        %v4325 = vld [vmem:[%s185 + $0xde] sm:$0xff]
        %v4326 = vld [vmem:[%s185 + $0xe6] sm:$0xff]
        %v4327 = vld [vmem:[%s185 + $0xee] sm:$0xff]
        %v4328 = vld [vmem:[%s185 + $0xf6] sm:$0xff]
        %v4329 = vld [vmem:[%s185 + $0xfe] sm:$0xff]
        %v4330 = vld [vmem:[%s185 + $0x106] sm:$0xff]
        %v4331 = vld [vmem:[%s185 + $0x10e] sm:$0xff]
        %v4332 = vld [vmem:[%s185 + $0x116] sm:$0xff]
        %v4333 = vld [vmem:[%s185 + $0x11e] sm:$0xff]
        %v4334 = vld [vmem:[%s185 + $0x126] sm:$0xff]
        %v4335 = vld [vmem:[%s185 + $0x12e] sm:$0xff]
        %v4336 = vld [vmem:[%s185 + $0x136] sm:$0xff]
        %v4337 = vld [vmem:[%s185 + $0x13e] sm:$0xff]
        %vm4338 = vcmp.ge.f32.partialorder %v4302, 0.0
        %vm4339 = vcmp.ge.f32.partialorder %v4303, 0.0
        %vm4340 = vcmp.ge.f32.partialorder %v4304, 0.0
        %vm4341 = vcmp.ge.f32.partialorder %v4305, 0.0
        %vm4342 = vcmp.ge.f32.partialorder %v4306, 0.0
        %vm4343 = vcmp.ge.f32.partialorder %v4307, 0.0
        %vm4344 = vcmp.ge.f32.partialorder %v4308, 0.0
        %vm4345 = vcmp.ge.f32.partialorder %v4309, 0.0
        %vm4346 = vcmp.ge.f32.partialorder %v4310, 0.0
        %vm4347 = vcmp.ge.f32.partialorder %v4311, 0.0
        %vm4348 = vcmp.ge.f32.partialorder %v4312, 0.0
        %vm4349 = vcmp.ge.f32.partialorder %v4313, 0.0
        %vm4350 = vcmp.ge.f32.partialorder %v4314, 0.0
        %vm4351 = vcmp.ge.f32.partialorder %v4315, 0.0
        %vm4352 = vcmp.ge.f32.partialorder %v4316, 0.0
        %vm4353 = vcmp.ge.f32.partialorder %v4317, 0.0
        %vm4354 = vcmp.ge.f32.partialorder %v4318, 0.0
        %vm4355 = vcmp.ge.f32.partialorder %v4319, 0.0
        %vm4356 = vcmp.ge.f32.partialorder %v4320, 0.0
        %vm4357 = vcmp.ge.f32.partialorder %v4321, 0.0
        %vm4358 = vcmp.ge.f32.partialorder %v4322, 0.0
        %vm4359 = vcmp.ge.f32.partialorder %v4323, 0.0
        %vm4360 = vcmp.ge.f32.partialorder %v4324, 0.0
        %vm4361 = vcmp.ge.f32.partialorder %v4325, 0.0
        %vm4362 = vcmp.ge.f32.partialorder %v4326, 0.0
        %vm4363 = vcmp.ge.f32.partialorder %v4327, 0.0
        %vm4364 = vcmp.ge.f32.partialorder %v4328, 0.0
        %vm4365 = vcmp.ge.f32.partialorder %v4329, 0.0
        %vm4366 = vcmp.ge.f32.partialorder %v4330, 0.0
        %vm4367 = vcmp.ge.f32.partialorder %v4331, 0.0
        %vm4368 = vcmp.ge.f32.partialorder %v4332, 0.0
        %vm4369 = vcmp.ge.f32.partialorder %v4333, 0.0
        %vm4370 = vcmp.ge.f32.partialorder %v4334, 0.0
        %vm4371 = vcmp.ge.f32.partialorder %v4335, 0.0
        %vm4372 = vcmp.ge.f32.partialorder %v4336, 0.0
        %vm4373 = vcmp.ge.f32.partialorder %v4337, 0.0
        %v4374 = vsel %vm4338, 1, 0
        %v4375 = vsel %vm4339, 1, 0
        %v4376 = vsel %vm4340, 1, 0
        %v4377 = vsel %vm4341, 1, 0
        %v4378 = vsel %vm4342, 1, 0
        %v4379 = vsel %vm4343, 1, 0
        %v4380 = vsel %vm4344, 1, 0
        %v4381 = vsel %vm4345, 1, 0
        %v4382 = vsel %vm4346, 1, 0
        %v4383 = vsel %vm4347, 1, 0
        %v4384 = vsel %vm4348, 1, 0
        %v4385 = vsel %vm4349, 1, 0
        %v4386 = vsel %vm4350, 1, 0
        %v4387 = vsel %vm4351, 1, 0
        %v4388 = vsel %vm4352, 1, 0
        %v4389 = vsel %vm4353, 1, 0
        %v4390 = vsel %vm4354, 1, 0
        %v4391 = vsel %vm4355, 1, 0
        %v4392 = vsel %vm4356, 1, 0
        %v4393 = vsel %vm4357, 1, 0
        %v4394 = vsel %vm4358, 1, 0
        %v4395 = vsel %vm4359, 1, 0
        %v4396 = vsel %vm4360, 1, 0
        %v4397 = vsel %vm4361, 1, 0
        %v4398 = vsel %vm4362, 1, 0
        %v4399 = vsel %vm4363, 1, 0
        %v4400 = vsel %vm4364, 1, 0
        %v4401 = vsel %vm4365, 1, 0
        %v4402 = vsel %vm4366, 1, 0
        %v4403 = vsel %vm4367, 1, 0
        %v4404 = vsel %vm4368, 1, 0
        %v4405 = vsel %vm4369, 1, 0
        %v4406 = vsel %vm4370, 1, 0
        %v4407 = vsel %vm4371, 1, 0
        %v4408 = vsel %vm4372, 1, 0
        %v4409 = vsel %vm4373, 1, 0
        %v4410 = vcvt.s32.f32 %v4374
        %v4411 = vcvt.s32.f32 %v4375
        %v4412 = vcvt.s32.f32 %v4376
        %v4413 = vcvt.s32.f32 %v4377
        %v4414 = vcvt.s32.f32 %v4378
        %v4415 = vcvt.s32.f32 %v4379
        %v4416 = vcvt.s32.f32 %v4380
        %v4417 = vcvt.s32.f32 %v4381
        %v4418 = vcvt.s32.f32 %v4382
        %v4419 = vcvt.s32.f32 %v4383
        %v4420 = vcvt.s32.f32 %v4384
        %v4421 = vcvt.s32.f32 %v4385
        %v4422 = vcvt.s32.f32 %v4386
        %v4423 = vcvt.s32.f32 %v4387
        %v4424 = vcvt.s32.f32 %v4388
        %v4425 = vcvt.s32.f32 %v4389
        %v4426 = vcvt.s32.f32 %v4390
        %v4427 = vcvt.s32.f32 %v4391
        %v4428 = vcvt.s32.f32 %v4392
        %v4429 = vcvt.s32.f32 %v4393
        %v4430 = vcvt.s32.f32 %v4394
        %v4431 = vcvt.s32.f32 %v4395
        %v4432 = vcvt.s32.f32 %v4396
        %v4433 = vcvt.s32.f32 %v4397
        %v4434 = vcvt.s32.f32 %v4398
        %v4435 = vcvt.s32.f32 %v4399
        %v4436 = vcvt.s32.f32 %v4400
        %v4437 = vcvt.s32.f32 %v4401
        %v4438 = vcvt.s32.f32 %v4402
        %v4439 = vcvt.s32.f32 %v4403
        %v4440 = vcvt.s32.f32 %v4404
        %v4441 = vcvt.s32.f32 %v4405
        %v4442 = vcvt.s32.f32 %v4406
        %v4443 = vcvt.s32.f32 %v4407
        %v4444 = vcvt.s32.f32 %v4408
        %v4445 = vcvt.s32.f32 %v4409
        %v4446 = vpack.c.bf16 %v4411, %v4410
        %v4447 = vpack.c.bf16 %v4413, %v4412
        %v4448 = vpack.c.bf16 %v4415, %v4414
        %v4449 = vpack.c.bf16 %v4417, %v4416
        %v4450 = vpack.c.bf16 %v4419, %v4418
        %v4451 = vpack.c.bf16 %v4421, %v4420
        %v4452 = vpack.c.bf16 %v4423, %v4422
        %v4453 = vpack.c.bf16 %v4425, %v4424
        %v4454 = vpack.c.bf16 %v4427, %v4426
        %v4455 = vpack.c.bf16 %v4429, %v4428
        %v4456 = vpack.c.bf16 %v4431, %v4430
        %v4457 = vpack.c.bf16 %v4433, %v4432
        %v4458 = vpack.c.bf16 %v4435, %v4434
        %v4459 = vpack.c.bf16 %v4437, %v4436
        %v4460 = vpack.c.bf16 %v4439, %v4438
        %v4461 = vpack.c.bf16 %v4441, %v4440
        %v4462 = vpack.c.bf16 %v4443, %v4442
        %v4463 = vpack.c.bf16 %v4445, %v4444
        %v4464 = vld [vmem:[#allocation2] sm:$0xff]
        %v4465 = vld [vmem:[#allocation2 + $0x8] sm:$0xff]
        %v4466 = vld [vmem:[#allocation2 + $0x10] sm:$0xff]
        %v4467 = vld [vmem:[#allocation2 + $0x18] sm:$0xff]
        %v4468 = vld [vmem:[#allocation2 + $0x20] sm:$0xff]
        %v4469 = vld [vmem:[#allocation2 + $0x28] sm:$0xff]
        %v4470 = vld [vmem:[#allocation2 + $0x30] sm:$0xff]
        %v4471 = vld [vmem:[#allocation2 + $0x38] sm:$0xff]
        %v4472 = vld [vmem:[#allocation2 + $0x40] sm:$0xff]
        %v4473 = vld [vmem:[#allocation2 + $0x48] sm:$0xff]
        %v4474 = vld [vmem:[#allocation2 + $0x50] sm:$0xff]
        %v4475 = vld [vmem:[#allocation2 + $0x58] sm:$0xff]
        %v4476 = vld [vmem:[#allocation2 + $0x60] sm:$0xff]
        %v4477 = vld [vmem:[#allocation2 + $0x68] sm:$0xff]
        %v4478 = vld [vmem:[#allocation2 + $0x70] sm:$0xff]
        %v4479 = vld [vmem:[#allocation2 + $0x78] sm:$0xff]
        %v4480 = vld [vmem:[#allocation2 + $0x80] sm:$0xff]
        %v4481 = vld [vmem:[#allocation2 + $0x88] sm:$0xff]
        %v4482 = vld [vmem:[#allocation2 + $0x90] sm:$0xff]
        %v4483 = vld [vmem:[#allocation2 + $0x98] sm:$0xff]
        %v4484 = vld [vmem:[#allocation2 + $0xa0] sm:$0xff]
        %v4485 = vld [vmem:[#allocation2 + $0xa8] sm:$0xff]
        %v4486 = vld [vmem:[#allocation2 + $0xb0] sm:$0xff]
        %v4487 = vld [vmem:[#allocation2 + $0xb8] sm:$0xff]
        %v4488 = vld [vmem:[#allocation2 + $0xc0] sm:$0xff]
        %v4489 = vld [vmem:[#allocation2 + $0xc8] sm:$0xff]
        %v4490 = vld [vmem:[#allocation2 + $0xd0] sm:$0xff]
        %v4491 = vld [vmem:[#allocation2 + $0xd8] sm:$0xff]
        %v4492 = vld [vmem:[#allocation2 + $0xe0] sm:$0xff]
        %v4493 = vld [vmem:[#allocation2 + $0xe8] sm:$0xff]
        %v4494 = vld [vmem:[#allocation2 + $0xf0] sm:$0xff]
        %v4495 = vld [vmem:[#allocation2 + $0xf8] sm:$0xff]
        %v4496 = vld [vmem:[#allocation2 + $0x100] sm:$0xff]
        %v4497 = vld [vmem:[#allocation2 + $0x108] sm:$0xff]
        %v4498 = vld [vmem:[#allocation2 + $0x110] sm:$0xff]
        %v4499 = vld [vmem:[#allocation2 + $0x118] sm:$0xff]
        %s4500 = scalar_lea.vmem [#allocation6], 16
        %v4501 = vld [vmem:[%s4500] sm:$0x3]
        %v4503 = vsel %vm452, %v4446, 0
        %v4506 = vsel %vm452, %v4447, 0
        %v4509 = vsel %vm452, %v4448, 0
        %v4512 = vsel %vm452, %v4449, 0
        %v4515 = vsel %vm452, %v4450, 0
        %v4518 = vsel %vm452, %v4451, 0
        %v4521 = vsel %vm452, %v4452, 0
        %v4524 = vsel %vm452, %v4453, 0
        %v4527 = vsel %vm452, %v4454, 0
        %v4530 = vsel %vm452, %v4455, 0
        %v4533 = vsel %vm452, %v4456, 0
        %v4536 = vsel %vm452, %v4457, 0
        %v4539 = vsel %vm452, %v4458, 0
        %v4542 = vsel %vm452, %v4459, 0
        %v4545 = vsel %vm452, %v4460, 0
        %v4548 = vsel %vm452, %v4461, 0
        %v4551 = vsel %vm452, %v4462, 0
        %v4554 = vsel %vm452, %v4463, 0
        %v4557 = vsel %vm507, %v4501, 0
        %4559 = vmatprep.subr.bf16.mxu0 0
        %4560 = vmatpush1.bf16.msra.mxu0 %v4557
        %4561 = vmatprep.subr.bf16.mxu0 0
        %4562 = vmatpush1.bf16.msra.mxu0 0
        %4563 = vmatprep.subr.bf16.mxu0 0
        %4564 = vmatpush1.bf16.msra.mxu0 0
        %4565 = vmatprep.subr.bf16.mxu0 0
        %4566 = vmatpush1.bf16.msra.mxu0 0
        %4567 = vmatprep.subr.bf16.mxu0 0
        %4568 = vmatpush1.bf16.msra.mxu0 0
        %4569 = vmatprep.subr.bf16.mxu0 0
        %4570 = vmatpush1.bf16.msra.mxu0 0
        %4571 = vmatprep.subr.bf16.mxu0 0
        %4572 = vmatpush1.bf16.msra.mxu0 0
        %4573 = vmatprep.subr.bf16.mxu0 0
        %4574 = vmatpush1.bf16.msra.mxu0 0
        %4575 = vmatprep.subr.bf16.mxu0 0
        %4576 = vmatpush1.bf16.msra.mxu0 0
        %4577 = vmatprep.subr.bf16.mxu0 0
        %4578 = vmatpush1.bf16.msra.mxu0 0
        %4579 = vmatprep.subr.bf16.mxu0 0
        %4580 = vmatpush1.bf16.msra.mxu0 0
        %4581 = vmatprep.subr.bf16.mxu0 0
        %4582 = vmatpush1.bf16.msra.mxu0 0
        %4583 = vmatprep.subr.bf16.mxu0 0
        %4584 = vmatpush1.bf16.msra.mxu0 0
        %4585 = vmatprep.subr.bf16.mxu0 0
        %4586 = vmatpush1.bf16.msra.mxu0 0
        %4587 = vmatprep.subr.bf16.mxu0 0
        %4588 = vmatpush1.bf16.msra.mxu0 0
        %4589 = vmatprep.subr.bf16.mxu0 0
        %4590 = vmatpush1.bf16.msra.mxu0 0
        %4591 = vmatprep.mubr.bf16.mxu0 0
        %4592 = vmatmul.mubr.bf16.gmra.mrb[0].mxu0 %v4503
        %v4593 = vpop.f32.mrb[0].mxu0
        %v4594 = vadd.f32 0.0, %v4593
        %v4595 = vpop.f32.mrb[0].mxu0
        %v4596 = vpop.f32.mrb[0].mxu0
        %v4597 = vadd.f32 0.0, %v4596
        %v4598 = vpop.f32.mrb[0].mxu0
        %4599 = vmatprep.mubr.bf16.mxu0 0
        %4600 = vmatmul.mubr.bf16.gmra.mrb[0].mxu0 %v4506
        %v4601 = vpop.f32.mrb[0].mxu0
        %v4602 = vadd.f32 0.0, %v4601
        %v4603 = vpop.f32.mrb[0].mxu0
        %v4604 = vpop.f32.mrb[0].mxu0
        %v4605 = vadd.f32 0.0, %v4604
        %v4606 = vpop.f32.mrb[0].mxu0
        %4607 = vmatprep.mubr.bf16.mxu0 0
        %4608 = vmatmul.mubr.bf16.gmra.mrb[0].mxu0 %v4509
        %v4609 = vpop.f32.mrb[0].mxu0
        %v4610 = vadd.f32 0.0, %v4609
        %v4611 = vpop.f32.mrb[0].mxu0
        %v4612 = vpop.f32.mrb[0].mxu0
        %v4613 = vadd.f32 0.0, %v4612
        %v4614 = vpop.f32.mrb[0].mxu0
        %4615 = vmatprep.mubr.bf16.mxu0 0
        %4616 = vmatmul.mubr.bf16.gmra.mrb[0].mxu0 %v4512
        %v4617 = vpop.f32.mrb[0].mxu0
        %v4618 = vadd.f32 0.0, %v4617
        %v4619 = vpop.f32.mrb[0].mxu0
        %v4620 = vpop.f32.mrb[0].mxu0
        %v4621 = vadd.f32 0.0, %v4620
        %v4622 = vpop.f32.mrb[0].mxu0
        %4623 = vmatprep.mubr.bf16.mxu0 0
        %4624 = vmatmul.mubr.bf16.gmra.mrb[0].mxu0 %v4515
        %v4625 = vpop.f32.mrb[0].mxu0
        %v4626 = vadd.f32 0.0, %v4625
        %v4627 = vpop.f32.mrb[0].mxu0
        %v4628 = vpop.f32.mrb[0].mxu0
        %v4629 = vadd.f32 0.0, %v4628
        %v4630 = vpop.f32.mrb[0].mxu0
        %4631 = vmatprep.mubr.bf16.mxu0 0
        %4632 = vmatmul.mubr.bf16.gmra.mrb[0].mxu0 %v4518
        %v4633 = vpop.f32.mrb[0].mxu0
        %v4634 = vadd.f32 0.0, %v4633
        %v4635 = vpop.f32.mrb[0].mxu0
        %v4636 = vpop.f32.mrb[0].mxu0
        %v4637 = vadd.f32 0.0, %v4636
        %v4638 = vpop.f32.mrb[0].mxu0
        %4639 = vmatprep.mubr.bf16.mxu0 0
        %4640 = vmatmul.mubr.bf16.gmra.mrb[0].mxu0 %v4521
        %v4641 = vpop.f32.mrb[0].mxu0
        %v4642 = vadd.f32 0.0, %v4641
        %v4643 = vpop.f32.mrb[0].mxu0
        %v4644 = vpop.f32.mrb[0].mxu0
        %v4645 = vadd.f32 0.0, %v4644
        %v4646 = vpop.f32.mrb[0].mxu0
        %4647 = vmatprep.mubr.bf16.mxu0 0
        %4648 = vmatmul.mubr.bf16.gmra.mrb[0].mxu0 %v4524
        %v4649 = vpop.f32.mrb[0].mxu0
        %v4650 = vadd.f32 0.0, %v4649
        %v4651 = vpop.f32.mrb[0].mxu0
        %v4652 = vpop.f32.mrb[0].mxu0
        %v4653 = vadd.f32 0.0, %v4652
        %v4654 = vpop.f32.mrb[0].mxu0
        %4655 = vmatprep.mubr.bf16.mxu0 0
        %4656 = vmatmul.mubr.bf16.gmra.mrb[0].mxu0 %v4527
        %v4657 = vpop.f32.mrb[0].mxu0
        %v4658 = vadd.f32 0.0, %v4657
        %v4659 = vpop.f32.mrb[0].mxu0
        %v4660 = vpop.f32.mrb[0].mxu0
        %v4661 = vadd.f32 0.0, %v4660
        %v4662 = vpop.f32.mrb[0].mxu0
        %4663 = vmatprep.mubr.bf16.mxu0 0
        %4664 = vmatmul.mubr.bf16.gmra.mrb[0].mxu0 %v4530
        %v4665 = vpop.f32.mrb[0].mxu0
        %v4666 = vadd.f32 0.0, %v4665
        %v4667 = vpop.f32.mrb[0].mxu0
        %v4668 = vpop.f32.mrb[0].mxu0
        %v4669 = vadd.f32 0.0, %v4668
        %v4670 = vpop.f32.mrb[0].mxu0
        %4671 = vmatprep.mubr.bf16.mxu0 0
        %4672 = vmatmul.mubr.bf16.gmra.mrb[0].mxu0 %v4533
        %v4673 = vpop.f32.mrb[0].mxu0
        %v4674 = vadd.f32 0.0, %v4673
        %v4675 = vpop.f32.mrb[0].mxu0
        %v4676 = vpop.f32.mrb[0].mxu0
        %v4677 = vadd.f32 0.0, %v4676
        %v4678 = vpop.f32.mrb[0].mxu0
        %4679 = vmatprep.mubr.bf16.mxu0 0
        %4680 = vmatmul.mubr.bf16.gmra.mrb[0].mxu0 %v4536
        %v4681 = vpop.f32.mrb[0].mxu0
        %v4682 = vadd.f32 0.0, %v4681
        %v4683 = vpop.f32.mrb[0].mxu0
        %v4684 = vpop.f32.mrb[0].mxu0
        %v4685 = vadd.f32 0.0, %v4684
        %v4686 = vpop.f32.mrb[0].mxu0
        %4687 = vmatprep.mubr.bf16.mxu0 0
        %4688 = vmatmul.mubr.bf16.gmra.mrb[0].mxu0 %v4539
        %v4689 = vpop.f32.mrb[0].mxu0
        %v4690 = vadd.f32 0.0, %v4689
        %v4691 = vpop.f32.mrb[0].mxu0
        %v4692 = vpop.f32.mrb[0].mxu0
        %v4693 = vadd.f32 0.0, %v4692
        %v4694 = vpop.f32.mrb[0].mxu0
        %4695 = vmatprep.mubr.bf16.mxu0 0
        %4696 = vmatmul.mubr.bf16.gmra.mrb[0].mxu0 %v4542
        %v4697 = vpop.f32.mrb[0].mxu0
        %v4698 = vadd.f32 0.0, %v4697
        %v4699 = vpop.f32.mrb[0].mxu0
        %v4700 = vpop.f32.mrb[0].mxu0
        %v4701 = vadd.f32 0.0, %v4700
        %v4702 = vpop.f32.mrb[0].mxu0
        %4703 = vmatprep.mubr.bf16.mxu0 0
        %4704 = vmatmul.mubr.bf16.gmra.mrb[0].mxu0 %v4545
        %v4705 = vpop.f32.mrb[0].mxu0
        %v4706 = vadd.f32 0.0, %v4705
        %v4707 = vpop.f32.mrb[0].mxu0
        %v4708 = vpop.f32.mrb[0].mxu0
        %v4709 = vadd.f32 0.0, %v4708
        %v4710 = vpop.f32.mrb[0].mxu0
        %4711 = vmatprep.mubr.bf16.mxu0 0
        %4712 = vmatmul.mubr.bf16.gmra.mrb[0].mxu0 %v4548
        %v4713 = vpop.f32.mrb[0].mxu0
        %v4714 = vadd.f32 0.0, %v4713
        %v4715 = vpop.f32.mrb[0].mxu0
        %v4716 = vpop.f32.mrb[0].mxu0
        %v4717 = vadd.f32 0.0, %v4716
        %v4718 = vpop.f32.mrb[0].mxu0
        %4719 = vmatprep.mubr.bf16.mxu0 0
        %4720 = vmatmul.mubr.bf16.gmra.mrb[0].mxu0 %v4551
        %v4721 = vpop.f32.mrb[0].mxu0
        %v4722 = vadd.f32 0.0, %v4721
        %v4723 = vpop.f32.mrb[0].mxu0
        %v4724 = vpop.f32.mrb[0].mxu0
        %v4725 = vadd.f32 0.0, %v4724
        %v4726 = vpop.f32.mrb[0].mxu0
        %4727 = vmatprep.mubr.bf16.mxu0 0
        %4728 = vmatmul.mubr.bf16.gmra.mrb[0].mxu0 %v4554
        %v4729 = vpop.f32.mrb[0].mxu0
        %v4730 = vadd.f32 0.0, %v4729
        %v4731 = vpop.f32.mrb[0].mxu0
        %v4732 = vpop.f32.mrb[0].mxu0
        %v4733 = vadd.f32 0.0, %v4732
        %v4734 = vpop.f32.mrb[0].mxu0
        %4735 = vdwg.mxu0
        %v4736 = vadd.f32 %v4464, %v4594
        %v4737 = vadd.f32 %v4465, %v4597
        %v4738 = vadd.f32 %v4466, %v4602
        %v4739 = vadd.f32 %v4467, %v4605
        %v4740 = vadd.f32 %v4468, %v4610
        %v4741 = vadd.f32 %v4469, %v4613
        %v4742 = vadd.f32 %v4470, %v4618
        %v4743 = vadd.f32 %v4471, %v4621
        %v4744 = vadd.f32 %v4472, %v4626
        %v4745 = vadd.f32 %v4473, %v4629
        %v4746 = vadd.f32 %v4474, %v4634
        %v4747 = vadd.f32 %v4475, %v4637
        %v4748 = vadd.f32 %v4476, %v4642
        %v4749 = vadd.f32 %v4477, %v4645
        %v4750 = vadd.f32 %v4478, %v4650
        %v4751 = vadd.f32 %v4479, %v4653
        %v4752 = vadd.f32 %v4480, %v4658
        %v4753 = vadd.f32 %v4481, %v4661
        %v4754 = vadd.f32 %v4482, %v4666
        %v4755 = vadd.f32 %v4483, %v4669
        %v4756 = vadd.f32 %v4484, %v4674
        %v4757 = vadd.f32 %v4485, %v4677
        %v4758 = vadd.f32 %v4486, %v4682
        %v4759 = vadd.f32 %v4487, %v4685
        %v4760 = vadd.f32 %v4488, %v4690
        %v4761 = vadd.f32 %v4489, %v4693
        %v4762 = vadd.f32 %v4490, %v4698
        %v4763 = vadd.f32 %v4491, %v4701
        %v4764 = vadd.f32 %v4492, %v4706
        %v4765 = vadd.f32 %v4493, %v4709
        %v4766 = vadd.f32 %v4494, %v4714
        %v4767 = vadd.f32 %v4495, %v4717
        %v4768 = vadd.f32 %v4496, %v4722
        %v4769 = vadd.f32 %v4497, %v4725
        %v4770 = vadd.f32 %v4498, %v4730
        %v4771 = vadd.f32 %v4499, %v4733
        %4772 = vst [vmem:[#allocation2] sm:$0xff] %v4736
        %4773 = vst [vmem:[#allocation2 + $0x8] sm:$0xff] %v4737
        %4774 = vst [vmem:[#allocation2 + $0x10] sm:$0xff] %v4738
        %4775 = vst [vmem:[#allocation2 + $0x18] sm:$0xff] %v4739
        %4776 = vst [vmem:[#allocation2 + $0x20] sm:$0xff] %v4740
        %4777 = vst [vmem:[#allocation2 + $0x28] sm:$0xff] %v4741
        %4778 = vst [vmem:[#allocation2 + $0x30] sm:$0xff] %v4742
        %4779 = vst [vmem:[#allocation2 + $0x38] sm:$0xff] %v4743
        %4780 = vst [vmem:[#allocation2 + $0x40] sm:$0xff] %v4744
        %4781 = vst [vmem:[#allocation2 + $0x48] sm:$0xff] %v4745
        %4782 = vst [vmem:[#allocation2 + $0x50] sm:$0xff] %v4746
        %4783 = vst [vmem:[#allocation2 + $0x58] sm:$0xff] %v4747
        %4784 = vst [vmem:[#allocation2 + $0x60] sm:$0xff] %v4748
        %4785 = vst [vmem:[#allocation2 + $0x68] sm:$0xff] %v4749
        %4786 = vst [vmem:[#allocation2 + $0x70] sm:$0xff] %v4750
        %4787 = vst [vmem:[#allocation2 + $0x78] sm:$0xff] %v4751
        %4788 = vst [vmem:[#allocation2 + $0x80] sm:$0xff] %v4752
        %4789 = vst [vmem:[#allocation2 + $0x88] sm:$0xff] %v4753
        %4790 = vst [vmem:[#allocation2 + $0x90] sm:$0xff] %v4754
        %4791 = vst [vmem:[#allocation2 + $0x98] sm:$0xff] %v4755
        %4792 = vst [vmem:[#allocation2 + $0xa0] sm:$0xff] %v4756
        %4793 = vst [vmem:[#allocation2 + $0xa8] sm:$0xff] %v4757
        %4794 = vst [vmem:[#allocation2 + $0xb0] sm:$0xff] %v4758
        %4795 = vst [vmem:[#allocation2 + $0xb8] sm:$0xff] %v4759
        %4796 = vst [vmem:[#allocation2 + $0xc0] sm:$0xff] %v4760
        %4797 = vst [vmem:[#allocation2 + $0xc8] sm:$0xff] %v4761
        %4798 = vst [vmem:[#allocation2 + $0xd0] sm:$0xff] %v4762
        %4799 = vst [vmem:[#allocation2 + $0xd8] sm:$0xff] %v4763
        %4800 = vst [vmem:[#allocation2 + $0xe0] sm:$0xff] %v4764
        %4801 = vst [vmem:[#allocation2 + $0xe8] sm:$0xff] %v4765
        %4802 = vst [vmem:[#allocation2 + $0xf0] sm:$0xff] %v4766
        %4803 = vst [vmem:[#allocation2 + $0xf8] sm:$0xff] %v4767
        %4804 = vst [vmem:[#allocation2 + $0x100] sm:$0xff] %v4768
        %4805 = vst [vmem:[#allocation2 + $0x108] sm:$0xff] %v4769
        %4806 = vst [vmem:[#allocation2 + $0x110] sm:$0xff] %v4770
        %4807 = vst [vmem:[#allocation2 + $0x118] sm:$0xff] %v4771
        %v4808 = vld [vmem:[#allocation2] sm:$0xff]
        %v4809 = vld [vmem:[#allocation2 + $0x8] sm:$0xff]
        %v4810 = vld [vmem:[#allocation2 + $0x10] sm:$0xff]
        %v4811 = vld [vmem:[#allocation2 + $0x18] sm:$0xff]
        %v4812 = vld [vmem:[#allocation2 + $0x20] sm:$0xff]
        %v4813 = vld [vmem:[#allocation2 + $0x28] sm:$0xff]
        %v4814 = vld [vmem:[#allocation2 + $0x30] sm:$0xff]
        %v4815 = vld [vmem:[#allocation2 + $0x38] sm:$0xff]
        %v4816 = vld [vmem:[#allocation2 + $0x40] sm:$0xff]
        %v4817 = vld [vmem:[#allocation2 + $0x48] sm:$0xff]
        %v4818 = vld [vmem:[#allocation2 + $0x50] sm:$0xff]
        %v4819 = vld [vmem:[#allocation2 + $0x58] sm:$0xff]
        %v4820 = vld [vmem:[#allocation2 + $0x60] sm:$0xff]
        %v4821 = vld [vmem:[#allocation2 + $0x68] sm:$0xff]
        %v4822 = vld [vmem:[#allocation2 + $0x70] sm:$0xff]
        %v4823 = vld [vmem:[#allocation2 + $0x78] sm:$0xff]
        %v4824 = vld [vmem:[#allocation2 + $0x80] sm:$0xff]
        %v4825 = vld [vmem:[#allocation2 + $0x88] sm:$0xff]
        %v4826 = vld [vmem:[#allocation2 + $0x90] sm:$0xff]
        %v4827 = vld [vmem:[#allocation2 + $0x98] sm:$0xff]
        %v4828 = vld [vmem:[#allocation2 + $0xa0] sm:$0xff]
        %v4829 = vld [vmem:[#allocation2 + $0xa8] sm:$0xff]
        %v4830 = vld [vmem:[#allocation2 + $0xb0] sm:$0xff]
        %v4831 = vld [vmem:[#allocation2 + $0xb8] sm:$0xff]
        %v4832 = vld [vmem:[#allocation2 + $0xc0] sm:$0xff]
        %v4833 = vld [vmem:[#allocation2 + $0xc8] sm:$0xff]
        %v4834 = vld [vmem:[#allocation2 + $0xd0] sm:$0xff]
        %v4835 = vld [vmem:[#allocation2 + $0xd8] sm:$0xff]
        %v4836 = vld [vmem:[#allocation2 + $0xe0] sm:$0xff]
        %v4837 = vld [vmem:[#allocation2 + $0xe8] sm:$0xff]
        %v4838 = vld [vmem:[#allocation2 + $0xf0] sm:$0xff]
        %v4839 = vld [vmem:[#allocation2 + $0xf8] sm:$0xff]
        %v4840 = vld [vmem:[#allocation2 + $0x100] sm:$0xff]
        %v4841 = vld [vmem:[#allocation2 + $0x108] sm:$0xff]
        %v4842 = vld [vmem:[#allocation2 + $0x110] sm:$0xff]
        %v4843 = vld [vmem:[#allocation2 + $0x118] sm:$0xff]
        %v4844 = vld [vmem:[#allocation8] sm:$0x1]
        %v4846 = vlaneseq
        %v4847 = vshrl.u32 %v4846, 7
        %v4848 = vsub.s32 0, %v4847
        %v4849 = vrot.slane %v4844, %v4848
        %v4851 = vadd.f32 %v4808, %v4849
        %v4852 = vadd.f32 %v4809, %v4849
        %v4853 = vadd.f32 %v4810, %v4849
        %v4854 = vadd.f32 %v4811, %v4849
        %v4855 = vadd.f32 %v4812, %v4849
        %v4856 = vadd.f32 %v4813, %v4849
        %v4857 = vadd.f32 %v4814, %v4849
        %v4858 = vadd.f32 %v4815, %v4849
        %v4859 = vadd.f32 %v4816, %v4849
        %v4860 = vadd.f32 %v4817, %v4849
        %v4861 = vadd.f32 %v4818, %v4849
        %v4862 = vadd.f32 %v4819, %v4849
        %v4863 = vadd.f32 %v4820, %v4849
        %v4864 = vadd.f32 %v4821, %v4849
        %v4865 = vadd.f32 %v4822, %v4849
        %v4866 = vadd.f32 %v4823, %v4849
        %v4867 = vadd.f32 %v4824, %v4849
        %v4868 = vadd.f32 %v4825, %v4849
        %v4869 = vadd.f32 %v4826, %v4849
        %v4870 = vadd.f32 %v4827, %v4849
        %v4871 = vadd.f32 %v4828, %v4849
        %v4872 = vadd.f32 %v4829, %v4849
        %v4873 = vadd.f32 %v4830, %v4849
        %v4874 = vadd.f32 %v4831, %v4849
        %v4875 = vadd.f32 %v4832, %v4849
        %v4876 = vadd.f32 %v4833, %v4849
        %v4877 = vadd.f32 %v4834, %v4849
        %v4878 = vadd.f32 %v4835, %v4849
        %v4879 = vadd.f32 %v4836, %v4849
        %v4880 = vadd.f32 %v4837, %v4849
        %v4881 = vadd.f32 %v4838, %v4849
        %v4882 = vadd.f32 %v4839, %v4849
        %v4883 = vadd.f32 %v4840, %v4849
        %v4884 = vadd.f32 %v4841, %v4849
        %v4885 = vadd.f32 %v4842, %v4849
        %v4886 = vadd.f32 %v4843, %v4849
        %4887 = vst [vmem:[%s215] sm:$0xff] %v4851
        %4888 = vst [vmem:[%s215 + $0x8] sm:$0xff] %v4852
        %4889 = vst [vmem:[%s215 + $0x10] sm:$0xff] %v4853
        %4890 = vst [vmem:[%s215 + $0x18] sm:$0xff] %v4854
        %4891 = vst [vmem:[%s215 + $0x20] sm:$0xff] %v4855
        %4892 = vst [vmem:[%s215 + $0x28] sm:$0xff] %v4856
        %4893 = vst [vmem:[%s215 + $0x30] sm:$0xff] %v4857
        %4894 = vst [vmem:[%s215 + $0x38] sm:$0xff] %v4858
        %4895 = vst [vmem:[%s215 + $0x40] sm:$0xff] %v4859
        %4896 = vst [vmem:[%s215 + $0x48] sm:$0xff] %v4860
        %4897 = vst [vmem:[%s215 + $0x50] sm:$0xff] %v4861
        %4898 = vst [vmem:[%s215 + $0x58] sm:$0xff] %v4862
        %4899 = vst [vmem:[%s215 + $0x60] sm:$0xff] %v4863
        %4900 = vst [vmem:[%s215 + $0x68] sm:$0xff] %v4864
        %4901 = vst [vmem:[%s215 + $0x70] sm:$0xff] %v4865
        %4902 = vst [vmem:[%s215 + $0x78] sm:$0xff] %v4866
        %4903 = vst [vmem:[%s215 + $0x80] sm:$0xff] %v4867
        %4904 = vst [vmem:[%s215 + $0x88] sm:$0xff] %v4868
        %4905 = vst [vmem:[%s215 + $0x90] sm:$0xff] %v4869
        %4906 = vst [vmem:[%s215 + $0x98] sm:$0xff] %v4870
        %4907 = vst [vmem:[%s215 + $0xa0] sm:$0xff] %v4871
        %4908 = vst [vmem:[%s215 + $0xa8] sm:$0xff] %v4872
        %4909 = vst [vmem:[%s215 + $0xb0] sm:$0xff] %v4873
        %4910 = vst [vmem:[%s215 + $0xb8] sm:$0xff] %v4874
        %4911 = vst [vmem:[%s215 + $0xc0] sm:$0xff] %v4875
        %4912 = vst [vmem:[%s215 + $0xc8] sm:$0xff] %v4876
        %4913 = vst [vmem:[%s215 + $0xd0] sm:$0xff] %v4877
        %4914 = vst [vmem:[%s215 + $0xd8] sm:$0xff] %v4878
        %4915 = vst [vmem:[%s215 + $0xe0] sm:$0xff] %v4879
        %4916 = vst [vmem:[%s215 + $0xe8] sm:$0xff] %v4880
        %4917 = vst [vmem:[%s215 + $0xf0] sm:$0xff] %v4881
        %4918 = vst [vmem:[%s215 + $0xf8] sm:$0xff] %v4882
        %4919 = vst [vmem:[%s215 + $0x100] sm:$0xff] %v4883
        %4920 = vst [vmem:[%s215 + $0x108] sm:$0xff] %v4884
        %4921 = vst [vmem:[%s215 + $0x110] sm:$0xff] %v4885
        %4922 = vst [vmem:[%s215 + $0x118] sm:$0xff] %v4886
        %s4923 = sand.u32 %s97, 1
        %s4924 = scalar_lea.sflag [#allocation5], %s4923
        %s4925 = sand.u32 %s97, 1
        %s4926 = smul.addr %s4925, 288
        %s4927 = scalar_lea.vmem [#allocation9], %s4926
        // Predicated region
        $region45: #{fire_conv_forward.1} parent=31 // pred_check
          %p4928 = pneg %p107
        $region46: #{fire_conv_forward.1} parent=31 // pred_check_branch
          %4930 = sbr.rel (%p4928) target = $region48
        $region47: #{fire_conv_forward.1} parent=31 // pred_region
          %s4932 = ssub.s32 4608, 4608
          %4933 = vsyncadd %s4924, %s4932
          %s4934 = smul.addr %s21, 36
          %s4935 = smul.addr %s4934, 128
          %s4936 = scalar_lea.hbm %s3, %s4935
          %s4937 = sshll.u32 %s4927, 4
          %s4938 = int_to_ptr.vmem [resolvable:$true] %s4937
          %4943 = dma.vmem_to_hbm [thread:$0]  %s4938, 4608, %s4936, %s4924, 128, 128, 8
        $region48: #{fire_conv_forward.1} parent=31 // pred_fallthru
          _
      $region32: #{fire_conv_forward.1} parent=5 // pred_fallthru
        _
      %p4944 = scmp.le.s32.totalorder 2, %s16
      // Predicated region
      $region49: #{fire_conv_forward.1} parent=5 // pred_check
        %p4945 = pneg %p4944
      $region50: #{fire_conv_forward.1} parent=5 // pred_check_branch
        %4947 = sbr.rel (%p4945) target = $region52
      $region51: #{fire_conv_forward.1} parent=5 // pred_region
        %s4948 = ssub.s32 %s16, 2
        // Predicated region
        $region53: #{fire_conv_forward.1} parent=51 // pred_check
          %p4949 = pneg %p113
        $region54: #{fire_conv_forward.1} parent=51 // pred_check_branch
          %4951 = sbr.rel (%p4949) target = $region56
        $region55: #{fire_conv_forward.1} parent=51 // pred_region
          %s4952 = sand.u32 %s98, 1
          %s4953 = scalar_lea.sflag [#allocation5], %s4952
          %s4954 = sand.u32 %s98, 1
          %s4955 = smul.addr %s4954, 288
          %s4956 = scalar_lea.vmem [#allocation9], %s4955
          %4957 = dma.done %s4953, 4608
        $region56: #{fire_conv_forward.1} parent=51 // pred_fallthru
          _
      $region52: #{fire_conv_forward.1} parent=5 // pred_fallthru
        _
    $region6: #{fire_conv_forward.1} parent=1 // loop_footer
      %s20 = sadd.s32 1, %s16
    $region7: #{fire_conv_forward.1} parent=1 // loop_footer_branch
      %15 = sbr.rel target = $region3
    $region8: #{fire_conv_forward.1} parent=1 // loop_exit
      _
    %4958 = vsyncpa [#allocation4], 1
    %s4959 = scalar_lea.sflag [#allocation4], 1
    %4960 = vsyncpa %s4959, 1
    %4961 = vsyncpa [#allocation7], 1
    %4962 = vsyncpa [#allocation5], 1
    %s4963 = scalar_lea.sflag [#allocation5], 1
    %4964 = vsyncpa %s4963, 1

</llo_original>
